<compile_context>
chip_gen: v6e
topology: v6e:2x2x1
jax: 0.10.0
libtpu: 0.0.40
codegen_flags: <defaults>
</compile_context>

<pallas_src>
import functools

import jax
import jax.numpy as jnp
from jax.experimental import pallas as pl
from jax.experimental.pallas import tpu as pltpu

_INV_SQRT2 = 0.7071067811865476
_EPS = 1e-5  # PyTorch GroupNorm default eps


def _erf_approx(z):
    """erf via Abramowitz & Stegun 7.1.26 (|err| < 1.5e-7), VPU + EUP only."""
    a1, a2, a3, a4, a5 = (0.254829592, -0.284496736, 1.421413741,
                          -1.453152027, 1.061405429)
    pc = 0.3275911
    sgn = jnp.where(z >= 0.0, 1.0, -1.0)
    az = jnp.abs(z)
    # approx reciprocal -> EUP slot (idle in this kernel); use approx=False if
    # bit-level parity with torch's exact erf-GELU is required.
    t = pl.reciprocal(1.0 + pc * az, approx=True)
    poly = ((((a5 * t + a4) * t + a3) * t + a2) * t + a1) * t
    return sgn * (1.0 - poly * jnp.exp(-az * az))


def _gelu(x):
    return 0.5 * x * (1.0 + _erf_approx(x * _INV_SQRT2))


def _group_pool_pairs(row):
    """Per-lane sums over lane pairs (2i, 2i+1).  row: (1, C), C even.

    Direction-unambiguous lane shifts built from slices+concat (XLU work),
    replacing the old 2-row MXU pooling matmul.
    """
    nxt = jnp.concatenate([row[:, 1:], row[:, :1]], axis=1)    # row[i+1]
    prv = jnp.concatenate([row[:, -1:], row[:, :-1]], axis=1)  # row[i-1]
    lane = jax.lax.broadcasted_iota(jnp.int32, row.shape, 1)
    return row + jnp.where(lane % 2 == 0, nxt, prv)


def _fused_encoder_kernel(x_ref, w_ref, a_ref, o_ref, act_ref, *,
                          plan, cg, eps, use_bf16):
    """Whole ConvEncoderBENDR stack for one group of P lane-packed samples.

    x_ref   : (1, L0, P*c_w)                lane-packed (+channel-padded) input
    w_ref   : (n_layers, Kmax, P*c_w, P*C)  block-diagonal packed conv weights
    a_ref   : (n_layers, 3, P*C)            rows = (bias, gamma, beta), tiled P
    o_ref   : (1, L_final, P*C)
    act_ref : (L_scratch, P*c_w) VMEM       padded activation for strided taps
    plan    : static tuple of (layer, k, stride, l_in, l_out, pc_in)
    """
    pcw = act_ref.shape[1]
    pco = o_ref.shape[2]

    if cg == 2:   # GroupNorm(encoder_h // 2, encoder_h) -> pairs of channels
        group_pool = _group_pool_pairs
    else:         # generic fallback: block-diagonal pooling matmul
        ri = jax.lax.broadcasted_iota(jnp.int32, (pco, pco), 0)
        ci = jax.lax.broadcasted_iota(jnp.int32, (pco, pco), 1)
        pool = ((ri // cg) == (ci // cg)).astype(jnp.float32)
        group_pool = lambda r: jnp.dot(r, pool,
                                       preferred_element_type=jnp.float32)

    # Zero the scratch once so lanes/rows never read stale (possibly NaN) bits.
    act_ref[...] = jnp.zeros(act_ref.shape, jnp.float32)

    x = x_ref[0].astype(jnp.float32)                    # (L0, pcw)

    for (li, k, s, l_in, l_out, pc_in) in plan:         # static, unrolled
        p = k // 2

        # ---- stage padded input in VMEM scratch (rows [0:p] and the bottom
        # p rows are the conv zero padding) -----------------------------------
        if p > 0:
            act_ref[0:p, :] = jnp.zeros((p, pcw), jnp.float32)
            act_ref[p + l_in:p + l_in + p, :] = jnp.zeros((p, pcw), jnp.float32)
        act_ref[p:p + l_in, 0:x.shape[1]] = x

        # ---- Conv1d(stride=s, padding=p): K accumulating MXU matmuls over
        # static strided-slice taps (O(L), no selection matrices) -------------
        acc = jnp.zeros((l_out, pco), jnp.float32)
        for kk in range(k):
            idx = pl.ds(kk, l_out, stride=s) if s > 1 else pl.ds(kk, l_out)
            tap = act_ref[idx, :]                        # (l_out, pcw)
            w_kk = w_ref[li, kk]                         # (pcw, pco)
            if pc_in < pcw:                              # only if in_f > enc_h
                tap = tap[:, :pc_in]
                w_kk = w_kk[:pc_in, :]
            if use_bf16:                                 # bf16-native MXU path
                tap = tap.astype(jnp.bfloat16)
                w_kk = w_kk.astype(jnp.bfloat16)
            acc = acc + jnp.dot(tap, w_kk,
                                preferred_element_type=jnp.float32)
        y = acc + a_ref[li, 0:1, :]                      # (l_out, pco)

        # ---- GroupNorm (per sample, groups of cg channels), two-pass --------
        inv_cnt = 1.0 / float(l_out * cg)
        mean = group_pool(jnp.sum(y, axis=0, keepdims=True)) * inv_cnt
        d = y - mean
        var = group_pool(jnp.sum(d * d, axis=0, keepdims=True)) * inv_cnt
        yn = d * jax.lax.rsqrt(var + eps) * a_ref[li, 1:2, :] + a_ref[li, 2:3, :]

        # ---- exact (erf-form) GELU ------------------------------------------
        x = _gelu(yn)

    o_ref[0] = x.astype(o_ref.dtype)


def conv_encoder_bendr_forward(x, w_packed, a_packed, *, widths, strides,
                               in_features, encoder_h, pack, eps=_EPS):
    """x: (N, in_features, L) NCL  ->  (N, encoder_h, L_final) NCL."""
    n, c_in0, l0 = x.shape
    assert c_in0 == in_features
    n_layers = w_packed.shape[0]
    assert n_layers == len(widths) == len(strides)

    c_w = max(in_features, encoder_h)
    P = pack
    pcw = P * c_w
    pco = P * encoder_h
    n_groups = encoder_h // 2            # GroupNorm(encoder_h // 2, encoder_h)
    cg = encoder_h // n_groups

    # ---- static per-layer plan (Python ints baked into the kernel) ----------
    plan = []
    l = l0
    c_in = c_w                            # layer-0 channels zero-padded to c_w
    for li, (k, s) in enumerate(zip(widths, strides)):
        p = k // 2
        l_out = (l + 2 * p - k) // s + 1
        plan.append((li, k, s, l, l_out, P * c_in))
        l = l_out
        c_in = encoder_h
    l_final = l
    l_scratch = max(t[3] + 2 * (t[1] // 2) for t in plan)

    # ---- entry packing: (N, C, L) -> (G, L, P*c_w) lane-dense ----------------
    n_pad = -(-n // P) * P
    xp = x.astype(jnp.float32)
    if c_in0 < c_w:
        xp = jnp.pad(xp, ((0, 0), (0, c_w - c_in0), (0, 0)))
    if n_pad > n:
        xp = jnp.pad(xp, ((0, n_pad - n), (0, 0), (0, 0)))
    g = n_pad // P
    xp = xp.reshape(g, P, c_w, l0).transpose(0, 3, 1, 2).reshape(g, l0, pcw)

    use_bf16 = encoder_h >= 128          # toy 32-channel config stays f32

    kernel = functools.partial(_fused_encoder_kernel, plan=tuple(plan),
                               cg=cg, eps=eps, use_bf16=use_bf16)

    # Rough VMEM budget (double-buffered I/O + weights + scratch + temporaries).
    est = (2 * l0 * pcw + 2 * l_final * pco + w_packed.size + a_packed.size
           + l_scratch * pcw + 8 * l0 * max(pcw, pco)) * 4 + (4 << 20)
    vmem_limit = int(min(max(est, 32 << 20), 96 << 20))

    out = pl.pallas_call(
        kernel,
        out_shape=jax.ShapeDtypeStruct((g, l_final, pco), jnp.float32),
        grid=(g,),
        in_specs=[
            pl.BlockSpec((1, l0, pcw), lambda i: (i, 0, 0)),
            pl.BlockSpec(w_packed.shape, lambda i: (0, 0, 0, 0)),
            pl.BlockSpec(a_packed.shape, lambda i: (0, 0, 0)),
        ],
        out_specs=pl.BlockSpec((1, l_final, pco), lambda i: (i, 0, 0)),
        scratch_shapes=[pltpu.VMEM((l_scratch, pcw), jnp.float32)],
        compiler_params=pltpu.CompilerParams(
            # "parallel": on v7x the two TensorCores split the batch groups;
            # on single-TC v5e/v6e the grid is a serial loop (marking is free).
            dimension_semantics=("parallel",),
            vmem_limit_bytes=vmem_limit),
    )(xp, w_packed, a_packed)

    # ---- exit unpacking: (G, L_f, P*C) -> (N, C, L_f) ------------------------
    out = out.reshape(g, l_final, P, encoder_h).transpose(0, 2, 3, 1)
    return out.reshape(n_pad, encoder_h, l_final)[:n]


def init_conv_encoder_bendr(key, in_features, encoder_h=32,
                            enc_width=(3, 2, 2, 2, 2, 2),
                            enc_downsample=(3, 2, 2, 2, 2, 2)):
    """Deterministic synthetic parameters mirroring the module's __init__.

    projection_head=False and dropout=0.0 (Dropout2d is then the identity), as
    in the module defaults. Returns (packed arrays, static cfg, raw params).
    """
    enc_width = tuple(e if e % 2 else e + 1 for e in enc_width)   # force odd
    enc_downsample = tuple(enc_downsample)
    assert len(enc_width) == len(enc_downsample)

    c_out = encoder_h
    c_w = max(in_features, encoder_h)
    # Lane-packing factor: pack P samples so the lane (last) dim is ~128 wide.
    P = max(1, 128 // c_w)
    k_max = max(enc_width)
    eye_p = jnp.eye(P, dtype=jnp.float32)

    w_layers, a_layers, raw = [], [], []
    c_in = in_features
    for li, width in enumerate(enc_width):
        key, kw, kb, kg, kbe = jax.random.split(key, 5)
        w = 0.1 * jax.random.normal(kw, (c_out, c_in, width), jnp.float32)
        b = 0.01 * jax.random.normal(kb, (c_out,), jnp.float32)
        gamma = 1.0 + 0.1 * jax.random.normal(kg, (c_out,), jnp.float32)
        beta = 0.1 * jax.random.normal(kbe, (c_out,), jnp.float32)
        raw.append((w, b, gamma, beta))

        # Per-sample lane stride of this layer's input activation.
        c_eff = c_w if li == 0 else c_out
        taps = []
        for kk in range(k_max):
            if kk < width:
                wt = jnp.transpose(w[:, :, kk], (1, 0))            # (c_in, c_out)
            else:
                wt = jnp.zeros((c_in, c_out), jnp.float32)
            wt = jnp.pad(wt, ((0, c_eff - c_in), (0, 0)))          # pad channels
            bd = jnp.kron(eye_p, wt)                               # block-diag
            bd = jnp.pad(bd, ((0, P * (c_w - c_eff)), (0, 0)))     # rows->P*c_w
            taps.append(bd)
        w_layers.append(jnp.stack(taps, axis=0))                   # (Kmax, pcw, pco)
        a_layers.append(jnp.stack([jnp.tile(b, P), jnp.tile(gamma, P),
                                   jnp.tile(beta, P)], axis=0))
        c_in = c_out

    arrays = dict(w_packed=jnp.stack(w_layers, axis=0),  # (L, Kmax, P*c_w, P*C)
                  a_packed=jnp.stack(a_layers, axis=0))  # (L, 3, P*C)
    static = dict(widths=enc_width, strides=enc_downsample,
                  in_features=in_features, encoder_h=encoder_h, pack=P)
    return arrays, static, raw


def _reference_forward(x, raw_params, widths, strides, encoder_h, eps=_EPS):
    """Pure-JAX reference of the PyTorch module forward (f32, exact GELU)."""
    h = x.astype(jnp.float32)
    for (w, b, gamma, beta), k, s in zip(raw_params, widths, strides):
        h = jax.lax.conv_general_dilated(
            h, w, window_strides=(s,), padding=[(k // 2, k // 2)],
            dimension_numbers=('NCH', 'OIH', 'NCH'),
            precision=jax.lax.Precision.HIGHEST)
        h = h + b[None, :, None]
        n, c, l = h.shape
        ng = encoder_h // 2
        hg = h.reshape(n, ng, (c // ng) * l)
        mean = hg.mean(axis=-1, keepdims=True)
        var = hg.var(axis=-1, keepdims=True)
        hg = (hg - mean) * jax.lax.rsqrt(var + eps)
        h = hg.reshape(n, c, l) * gamma[None, :, None] + beta[None, :, None]
        h = jax.nn.gelu(h, approximate=False)
    return h


if __name__ == "__main__":
    key = jax.random.PRNGKey(0)
    key, kx = jax.random.split(key)

    batch, in_features, seq_len, encoder_h = 2, 4, 96, 32
    x = jax.random.normal(kx, (batch, in_features, seq_len), jnp.float32)  # NCL

    arrays, cfg, raw = init_conv_encoder_bendr(key, in_features,
                                               encoder_h=encoder_h)

    fwd = jax.jit(functools.partial(conv_encoder_bendr_forward, **cfg))
    out = jax.block_until_ready(fwd(x, arrays["w_packed"], arrays["a_packed"]))

    # widths all ->3, strides (3,2,2,2,2,2): 96 -> 32 -> 16 -> 8 -> 4 -> 2 -> 1
    assert out.shape == (batch, encoder_h, 1), out.shape
    assert bool(jnp.all(jnp.isfinite(out)))

    # Validate against a pure-JAX reference (tolerance covers the A&S erf
    # approximation, the approximate EUP reciprocal, and matmul pass precision).
    ref = _reference_forward(x, raw, cfg["widths"], cfg["strides"], encoder_h)
    err = float(jnp.max(jnp.abs(out - ref)))
    assert err < 5e-2, f"max abs err vs reference: {err}"

    print("KERNEL_OK")
</pallas_src>

<mosaic_0001>
module attributes {stable_mosaic.version = 11 : i64} {
  func.func @_fused_encoder_kernel(%arg0: i32, %arg1: memref<1x96x128xf32, #tpu.memory_space<vmem>>, %arg2: memref<6x3x128x128xf32, #tpu.memory_space<vmem>>, %arg3: memref<6x3x128xf32, #tpu.memory_space<vmem>>, %arg4: memref<1x1x128xf32, #tpu.memory_space<vmem>>, %arg5: memref<98x128xf32, #tpu.memory_space<vmem>>) attributes {dimension_semantics = [#tpu.dimension_semantics<parallel>], iteration_bounds = array<i64: 1>, scalar_prefetch = 0 : i64, scratch_operands = 1 : i64, tpu.core_type = #tpu.core_type<tc>, window_params = [{transform_indices = @transform_0, window_bounds = array<i64: 1, 96, 128>}, {pipeline_mode = #tpu.pipeline_mode<synchronous>, transform_indices = @transform_1, window_bounds = array<i64: 6, 3, 128, 128>}, {pipeline_mode = #tpu.pipeline_mode<synchronous>, transform_indices = @transform_2, window_bounds = array<i64: 6, 3, 128>}, {transform_indices = @transform_3, window_bounds = array<i64: 1, 1, 128>}]} {
    %cst = arith.constant 0.000000e+00 : f32
    %0 = vector.broadcast %cst : f32 to vector<98x128xf32>
    %c0 = arith.constant 0 : index
    %c0_0 = arith.constant 0 : index
    %1 = vector.load %arg5[%c0, %c0_0] : memref<98x128xf32, #tpu.memory_space<vmem>>, vector<98x128xf32>
    tpu.vector_store %arg5[%c0, %c0_0], %0 {strides = array<i32>} : memref<98x128xf32, #tpu.memory_space<vmem>>, vector<98x128xf32>,
    %c0_1 = arith.constant 0 : index
    %c0_2 = arith.constant 0 : index
    %c0_3 = arith.constant 0 : index
    %2 = vector.load %arg1[%c0_1, %c0_2, %c0_3] : memref<1x96x128xf32, #tpu.memory_space<vmem>>, vector<1x96x128xf32>
    %3 = vector.shape_cast %2 : vector<1x96x128xf32> to vector<96x128xf32>
    %cst_4 = arith.constant 0.000000e+00 : f32
    %4 = vector.broadcast %cst_4 : f32 to vector<1x128xf32>
    %c0_5 = arith.constant 0 : index
    %c0_6 = arith.constant 0 : index
    %5 = vector.load %arg5[%c0_5, %c0_6] : memref<98x128xf32, #tpu.memory_space<vmem>>, vector<1x128xf32>
    tpu.vector_store %arg5[%c0_5, %c0_6], %4 {strides = array<i32>} : memref<98x128xf32, #tpu.memory_space<vmem>>, vector<1x128xf32>,
    %cst_7 = arith.constant 0.000000e+00 : f32
    %6 = vector.broadcast %cst_7 : f32 to vector<1x128xf32>
    %c97 = arith.constant 97 : index
    %c0_8 = arith.constant 0 : index
    %7 = vector.load %arg5[%c97, %c0_8] : memref<98x128xf32, #tpu.memory_space<vmem>>, vector<1x128xf32>
    tpu.vector_store %arg5[%c97, %c0_8], %6 {strides = array<i32>} : memref<98x128xf32, #tpu.memory_space<vmem>>, vector<1x128xf32>,
    %c1 = arith.constant 1 : index
    %c0_9 = arith.constant 0 : index
    %8 = vector.load %arg5[%c1, %c0_9] : memref<98x128xf32, #tpu.memory_space<vmem>>, vector<96x128xf32>
    tpu.vector_store %arg5[%c1, %c0_9], %3 {strides = array<i32>} : memref<98x128xf32, #tpu.memory_space<vmem>>, vector<96x128xf32>,
    %cst_10 = arith.constant 0.000000e+00 : f32
    %9 = vector.broadcast %cst_10 : f32 to vector<32x128xf32>
    %c0_11 = arith.constant 0 : index
    %c0_12 = arith.constant 0 : index
    %10 = tpu.strided_load %arg5[%c0_11, %c0_12] {strides = array<i32: 3, 1>} : memref<98x128xf32, #tpu.memory_space<vmem>>, vector<32x128xf32>
    %c0_13 = arith.constant 0 : index
    %c0_14 = arith.constant 0 : index
    %c0_15 = arith.constant 0 : index
    %c0_16 = arith.constant 0 : index
    %11 = vector.load %arg2[%c0_13, %c0_14, %c0_15, %c0_16] : memref<6x3x128x128xf32, #tpu.memory_space<vmem>>, vector<1x1x128x128xf32>
    %12 = vector.shape_cast %11 : vector<1x1x128x128xf32> to vector<128x128xf32>
    %cst_17 = arith.constant dense<0.000000e+00> : vector<32x128xf32>
    %13 = tpu.matmul %10, %12, %cst_17 {dimension_numbers = #tpu.dot_dimension_numbers<[1], [0], [0], [1], [0, 0, 1, 1], [], []>} : vector<32x128xf32>, vector<128x128xf32>, vector<32x128xf32> -> vector<32x128xf32>
    %14 = arith.addf %9, %13 : vector<32x128xf32>
    %c1_18 = arith.constant 1 : index
    %c0_19 = arith.constant 0 : index
    %15 = tpu.strided_load %arg5[%c1_18, %c0_19] {strides = array<i32: 3, 1>} : memref<98x128xf32, #tpu.memory_space<vmem>>, vector<32x128xf32>
    %c0_20 = arith.constant 0 : index
    %c1_21 = arith.constant 1 : index
    %c0_22 = arith.constant 0 : index
    %c0_23 = arith.constant 0 : index
    %16 = vector.load %arg2[%c0_20, %c1_21, %c0_22, %c0_23] : memref<6x3x128x128xf32, #tpu.memory_space<vmem>>, vector<1x1x128x128xf32>
    %17 = vector.shape_cast %16 : vector<1x1x128x128xf32> to vector<128x128xf32>
    %cst_24 = arith.constant dense<0.000000e+00> : vector<32x128xf32>
    %18 = tpu.matmul %15, %17, %cst_24 {dimension_numbers = #tpu.dot_dimension_numbers<[1], [0], [0], [1], [0, 0, 1, 1], [], []>} : vector<32x128xf32>, vector<128x128xf32>, vector<32x128xf32> -> vector<32x128xf32>
    %19 = arith.addf %14, %18 : vector<32x128xf32>
    %c2 = arith.constant 2 : index
    %c0_25 = arith.constant 0 : index
    %20 = tpu.strided_load %arg5[%c2, %c0_25] {strides = array<i32: 3, 1>} : memref<98x128xf32, #tpu.memory_space<vmem>>, vector<32x128xf32>
    %c0_26 = arith.constant 0 : index
    %c2_27 = arith.constant 2 : index
    %c0_28 = arith.constant 0 : index
    %c0_29 = arith.constant 0 : index
    %21 = vector.load %arg2[%c0_26, %c2_27, %c0_28, %c0_29] : memref<6x3x128x128xf32, #tpu.memory_space<vmem>>, vector<1x1x128x128xf32>
    %22 = vector.shape_cast %21 : vector<1x1x128x128xf32> to vector<128x128xf32>
    %cst_30 = arith.constant dense<0.000000e+00> : vector<32x128xf32>
    %23 = tpu.matmul %20, %22, %cst_30 {dimension_numbers = #tpu.dot_dimension_numbers<[1], [0], [0], [1], [0, 0, 1, 1], [], []>} : vector<32x128xf32>, vector<128x128xf32>, vector<32x128xf32> -> vector<32x128xf32>
    %24 = arith.addf %19, %23 : vector<32x128xf32>
    %c0_31 = arith.constant 0 : index
    %c0_32 = arith.constant 0 : index
    %c0_33 = arith.constant 0 : index
    %25 = vector.load %arg3[%c0_31, %c0_32, %c0_33] : memref<6x3x128xf32, #tpu.memory_space<vmem>>, vector<1x1x128xf32>
    %26 = vector.shape_cast %25 : vector<1x1x128xf32> to vector<1x128xf32>
    %27 = vector.broadcast %26 : vector<1x128xf32> to vector<32x128xf32>
    %28 = arith.addf %24, %27 : vector<32x128xf32>
    %cst_34 = arith.constant dense<0.000000e+00> : vector<128xf32>
    %29 = vector.multi_reduction <add>, %28, %cst_34 [0] : vector<32x128xf32> to vector<128xf32>
    %30 = vector.shape_cast %29 : vector<128xf32> to vector<1x128xf32>
    %31 = vector.extract_strided_slice %30 {offsets = [0, 1], sizes = [1, 127], strides = [1, 1]} : vector<1x128xf32> to vector<1x127xf32>
    %32 = vector.extract_strided_slice %30 {offsets = [0, 0], sizes = [1, 1], strides = [1, 1]} : vector<1x128xf32> to vector<1x1xf32>
    %33 = tpu.concatenate %31, %32 in 1 : vector<1x127xf32>, vector<1x1xf32> -> vector<1x128xf32>
    %34 = vector.extract_strided_slice %30 {offsets = [0, 127], sizes = [1, 1], strides = [1, 1]} : vector<1x128xf32> to vector<1x1xf32>
    %35 = vector.extract_strided_slice %30 {offsets = [0, 0], sizes = [1, 127], strides = [1, 1]} : vector<1x128xf32> to vector<1x127xf32>
    %36 = tpu.concatenate %34, %35 in 1 : vector<1x1xf32>, vector<1x127xf32> -> vector<1x128xf32>
    %37 = tpu.iota {dimensions = array<i32: 1>} : vector<1x128xi32>
    %c2_i32 = arith.constant 2 : i32
    %c0_i32 = arith.constant 0 : i32
    %38 = arith.cmpi eq, %c2_i32, %c0_i32 : i32
    %c1_i32 = arith.constant 1 : i32
    %39 = arith.select %38, %c1_i32, %c2_i32 : i32
    %40 = vector.broadcast %39 : i32 to vector<1x128xi32>
    %41 = arith.remsi %37, %40 : vector<1x128xi32>
    %c0_i32_35 = arith.constant 0 : i32
    %42 = vector.broadcast %c0_i32_35 : i32 to vector<1x128xi32>
    %43 = arith.cmpi ne, %41, %42 : vector<1x128xi32>
    %c0_i32_36 = arith.constant 0 : i32
    %44 = vector.broadcast %c0_i32_36 : i32 to vector<1x128xi32>
    %45 = arith.cmpi slt, %41, %44 : vector<1x128xi32>
    %c0_i32_37 = arith.constant 0 : i32
    %46 = arith.cmpi slt, %39, %c0_i32_37 : i32
    %47 = vector.broadcast %46 : i1 to vector<1x128xi1>
    %48 = vector.broadcast %47 : vector<1x128xi1> to vector<1x128xi1>
    %49 = arith.xori %45, %48 : vector<1x128xi1>
    %50 = arith.andi %49, %43 : vector<1x128xi1>
    %51 = vector.broadcast %39 : i32 to vector<1x128xi32>
    %52 = arith.addi %41, %51 : vector<1x128xi32>
    %53 = arith.select %50, %52, %41 : vector<1x128xi1>, vector<1x128xi32>
    %c0_i32_38 = arith.constant 0 : i32
    %54 = vector.broadcast %c0_i32_38 : i32 to vector<1x128xi32>
    %55 = arith.cmpi eq, %53, %54 : vector<1x128xi32>
    %56 = arith.select %55, %33, %36 : vector<1x128xi1>, vector<1x128xf32>
    %57 = arith.addf %30, %56 : vector<1x128xf32>
    %cst_39 = arith.constant 1.562500e-02 : f32
    %58 = vector.broadcast %cst_39 : f32 to vector<1x128xf32>
    %59 = arith.mulf %57, %58 : vector<1x128xf32>
    %60 = vector.broadcast %59 : vector<1x128xf32> to vector<32x128xf32>
    %61 = arith.subf %28, %60 : vector<32x128xf32>
    %62 = arith.mulf %61, %61 : vector<32x128xf32>
    %cst_40 = arith.constant dense<0.000000e+00> : vector<128xf32>
    %63 = vector.multi_reduction <add>, %62, %cst_40 [0] : vector<32x128xf32> to vector<128xf32>
    %64 = vector.shape_cast %63 : vector<128xf32> to vector<1x128xf32>
    %65 = vector.extract_strided_slice %64 {offsets = [0, 1], sizes = [1, 127], strides = [1, 1]} : vector<1x128xf32> to vector<1x127xf32>
    %66 = vector.extract_strided_slice %64 {offsets = [0, 0], sizes = [1, 1], strides = [1, 1]} : vector<1x128xf32> to vector<1x1xf32>
    %67 = tpu.concatenate %65, %66 in 1 : vector<1x127xf32>, vector<1x1xf32> -> vector<1x128xf32>
    %68 = vector.extract_strided_slice %64 {offsets = [0, 127], sizes = [1, 1], strides = [1, 1]} : vector<1x128xf32> to vector<1x1xf32>
    %69 = vector.extract_strided_slice %64 {offsets = [0, 0], sizes = [1, 127], strides = [1, 1]} : vector<1x128xf32> to vector<1x127xf32>
    %70 = tpu.concatenate %68, %69 in 1 : vector<1x1xf32>, vector<1x127xf32> -> vector<1x128xf32>
    %71 = tpu.iota {dimensions = array<i32: 1>} : vector<1x128xi32>
    %c2_i32_41 = arith.constant 2 : i32
    %c0_i32_42 = arith.constant 0 : i32
    %72 = arith.cmpi eq, %c2_i32_41, %c0_i32_42 : i32
    %c1_i32_43 = arith.constant 1 : i32
    %73 = arith.select %72, %c1_i32_43, %c2_i32_41 : i32
    %74 = vector.broadcast %73 : i32 to vector<1x128xi32>
    %75 = arith.remsi %71, %74 : vector<1x128xi32>
    %c0_i32_44 = arith.constant 0 : i32
    %76 = vector.broadcast %c0_i32_44 : i32 to vector<1x128xi32>
    %77 = arith.cmpi ne, %75, %76 : vector<1x128xi32>
    %c0_i32_45 = arith.constant 0 : i32
    %78 = vector.broadcast %c0_i32_45 : i32 to vector<1x128xi32>
    %79 = arith.cmpi slt, %75, %78 : vector<1x128xi32>
    %c0_i32_46 = arith.constant 0 : i32
    %80 = arith.cmpi slt, %73, %c0_i32_46 : i32
    %81 = vector.broadcast %80 : i1 to vector<1x128xi1>
    %82 = vector.broadcast %81 : vector<1x128xi1> to vector<1x128xi1>
    %83 = arith.xori %79, %82 : vector<1x128xi1>
    %84 = arith.andi %83, %77 : vector<1x128xi1>
    %85 = vector.broadcast %73 : i32 to vector<1x128xi32>
    %86 = arith.addi %75, %85 : vector<1x128xi32>
    %87 = arith.select %84, %86, %75 : vector<1x128xi1>, vector<1x128xi32>
    %c0_i32_47 = arith.constant 0 : i32
    %88 = vector.broadcast %c0_i32_47 : i32 to vector<1x128xi32>
    %89 = arith.cmpi eq, %87, %88 : vector<1x128xi32>
    %90 = arith.select %89, %67, %70 : vector<1x128xi1>, vector<1x128xf32>
    %91 = arith.addf %64, %90 : vector<1x128xf32>
    %cst_48 = arith.constant 1.562500e-02 : f32
    %92 = vector.broadcast %cst_48 : f32 to vector<1x128xf32>
    %93 = arith.mulf %91, %92 : vector<1x128xf32>
    %cst_49 = arith.constant 9.99999974E-6 : f32
    %94 = vector.broadcast %cst_49 : f32 to vector<1x128xf32>
    %95 = arith.addf %93, %94 : vector<1x128xf32>
    %96 = math.rsqrt %95 : vector<1x128xf32>
    %97 = vector.broadcast %96 : vector<1x128xf32> to vector<32x128xf32>
    %98 = arith.mulf %61, %97 : vector<32x128xf32>
    %c0_50 = arith.constant 0 : index
    %c1_51 = arith.constant 1 : index
    %c0_52 = arith.constant 0 : index
    %99 = vector.load %arg3[%c0_50, %c1_51, %c0_52] : memref<6x3x128xf32, #tpu.memory_space<vmem>>, vector<1x1x128xf32>
    %100 = vector.shape_cast %99 : vector<1x1x128xf32> to vector<1x128xf32>
    %101 = vector.broadcast %100 : vector<1x128xf32> to vector<32x128xf32>
    %102 = arith.mulf %98, %101 : vector<32x128xf32>
    %c0_53 = arith.constant 0 : index
    %c2_54 = arith.constant 2 : index
    %c0_55 = arith.constant 0 : index
    %103 = vector.load %arg3[%c0_53, %c2_54, %c0_55] : memref<6x3x128xf32, #tpu.memory_space<vmem>>, vector<1x1x128xf32>
    %104 = vector.shape_cast %103 : vector<1x1x128xf32> to vector<1x128xf32>
    %105 = vector.broadcast %104 : vector<1x128xf32> to vector<32x128xf32>
    %106 = arith.addf %102, %105 : vector<32x128xf32>
    %cst_56 = arith.constant 5.000000e-01 : f32
    %107 = vector.broadcast %cst_56 : f32 to vector<32x128xf32>
    %108 = arith.mulf %107, %106 : vector<32x128xf32>
    %cst_57 = arith.constant 0.707106769 : f32
    %109 = vector.broadcast %cst_57 : f32 to vector<32x128xf32>
    %110 = arith.mulf %106, %109 : vector<32x128xf32>
    %cst_58 = arith.constant 0.000000e+00 : f32
    %111 = vector.broadcast %cst_58 : f32 to vector<32x128xf32>
    %112 = arith.cmpf oge, %110, %111 : vector<32x128xf32>
    %cst_59 = arith.constant 1.000000e+00 : f32
    %cst_60 = arith.constant -1.000000e+00 : f32
    %113 = vector.broadcast %cst_59 : f32 to vector<32x128xf32>
    %114 = vector.broadcast %cst_60 : f32 to vector<32x128xf32>
    %115 = arith.select %112, %113, %114 : vector<32x128xi1>, vector<32x128xf32>
    %116 = math.absf %110 : vector<32x128xf32>
    %cst_61 = arith.constant 0.327591091 : f32
    %117 = vector.broadcast %cst_61 : f32 to vector<32x128xf32>
    %118 = arith.mulf %117, %116 : vector<32x128xf32>
    %cst_62 = arith.constant 1.000000e+00 : f32
    %119 = vector.broadcast %cst_62 : f32 to vector<32x128xf32>
    %120 = arith.addf %119, %118 : vector<32x128xf32>
    %121 = tpu.reciprocal %120 {approx = true} : vector<32x128xf32> -> vector<32x128xf32>
    %cst_63 = arith.constant 1.06140542 : f32
    %122 = vector.broadcast %cst_63 : f32 to vector<32x128xf32>
    %123 = arith.mulf %122, %121 : vector<32x128xf32>
    %cst_64 = arith.constant -1.45315206 : f32
    %124 = vector.broadcast %cst_64 : f32 to vector<32x128xf32>
    %125 = arith.addf %123, %124 : vector<32x128xf32>
    %126 = arith.mulf %125, %121 : vector<32x128xf32>
    %cst_65 = arith.constant 1.42141378 : f32
    %127 = vector.broadcast %cst_65 : f32 to vector<32x128xf32>
    %128 = arith.addf %126, %127 : vector<32x128xf32>
    %129 = arith.mulf %128, %121 : vector<32x128xf32>
    %cst_66 = arith.constant -0.284496725 : f32
    %130 = vector.broadcast %cst_66 : f32 to vector<32x128xf32>
    %131 = arith.addf %129, %130 : vector<32x128xf32>
    %132 = arith.mulf %131, %121 : vector<32x128xf32>
    %cst_67 = arith.constant 0.254829586 : f32
    %133 = vector.broadcast %cst_67 : f32 to vector<32x128xf32>
    %134 = arith.addf %132, %133 : vector<32x128xf32>
    %135 = arith.mulf %134, %121 : vector<32x128xf32>
    %cst_68 = arith.constant 0.000000e+00 : f32
    %136 = vector.broadcast %cst_68 : f32 to vector<32x128xf32>
    %137 = arith.subf %136, %116 : vector<32x128xf32>
    %138 = arith.mulf %137, %116 : vector<32x128xf32>
    %139 = math.exp %138 : vector<32x128xf32>
    %140 = arith.mulf %135, %139 : vector<32x128xf32>
    %cst_69 = arith.constant 1.000000e+00 : f32
    %141 = vector.broadcast %cst_69 : f32 to vector<32x128xf32>
    %142 = arith.subf %141, %140 : vector<32x128xf32>
    %143 = arith.mulf %115, %142 : vector<32x128xf32>
    %cst_70 = arith.constant 1.000000e+00 : f32
    %144 = vector.broadcast %cst_70 : f32 to vector<32x128xf32>
    %145 = arith.addf %144, %143 : vector<32x128xf32>
    %146 = arith.mulf %108, %145 : vector<32x128xf32>
    %cst_71 = arith.constant 0.000000e+00 : f32
    %147 = vector.broadcast %cst_71 : f32 to vector<1x128xf32>
    %c0_72 = arith.constant 0 : index
    %c0_73 = arith.constant 0 : index
    %148 = vector.load %arg5[%c0_72, %c0_73] : memref<98x128xf32, #tpu.memory_space<vmem>>, vector<1x128xf32>
    tpu.vector_store %arg5[%c0_72, %c0_73], %147 {strides = array<i32>} : memref<98x128xf32, #tpu.memory_space<vmem>>, vector<1x128xf32>,
    %cst_74 = arith.constant 0.000000e+00 : f32
    %149 = vector.broadcast %cst_74 : f32 to vector<1x128xf32>
    %c33 = arith.constant 33 : index
    %c0_75 = arith.constant 0 : index
    %150 = vector.load %arg5[%c33, %c0_75] : memref<98x128xf32, #tpu.memory_space<vmem>>, vector<1x128xf32>
    tpu.vector_store %arg5[%c33, %c0_75], %149 {strides = array<i32>} : memref<98x128xf32, #tpu.memory_space<vmem>>, vector<1x128xf32>,
    %c1_76 = arith.constant 1 : index
    %c0_77 = arith.constant 0 : index
    %151 = vector.load %arg5[%c1_76, %c0_77] : memref<98x128xf32, #tpu.memory_space<vmem>>, vector<32x128xf32>
    tpu.vector_store %arg5[%c1_76, %c0_77], %146 {strides = array<i32>} : memref<98x128xf32, #tpu.memory_space<vmem>>, vector<32x128xf32>,
    %cst_78 = arith.constant 0.000000e+00 : f32
    %152 = vector.broadcast %cst_78 : f32 to vector<16x128xf32>
    %c0_79 = arith.constant 0 : index
    %c0_80 = arith.constant 0 : index
    %153 = tpu.strided_load %arg5[%c0_79, %c0_80] {strides = array<i32: 2, 1>} : memref<98x128xf32, #tpu.memory_space<vmem>>, vector<16x128xf32>
    %c1_81 = arith.constant 1 : index
    %c0_82 = arith.constant 0 : index
    %c0_83 = arith.constant 0 : index
    %c0_84 = arith.constant 0 : index
    %154 = vector.load %arg2[%c1_81, %c0_82, %c0_83, %c0_84] : memref<6x3x128x128xf32, #tpu.memory_space<vmem>>, vector<1x1x128x128xf32>
    %155 = vector.shape_cast %154 : vector<1x1x128x128xf32> to vector<128x128xf32>
    %cst_85 = arith.constant dense<0.000000e+00> : vector<16x128xf32>
    %156 = tpu.matmul %153, %155, %cst_85 {dimension_numbers = #tpu.dot_dimension_numbers<[1], [0], [0], [1], [0, 0, 1, 1], [], []>} : vector<16x128xf32>, vector<128x128xf32>, vector<16x128xf32> -> vector<16x128xf32>
    %157 = arith.addf %152, %156 : vector<16x128xf32>
    %c1_86 = arith.constant 1 : index
    %c0_87 = arith.constant 0 : index
    %158 = tpu.strided_load %arg5[%c1_86, %c0_87] {strides = array<i32: 2, 1>} : memref<98x128xf32, #tpu.memory_space<vmem>>, vector<16x128xf32>
    %c1_88 = arith.constant 1 : index
    %c1_89 = arith.constant 1 : index
    %c0_90 = arith.constant 0 : index
    %c0_91 = arith.constant 0 : index
    %159 = vector.load %arg2[%c1_88, %c1_89, %c0_90, %c0_91] : memref<6x3x128x128xf32, #tpu.memory_space<vmem>>, vector<1x1x128x128xf32>
    %160 = vector.shape_cast %159 : vector<1x1x128x128xf32> to vector<128x128xf32>
    %cst_92 = arith.constant dense<0.000000e+00> : vector<16x128xf32>
    %161 = tpu.matmul %158, %160, %cst_92 {dimension_numbers = #tpu.dot_dimension_numbers<[1], [0], [0], [1], [0, 0, 1, 1], [], []>} : vector<16x128xf32>, vector<128x128xf32>, vector<16x128xf32> -> vector<16x128xf32>
    %162 = arith.addf %157, %161 : vector<16x128xf32>
    %c2_93 = arith.constant 2 : index
    %c0_94 = arith.constant 0 : index
    %163 = tpu.strided_load %arg5[%c2_93, %c0_94] {strides = array<i32: 2, 1>} : memref<98x128xf32, #tpu.memory_space<vmem>>, vector<16x128xf32>
    %c1_95 = arith.constant 1 : index
    %c2_96 = arith.constant 2 : index
    %c0_97 = arith.constant 0 : index
    %c0_98 = arith.constant 0 : index
    %164 = vector.load %arg2[%c1_95, %c2_96, %c0_97, %c0_98] : memref<6x3x128x128xf32, #tpu.memory_space<vmem>>, vector<1x1x128x128xf32>
    %165 = vector.shape_cast %164 : vector<1x1x128x128xf32> to vector<128x128xf32>
    %cst_99 = arith.constant dense<0.000000e+00> : vector<16x128xf32>
    %166 = tpu.matmul %163, %165, %cst_99 {dimension_numbers = #tpu.dot_dimension_numbers<[1], [0], [0], [1], [0, 0, 1, 1], [], []>} : vector<16x128xf32>, vector<128x128xf32>, vector<16x128xf32> -> vector<16x128xf32>
    %167 = arith.addf %162, %166 : vector<16x128xf32>
    %c1_100 = arith.constant 1 : index
    %c0_101 = arith.constant 0 : index
    %c0_102 = arith.constant 0 : index
    %168 = vector.load %arg3[%c1_100, %c0_101, %c0_102] : memref<6x3x128xf32, #tpu.memory_space<vmem>>, vector<1x1x128xf32>
    %169 = vector.shape_cast %168 : vector<1x1x128xf32> to vector<1x128xf32>
    %170 = vector.broadcast %169 : vector<1x128xf32> to vector<16x128xf32>
    %171 = arith.addf %167, %170 : vector<16x128xf32>
    %cst_103 = arith.constant dense<0.000000e+00> : vector<128xf32>
    %172 = vector.multi_reduction <add>, %171, %cst_103 [0] : vector<16x128xf32> to vector<128xf32>
    %173 = vector.shape_cast %172 : vector<128xf32> to vector<1x128xf32>
    %174 = vector.extract_strided_slice %173 {offsets = [0, 1], sizes = [1, 127], strides = [1, 1]} : vector<1x128xf32> to vector<1x127xf32>
    %175 = vector.extract_strided_slice %173 {offsets = [0, 0], sizes = [1, 1], strides = [1, 1]} : vector<1x128xf32> to vector<1x1xf32>
    %176 = tpu.concatenate %174, %175 in 1 : vector<1x127xf32>, vector<1x1xf32> -> vector<1x128xf32>
    %177 = vector.extract_strided_slice %173 {offsets = [0, 127], sizes = [1, 1], strides = [1, 1]} : vector<1x128xf32> to vector<1x1xf32>
    %178 = vector.extract_strided_slice %173 {offsets = [0, 0], sizes = [1, 127], strides = [1, 1]} : vector<1x128xf32> to vector<1x127xf32>
    %179 = tpu.concatenate %177, %178 in 1 : vector<1x1xf32>, vector<1x127xf32> -> vector<1x128xf32>
    %180 = tpu.iota {dimensions = array<i32: 1>} : vector<1x128xi32>
    %c2_i32_104 = arith.constant 2 : i32
    %c0_i32_105 = arith.constant 0 : i32
    %181 = arith.cmpi eq, %c2_i32_104, %c0_i32_105 : i32
    %c1_i32_106 = arith.constant 1 : i32
    %182 = arith.select %181, %c1_i32_106, %c2_i32_104 : i32
    %183 = vector.broadcast %182 : i32 to vector<1x128xi32>
    %184 = arith.remsi %180, %183 : vector<1x128xi32>
    %c0_i32_107 = arith.constant 0 : i32
    %185 = vector.broadcast %c0_i32_107 : i32 to vector<1x128xi32>
    %186 = arith.cmpi ne, %184, %185 : vector<1x128xi32>
    %c0_i32_108 = arith.constant 0 : i32
    %187 = vector.broadcast %c0_i32_108 : i32 to vector<1x128xi32>
    %188 = arith.cmpi slt, %184, %187 : vector<1x128xi32>
    %c0_i32_109 = arith.constant 0 : i32
    %189 = arith.cmpi slt, %182, %c0_i32_109 : i32
    %190 = vector.broadcast %189 : i1 to vector<1x128xi1>
    %191 = vector.broadcast %190 : vector<1x128xi1> to vector<1x128xi1>
    %192 = arith.xori %188, %191 : vector<1x128xi1>
    %193 = arith.andi %192, %186 : vector<1x128xi1>
    %194 = vector.broadcast %182 : i32 to vector<1x128xi32>
    %195 = arith.addi %184, %194 : vector<1x128xi32>
    %196 = arith.select %193, %195, %184 : vector<1x128xi1>, vector<1x128xi32>
    %c0_i32_110 = arith.constant 0 : i32
    %197 = vector.broadcast %c0_i32_110 : i32 to vector<1x128xi32>
    %198 = arith.cmpi eq, %196, %197 : vector<1x128xi32>
    %199 = arith.select %198, %176, %179 : vector<1x128xi1>, vector<1x128xf32>
    %200 = arith.addf %173, %199 : vector<1x128xf32>
    %cst_111 = arith.constant 3.125000e-02 : f32
    %201 = vector.broadcast %cst_111 : f32 to vector<1x128xf32>
    %202 = arith.mulf %200, %201 : vector<1x128xf32>
    %203 = vector.broadcast %202 : vector<1x128xf32> to vector<16x128xf32>
    %204 = arith.subf %171, %203 : vector<16x128xf32>
    %205 = arith.mulf %204, %204 : vector<16x128xf32>
    %cst_112 = arith.constant dense<0.000000e+00> : vector<128xf32>
    %206 = vector.multi_reduction <add>, %205, %cst_112 [0] : vector<16x128xf32> to vector<128xf32>
    %207 = vector.shape_cast %206 : vector<128xf32> to vector<1x128xf32>
    %208 = vector.extract_strided_slice %207 {offsets = [0, 1], sizes = [1, 127], strides = [1, 1]} : vector<1x128xf32> to vector<1x127xf32>
    %209 = vector.extract_strided_slice %207 {offsets = [0, 0], sizes = [1, 1], strides = [1, 1]} : vector<1x128xf32> to vector<1x1xf32>
    %210 = tpu.concatenate %208, %209 in 1 : vector<1x127xf32>, vector<1x1xf32> -> vector<1x128xf32>
    %211 = vector.extract_strided_slice %207 {offsets = [0, 127], sizes = [1, 1], strides = [1, 1]} : vector<1x128xf32> to vector<1x1xf32>
    %212 = vector.extract_strided_slice %207 {offsets = [0, 0], sizes = [1, 127], strides = [1, 1]} : vector<1x128xf32> to vector<1x127xf32>
    %213 = tpu.concatenate %211, %212 in 1 : vector<1x1xf32>, vector<1x127xf32> -> vector<1x128xf32>
    %214 = tpu.iota {dimensions = array<i32: 1>} : vector<1x128xi32>
    %c2_i32_113 = arith.constant 2 : i32
    %c0_i32_114 = arith.constant 0 : i32
    %215 = arith.cmpi eq, %c2_i32_113, %c0_i32_114 : i32
    %c1_i32_115 = arith.constant 1 : i32
    %216 = arith.select %215, %c1_i32_115, %c2_i32_113 : i32
    %217 = vector.broadcast %216 : i32 to vector<1x128xi32>
    %218 = arith.remsi %214, %217 : vector<1x128xi32>
    %c0_i32_116 = arith.constant 0 : i32
    %219 = vector.broadcast %c0_i32_116 : i32 to vector<1x128xi32>
    %220 = arith.cmpi ne, %218, %219 : vector<1x128xi32>
    %c0_i32_117 = arith.constant 0 : i32
    %221 = vector.broadcast %c0_i32_117 : i32 to vector<1x128xi32>
    %222 = arith.cmpi slt, %218, %221 : vector<1x128xi32>
    %c0_i32_118 = arith.constant 0 : i32
    %223 = arith.cmpi slt, %216, %c0_i32_118 : i32
    %224 = vector.broadcast %223 : i1 to vector<1x128xi1>
    %225 = vector.broadcast %224 : vector<1x128xi1> to vector<1x128xi1>
    %226 = arith.xori %222, %225 : vector<1x128xi1>
    %227 = arith.andi %226, %220 : vector<1x128xi1>
    %228 = vector.broadcast %216 : i32 to vector<1x128xi32>
    %229 = arith.addi %218, %228 : vector<1x128xi32>
    %230 = arith.select %227, %229, %218 : vector<1x128xi1>, vector<1x128xi32>
    %c0_i32_119 = arith.constant 0 : i32
    %231 = vector.broadcast %c0_i32_119 : i32 to vector<1x128xi32>
    %232 = arith.cmpi eq, %230, %231 : vector<1x128xi32>
    %233 = arith.select %232, %210, %213 : vector<1x128xi1>, vector<1x128xf32>
    %234 = arith.addf %207, %233 : vector<1x128xf32>
    %cst_120 = arith.constant 3.125000e-02 : f32
    %235 = vector.broadcast %cst_120 : f32 to vector<1x128xf32>
    %236 = arith.mulf %234, %235 : vector<1x128xf32>
    %cst_121 = arith.constant 9.99999974E-6 : f32
    %237 = vector.broadcast %cst_121 : f32 to vector<1x128xf32>
    %238 = arith.addf %236, %237 : vector<1x128xf32>
    %239 = math.rsqrt %238 : vector<1x128xf32>
    %240 = vector.broadcast %239 : vector<1x128xf32> to vector<16x128xf32>
    %241 = arith.mulf %204, %240 : vector<16x128xf32>
    %c1_122 = arith.constant 1 : index
    %c1_123 = arith.constant 1 : index
    %c0_124 = arith.constant 0 : index
    %242 = vector.load %arg3[%c1_122, %c1_123, %c0_124] : memref<6x3x128xf32, #tpu.memory_space<vmem>>, vector<1x1x128xf32>
    %243 = vector.shape_cast %242 : vector<1x1x128xf32> to vector<1x128xf32>
    %244 = vector.broadcast %243 : vector<1x128xf32> to vector<16x128xf32>
    %245 = arith.mulf %241, %244 : vector<16x128xf32>
    %c1_125 = arith.constant 1 : index
    %c2_126 = arith.constant 2 : index
    %c0_127 = arith.constant 0 : index
    %246 = vector.load %arg3[%c1_125, %c2_126, %c0_127] : memref<6x3x128xf32, #tpu.memory_space<vmem>>, vector<1x1x128xf32>
    %247 = vector.shape_cast %246 : vector<1x1x128xf32> to vector<1x128xf32>
    %248 = vector.broadcast %247 : vector<1x128xf32> to vector<16x128xf32>
    %249 = arith.addf %245, %248 : vector<16x128xf32>
    %cst_128 = arith.constant 5.000000e-01 : f32
    %250 = vector.broadcast %cst_128 : f32 to vector<16x128xf32>
    %251 = arith.mulf %250, %249 : vector<16x128xf32>
    %cst_129 = arith.constant 0.707106769 : f32
    %252 = vector.broadcast %cst_129 : f32 to vector<16x128xf32>
    %253 = arith.mulf %249, %252 : vector<16x128xf32>
    %cst_130 = arith.constant 0.000000e+00 : f32
    %254 = vector.broadcast %cst_130 : f32 to vector<16x128xf32>
    %255 = arith.cmpf oge, %253, %254 : vector<16x128xf32>
    %cst_131 = arith.constant 1.000000e+00 : f32
    %cst_132 = arith.constant -1.000000e+00 : f32
    %256 = vector.broadcast %cst_131 : f32 to vector<16x128xf32>
    %257 = vector.broadcast %cst_132 : f32 to vector<16x128xf32>
    %258 = arith.select %255, %256, %257 : vector<16x128xi1>, vector<16x128xf32>
    %259 = math.absf %253 : vector<16x128xf32>
    %cst_133 = arith.constant 0.327591091 : f32
    %260 = vector.broadcast %cst_133 : f32 to vector<16x128xf32>
    %261 = arith.mulf %260, %259 : vector<16x128xf32>
    %cst_134 = arith.constant 1.000000e+00 : f32
    %262 = vector.broadcast %cst_134 : f32 to vector<16x128xf32>
    %263 = arith.addf %262, %261 : vector<16x128xf32>
    %264 = tpu.reciprocal %263 {approx = true} : vector<16x128xf32> -> vector<16x128xf32>
    %cst_135 = arith.constant 1.06140542 : f32
    %265 = vector.broadcast %cst_135 : f32 to vector<16x128xf32>
    %266 = arith.mulf %265, %264 : vector<16x128xf32>
    %cst_136 = arith.constant -1.45315206 : f32
    %267 = vector.broadcast %cst_136 : f32 to vector<16x128xf32>
    %268 = arith.addf %266, %267 : vector<16x128xf32>
    %269 = arith.mulf %268, %264 : vector<16x128xf32>
    %cst_137 = arith.constant 1.42141378 : f32
    %270 = vector.broadcast %cst_137 : f32 to vector<16x128xf32>
    %271 = arith.addf %269, %270 : vector<16x128xf32>
    %272 = arith.mulf %271, %264 : vector<16x128xf32>
    %cst_138 = arith.constant -0.284496725 : f32
    %273 = vector.broadcast %cst_138 : f32 to vector<16x128xf32>
    %274 = arith.addf %272, %273 : vector<16x128xf32>
    %275 = arith.mulf %274, %264 : vector<16x128xf32>
    %cst_139 = arith.constant 0.254829586 : f32
    %276 = vector.broadcast %cst_139 : f32 to vector<16x128xf32>
    %277 = arith.addf %275, %276 : vector<16x128xf32>
    %278 = arith.mulf %277, %264 : vector<16x128xf32>
    %cst_140 = arith.constant 0.000000e+00 : f32
    %279 = vector.broadcast %cst_140 : f32 to vector<16x128xf32>
    %280 = arith.subf %279, %259 : vector<16x128xf32>
    %281 = arith.mulf %280, %259 : vector<16x128xf32>
    %282 = math.exp %281 : vector<16x128xf32>
    %283 = arith.mulf %278, %282 : vector<16x128xf32>
    %cst_141 = arith.constant 1.000000e+00 : f32
    %284 = vector.broadcast %cst_141 : f32 to vector<16x128xf32>
    %285 = arith.subf %284, %283 : vector<16x128xf32>
    %286 = arith.mulf %258, %285 : vector<16x128xf32>
    %cst_142 = arith.constant 1.000000e+00 : f32
    %287 = vector.broadcast %cst_142 : f32 to vector<16x128xf32>
    %288 = arith.addf %287, %286 : vector<16x128xf32>
    %289 = arith.mulf %251, %288 : vector<16x128xf32>
    %cst_143 = arith.constant 0.000000e+00 : f32
    %290 = vector.broadcast %cst_143 : f32 to vector<1x128xf32>
    %c0_144 = arith.constant 0 : index
    %c0_145 = arith.constant 0 : index
    %291 = vector.load %arg5[%c0_144, %c0_145] : memref<98x128xf32, #tpu.memory_space<vmem>>, vector<1x128xf32>
    tpu.vector_store %arg5[%c0_144, %c0_145], %290 {strides = array<i32>} : memref<98x128xf32, #tpu.memory_space<vmem>>, vector<1x128xf32>,
    %cst_146 = arith.constant 0.000000e+00 : f32
    %292 = vector.broadcast %cst_146 : f32 to vector<1x128xf32>
    %c17 = arith.constant 17 : index
    %c0_147 = arith.constant 0 : index
    %293 = vector.load %arg5[%c17, %c0_147] : memref<98x128xf32, #tpu.memory_space<vmem>>, vector<1x128xf32>
    tpu.vector_store %arg5[%c17, %c0_147], %292 {strides = array<i32>} : memref<98x128xf32, #tpu.memory_space<vmem>>, vector<1x128xf32>,
    %c1_148 = arith.constant 1 : index
    %c0_149 = arith.constant 0 : index
    %294 = vector.load %arg5[%c1_148, %c0_149] : memref<98x128xf32, #tpu.memory_space<vmem>>, vector<16x128xf32>
    tpu.vector_store %arg5[%c1_148, %c0_149], %289 {strides = array<i32>} : memref<98x128xf32, #tpu.memory_space<vmem>>, vector<16x128xf32>,
    %cst_150 = arith.constant 0.000000e+00 : f32
    %295 = vector.broadcast %cst_150 : f32 to vector<8x128xf32>
    %c0_151 = arith.constant 0 : index
    %c0_152 = arith.constant 0 : index
    %296 = tpu.strided_load %arg5[%c0_151, %c0_152] {strides = array<i32: 2, 1>} : memref<98x128xf32, #tpu.memory_space<vmem>>, vector<8x128xf32>
    %c2_153 = arith.constant 2 : index
    %c0_154 = arith.constant 0 : index
    %c0_155 = arith.constant 0 : index
    %c0_156 = arith.constant 0 : index
    %297 = vector.load %arg2[%c2_153, %c0_154, %c0_155, %c0_156] : memref<6x3x128x128xf32, #tpu.memory_space<vmem>>, vector<1x1x128x128xf32>
    %298 = vector.shape_cast %297 : vector<1x1x128x128xf32> to vector<128x128xf32>
    %cst_157 = arith.constant dense<0.000000e+00> : vector<8x128xf32>
    %299 = tpu.matmul %296, %298, %cst_157 {dimension_numbers = #tpu.dot_dimension_numbers<[1], [0], [0], [1], [0, 0, 1, 1], [], []>} : vector<8x128xf32>, vector<128x128xf32>, vector<8x128xf32> -> vector<8x128xf32>
    %300 = arith.addf %295, %299 : vector<8x128xf32>
    %c1_158 = arith.constant 1 : index
    %c0_159 = arith.constant 0 : index
    %301 = tpu.strided_load %arg5[%c1_158, %c0_159] {strides = array<i32: 2, 1>} : memref<98x128xf32, #tpu.memory_space<vmem>>, vector<8x128xf32>
    %c2_160 = arith.constant 2 : index
    %c1_161 = arith.constant 1 : index
    %c0_162 = arith.constant 0 : index
    %c0_163 = arith.constant 0 : index
    %302 = vector.load %arg2[%c2_160, %c1_161, %c0_162, %c0_163] : memref<6x3x128x128xf32, #tpu.memory_space<vmem>>, vector<1x1x128x128xf32>
    %303 = vector.shape_cast %302 : vector<1x1x128x128xf32> to vector<128x128xf32>
    %cst_164 = arith.constant dense<0.000000e+00> : vector<8x128xf32>
    %304 = tpu.matmul %301, %303, %cst_164 {dimension_numbers = #tpu.dot_dimension_numbers<[1], [0], [0], [1], [0, 0, 1, 1], [], []>} : vector<8x128xf32>, vector<128x128xf32>, vector<8x128xf32> -> vector<8x128xf32>
    %305 = arith.addf %300, %304 : vector<8x128xf32>
    %c2_165 = arith.constant 2 : index
    %c0_166 = arith.constant 0 : index
    %306 = tpu.strided_load %arg5[%c2_165, %c0_166] {strides = array<i32: 2, 1>} : memref<98x128xf32, #tpu.memory_space<vmem>>, vector<8x128xf32>
    %c2_167 = arith.constant 2 : index
    %c2_168 = arith.constant 2 : index
    %c0_169 = arith.constant 0 : index
    %c0_170 = arith.constant 0 : index
    %307 = vector.load %arg2[%c2_167, %c2_168, %c0_169, %c0_170] : memref<6x3x128x128xf32, #tpu.memory_space<vmem>>, vector<1x1x128x128xf32>
    %308 = vector.shape_cast %307 : vector<1x1x128x128xf32> to vector<128x128xf32>
    %cst_171 = arith.constant dense<0.000000e+00> : vector<8x128xf32>
    %309 = tpu.matmul %306, %308, %cst_171 {dimension_numbers = #tpu.dot_dimension_numbers<[1], [0], [0], [1], [0, 0, 1, 1], [], []>} : vector<8x128xf32>, vector<128x128xf32>, vector<8x128xf32> -> vector<8x128xf32>
    %310 = arith.addf %305, %309 : vector<8x128xf32>
    %c2_172 = arith.constant 2 : index
    %c0_173 = arith.constant 0 : index
    %c0_174 = arith.constant 0 : index
    %311 = vector.load %arg3[%c2_172, %c0_173, %c0_174] : memref<6x3x128xf32, #tpu.memory_space<vmem>>, vector<1x1x128xf32>
    %312 = vector.shape_cast %311 : vector<1x1x128xf32> to vector<1x128xf32>
    %313 = vector.broadcast %312 : vector<1x128xf32> to vector<8x128xf32>
    %314 = arith.addf %310, %313 : vector<8x128xf32>
    %cst_175 = arith.constant dense<0.000000e+00> : vector<128xf32>
    %315 = vector.multi_reduction <add>, %314, %cst_175 [0] : vector<8x128xf32> to vector<128xf32>
    %316 = vector.shape_cast %315 : vector<128xf32> to vector<1x128xf32>
    %317 = vector.extract_strided_slice %316 {offsets = [0, 1], sizes = [1, 127], strides = [1, 1]} : vector<1x128xf32> to vector<1x127xf32>
    %318 = vector.extract_strided_slice %316 {offsets = [0, 0], sizes = [1, 1], strides = [1, 1]} : vector<1x128xf32> to vector<1x1xf32>
    %319 = tpu.concatenate %317, %318 in 1 : vector<1x127xf32>, vector<1x1xf32> -> vector<1x128xf32>
    %320 = vector.extract_strided_slice %316 {offsets = [0, 127], sizes = [1, 1], strides = [1, 1]} : vector<1x128xf32> to vector<1x1xf32>
    %321 = vector.extract_strided_slice %316 {offsets = [0, 0], sizes = [1, 127], strides = [1, 1]} : vector<1x128xf32> to vector<1x127xf32>
    %322 = tpu.concatenate %320, %321 in 1 : vector<1x1xf32>, vector<1x127xf32> -> vector<1x128xf32>
    %323 = tpu.iota {dimensions = array<i32: 1>} : vector<1x128xi32>
    %c2_i32_176 = arith.constant 2 : i32
    %c0_i32_177 = arith.constant 0 : i32
    %324 = arith.cmpi eq, %c2_i32_176, %c0_i32_177 : i32
    %c1_i32_178 = arith.constant 1 : i32
    %325 = arith.select %324, %c1_i32_178, %c2_i32_176 : i32
    %326 = vector.broadcast %325 : i32 to vector<1x128xi32>
    %327 = arith.remsi %323, %326 : vector<1x128xi32>
    %c0_i32_179 = arith.constant 0 : i32
    %328 = vector.broadcast %c0_i32_179 : i32 to vector<1x128xi32>
    %329 = arith.cmpi ne, %327, %328 : vector<1x128xi32>
    %c0_i32_180 = arith.constant 0 : i32
    %330 = vector.broadcast %c0_i32_180 : i32 to vector<1x128xi32>
    %331 = arith.cmpi slt, %327, %330 : vector<1x128xi32>
    %c0_i32_181 = arith.constant 0 : i32
    %332 = arith.cmpi slt, %325, %c0_i32_181 : i32
    %333 = vector.broadcast %332 : i1 to vector<1x128xi1>
    %334 = vector.broadcast %333 : vector<1x128xi1> to vector<1x128xi1>
    %335 = arith.xori %331, %334 : vector<1x128xi1>
    %336 = arith.andi %335, %329 : vector<1x128xi1>
    %337 = vector.broadcast %325 : i32 to vector<1x128xi32>
    %338 = arith.addi %327, %337 : vector<1x128xi32>
    %339 = arith.select %336, %338, %327 : vector<1x128xi1>, vector<1x128xi32>
    %c0_i32_182 = arith.constant 0 : i32
    %340 = vector.broadcast %c0_i32_182 : i32 to vector<1x128xi32>
    %341 = arith.cmpi eq, %339, %340 : vector<1x128xi32>
    %342 = arith.select %341, %319, %322 : vector<1x128xi1>, vector<1x128xf32>
    %343 = arith.addf %316, %342 : vector<1x128xf32>
    %cst_183 = arith.constant 6.250000e-02 : f32
    %344 = vector.broadcast %cst_183 : f32 to vector<1x128xf32>
    %345 = arith.mulf %343, %344 : vector<1x128xf32>
    %346 = vector.broadcast %345 : vector<1x128xf32> to vector<8x128xf32>
    %347 = arith.subf %314, %346 : vector<8x128xf32>
    %348 = arith.mulf %347, %347 : vector<8x128xf32>
    %cst_184 = arith.constant dense<0.000000e+00> : vector<128xf32>
    %349 = vector.multi_reduction <add>, %348, %cst_184 [0] : vector<8x128xf32> to vector<128xf32>
    %350 = vector.shape_cast %349 : vector<128xf32> to vector<1x128xf32>
    %351 = vector.extract_strided_slice %350 {offsets = [0, 1], sizes = [1, 127], strides = [1, 1]} : vector<1x128xf32> to vector<1x127xf32>
    %352 = vector.extract_strided_slice %350 {offsets = [0, 0], sizes = [1, 1], strides = [1, 1]} : vector<1x128xf32> to vector<1x1xf32>
    %353 = tpu.concatenate %351, %352 in 1 : vector<1x127xf32>, vector<1x1xf32> -> vector<1x128xf32>
    %354 = vector.extract_strided_slice %350 {offsets = [0, 127], sizes = [1, 1], strides = [1, 1]} : vector<1x128xf32> to vector<1x1xf32>
    %355 = vector.extract_strided_slice %350 {offsets = [0, 0], sizes = [1, 127], strides = [1, 1]} : vector<1x128xf32> to vector<1x127xf32>
    %356 = tpu.concatenate %354, %355 in 1 : vector<1x1xf32>, vector<1x127xf32> -> vector<1x128xf32>
    %357 = tpu.iota {dimensions = array<i32: 1>} : vector<1x128xi32>
    %c2_i32_185 = arith.constant 2 : i32
    %c0_i32_186 = arith.constant 0 : i32
    %358 = arith.cmpi eq, %c2_i32_185, %c0_i32_186 : i32
    %c1_i32_187 = arith.constant 1 : i32
    %359 = arith.select %358, %c1_i32_187, %c2_i32_185 : i32
    %360 = vector.broadcast %359 : i32 to vector<1x128xi32>
    %361 = arith.remsi %357, %360 : vector<1x128xi32>
    %c0_i32_188 = arith.constant 0 : i32
    %362 = vector.broadcast %c0_i32_188 : i32 to vector<1x128xi32>
    %363 = arith.cmpi ne, %361, %362 : vector<1x128xi32>
    %c0_i32_189 = arith.constant 0 : i32
    %364 = vector.broadcast %c0_i32_189 : i32 to vector<1x128xi32>
    %365 = arith.cmpi slt, %361, %364 : vector<1x128xi32>
    %c0_i32_190 = arith.constant 0 : i32
    %366 = arith.cmpi slt, %359, %c0_i32_190 : i32
    %367 = vector.broadcast %366 : i1 to vector<1x128xi1>
    %368 = vector.broadcast %367 : vector<1x128xi1> to vector<1x128xi1>
    %369 = arith.xori %365, %368 : vector<1x128xi1>
    %370 = arith.andi %369, %363 : vector<1x128xi1>
    %371 = vector.broadcast %359 : i32 to vector<1x128xi32>
    %372 = arith.addi %361, %371 : vector<1x128xi32>
    %373 = arith.select %370, %372, %361 : vector<1x128xi1>, vector<1x128xi32>
    %c0_i32_191 = arith.constant 0 : i32
    %374 = vector.broadcast %c0_i32_191 : i32 to vector<1x128xi32>
    %375 = arith.cmpi eq, %373, %374 : vector<1x128xi32>
    %376 = arith.select %375, %353, %356 : vector<1x128xi1>, vector<1x128xf32>
    %377 = arith.addf %350, %376 : vector<1x128xf32>
    %cst_192 = arith.constant 6.250000e-02 : f32
    %378 = vector.broadcast %cst_192 : f32 to vector<1x128xf32>
    %379 = arith.mulf %377, %378 : vector<1x128xf32>
    %cst_193 = arith.constant 9.99999974E-6 : f32
    %380 = vector.broadcast %cst_193 : f32 to vector<1x128xf32>
    %381 = arith.addf %379, %380 : vector<1x128xf32>
    %382 = math.rsqrt %381 : vector<1x128xf32>
    %383 = vector.broadcast %382 : vector<1x128xf32> to vector<8x128xf32>
    %384 = arith.mulf %347, %383 : vector<8x128xf32>
    %c2_194 = arith.constant 2 : index
    %c1_195 = arith.constant 1 : index
    %c0_196 = arith.constant 0 : index
    %385 = vector.load %arg3[%c2_194, %c1_195, %c0_196] : memref<6x3x128xf32, #tpu.memory_space<vmem>>, vector<1x1x128xf32>
    %386 = vector.shape_cast %385 : vector<1x1x128xf32> to vector<1x128xf32>
    %387 = vector.broadcast %386 : vector<1x128xf32> to vector<8x128xf32>
    %388 = arith.mulf %384, %387 : vector<8x128xf32>
    %c2_197 = arith.constant 2 : index
    %c2_198 = arith.constant 2 : index
    %c0_199 = arith.constant 0 : index
    %389 = vector.load %arg3[%c2_197, %c2_198, %c0_199] : memref<6x3x128xf32, #tpu.memory_space<vmem>>, vector<1x1x128xf32>
    %390 = vector.shape_cast %389 : vector<1x1x128xf32> to vector<1x128xf32>
    %391 = vector.broadcast %390 : vector<1x128xf32> to vector<8x128xf32>
    %392 = arith.addf %388, %391 : vector<8x128xf32>
    %cst_200 = arith.constant 5.000000e-01 : f32
    %393 = vector.broadcast %cst_200 : f32 to vector<8x128xf32>
    %394 = arith.mulf %393, %392 : vector<8x128xf32>
    %cst_201 = arith.constant 0.707106769 : f32
    %395 = vector.broadcast %cst_201 : f32 to vector<8x128xf32>
    %396 = arith.mulf %392, %395 : vector<8x128xf32>
    %cst_202 = arith.constant 0.000000e+00 : f32
    %397 = vector.broadcast %cst_202 : f32 to vector<8x128xf32>
    %398 = arith.cmpf oge, %396, %397 : vector<8x128xf32>
    %cst_203 = arith.constant 1.000000e+00 : f32
    %cst_204 = arith.constant -1.000000e+00 : f32
    %399 = vector.broadcast %cst_203 : f32 to vector<8x128xf32>
    %400 = vector.broadcast %cst_204 : f32 to vector<8x128xf32>
    %401 = arith.select %398, %399, %400 : vector<8x128xi1>, vector<8x128xf32>
    %402 = math.absf %396 : vector<8x128xf32>
    %cst_205 = arith.constant 0.327591091 : f32
    %403 = vector.broadcast %cst_205 : f32 to vector<8x128xf32>
    %404 = arith.mulf %403, %402 : vector<8x128xf32>
    %cst_206 = arith.constant 1.000000e+00 : f32
    %405 = vector.broadcast %cst_206 : f32 to vector<8x128xf32>
    %406 = arith.addf %405, %404 : vector<8x128xf32>
    %407 = tpu.reciprocal %406 {approx = true} : vector<8x128xf32> -> vector<8x128xf32>
    %cst_207 = arith.constant 1.06140542 : f32
    %408 = vector.broadcast %cst_207 : f32 to vector<8x128xf32>
    %409 = arith.mulf %408, %407 : vector<8x128xf32>
    %cst_208 = arith.constant -1.45315206 : f32
    %410 = vector.broadcast %cst_208 : f32 to vector<8x128xf32>
    %411 = arith.addf %409, %410 : vector<8x128xf32>
    %412 = arith.mulf %411, %407 : vector<8x128xf32>
    %cst_209 = arith.constant 1.42141378 : f32
    %413 = vector.broadcast %cst_209 : f32 to vector<8x128xf32>
    %414 = arith.addf %412, %413 : vector<8x128xf32>
    %415 = arith.mulf %414, %407 : vector<8x128xf32>
    %cst_210 = arith.constant -0.284496725 : f32
    %416 = vector.broadcast %cst_210 : f32 to vector<8x128xf32>
    %417 = arith.addf %415, %416 : vector<8x128xf32>
    %418 = arith.mulf %417, %407 : vector<8x128xf32>
    %cst_211 = arith.constant 0.254829586 : f32
    %419 = vector.broadcast %cst_211 : f32 to vector<8x128xf32>
    %420 = arith.addf %418, %419 : vector<8x128xf32>
    %421 = arith.mulf %420, %407 : vector<8x128xf32>
    %cst_212 = arith.constant 0.000000e+00 : f32
    %422 = vector.broadcast %cst_212 : f32 to vector<8x128xf32>
    %423 = arith.subf %422, %402 : vector<8x128xf32>
    %424 = arith.mulf %423, %402 : vector<8x128xf32>
    %425 = math.exp %424 : vector<8x128xf32>
    %426 = arith.mulf %421, %425 : vector<8x128xf32>
    %cst_213 = arith.constant 1.000000e+00 : f32
    %427 = vector.broadcast %cst_213 : f32 to vector<8x128xf32>
    %428 = arith.subf %427, %426 : vector<8x128xf32>
    %429 = arith.mulf %401, %428 : vector<8x128xf32>
    %cst_214 = arith.constant 1.000000e+00 : f32
    %430 = vector.broadcast %cst_214 : f32 to vector<8x128xf32>
    %431 = arith.addf %430, %429 : vector<8x128xf32>
    %432 = arith.mulf %394, %431 : vector<8x128xf32>
    %cst_215 = arith.constant 0.000000e+00 : f32
    %433 = vector.broadcast %cst_215 : f32 to vector<1x128xf32>
    %c0_216 = arith.constant 0 : index
    %c0_217 = arith.constant 0 : index
    %434 = vector.load %arg5[%c0_216, %c0_217] : memref<98x128xf32, #tpu.memory_space<vmem>>, vector<1x128xf32>
    tpu.vector_store %arg5[%c0_216, %c0_217], %433 {strides = array<i32>} : memref<98x128xf32, #tpu.memory_space<vmem>>, vector<1x128xf32>,
    %cst_218 = arith.constant 0.000000e+00 : f32
    %435 = vector.broadcast %cst_218 : f32 to vector<1x128xf32>
    %c9 = arith.constant 9 : index
    %c0_219 = arith.constant 0 : index
    %436 = vector.load %arg5[%c9, %c0_219] : memref<98x128xf32, #tpu.memory_space<vmem>>, vector<1x128xf32>
    tpu.vector_store %arg5[%c9, %c0_219], %435 {strides = array<i32>} : memref<98x128xf32, #tpu.memory_space<vmem>>, vector<1x128xf32>,
    %c1_220 = arith.constant 1 : index
    %c0_221 = arith.constant 0 : index
    %437 = vector.load %arg5[%c1_220, %c0_221] : memref<98x128xf32, #tpu.memory_space<vmem>>, vector<8x128xf32>
    tpu.vector_store %arg5[%c1_220, %c0_221], %432 {strides = array<i32>} : memref<98x128xf32, #tpu.memory_space<vmem>>, vector<8x128xf32>,
    %cst_222 = arith.constant 0.000000e+00 : f32
    %438 = vector.broadcast %cst_222 : f32 to vector<4x128xf32>
    %c0_223 = arith.constant 0 : index
    %c0_224 = arith.constant 0 : index
    %439 = tpu.strided_load %arg5[%c0_223, %c0_224] {strides = array<i32: 2, 1>} : memref<98x128xf32, #tpu.memory_space<vmem>>, vector<4x128xf32>
    %c3 = arith.constant 3 : index
    %c0_225 = arith.constant 0 : index
    %c0_226 = arith.constant 0 : index
    %c0_227 = arith.constant 0 : index
    %440 = vector.load %arg2[%c3, %c0_225, %c0_226, %c0_227] : memref<6x3x128x128xf32, #tpu.memory_space<vmem>>, vector<1x1x128x128xf32>
    %441 = vector.shape_cast %440 : vector<1x1x128x128xf32> to vector<128x128xf32>
    %cst_228 = arith.constant dense<0.000000e+00> : vector<4x128xf32>
    %442 = tpu.matmul %439, %441, %cst_228 {dimension_numbers = #tpu.dot_dimension_numbers<[1], [0], [0], [1], [0, 0, 1, 1], [], []>} : vector<4x128xf32>, vector<128x128xf32>, vector<4x128xf32> -> vector<4x128xf32>
    %443 = arith.addf %438, %442 : vector<4x128xf32>
    %c1_229 = arith.constant 1 : index
    %c0_230 = arith.constant 0 : index
    %444 = tpu.strided_load %arg5[%c1_229, %c0_230] {strides = array<i32: 2, 1>} : memref<98x128xf32, #tpu.memory_space<vmem>>, vector<4x128xf32>
    %c3_231 = arith.constant 3 : index
    %c1_232 = arith.constant 1 : index
    %c0_233 = arith.constant 0 : index
    %c0_234 = arith.constant 0 : index
    %445 = vector.load %arg2[%c3_231, %c1_232, %c0_233, %c0_234] : memref<6x3x128x128xf32, #tpu.memory_space<vmem>>, vector<1x1x128x128xf32>
    %446 = vector.shape_cast %445 : vector<1x1x128x128xf32> to vector<128x128xf32>
    %cst_235 = arith.constant dense<0.000000e+00> : vector<4x128xf32>
    %447 = tpu.matmul %444, %446, %cst_235 {dimension_numbers = #tpu.dot_dimension_numbers<[1], [0], [0], [1], [0, 0, 1, 1], [], []>} : vector<4x128xf32>, vector<128x128xf32>, vector<4x128xf32> -> vector<4x128xf32>
    %448 = arith.addf %443, %447 : vector<4x128xf32>
    %c2_236 = arith.constant 2 : index
    %c0_237 = arith.constant 0 : index
    %449 = tpu.strided_load %arg5[%c2_236, %c0_237] {strides = array<i32: 2, 1>} : memref<98x128xf32, #tpu.memory_space<vmem>>, vector<4x128xf32>
    %c3_238 = arith.constant 3 : index
    %c2_239 = arith.constant 2 : index
    %c0_240 = arith.constant 0 : index
    %c0_241 = arith.constant 0 : index
    %450 = vector.load %arg2[%c3_238, %c2_239, %c0_240, %c0_241] : memref<6x3x128x128xf32, #tpu.memory_space<vmem>>, vector<1x1x128x128xf32>
    %451 = vector.shape_cast %450 : vector<1x1x128x128xf32> to vector<128x128xf32>
    %cst_242 = arith.constant dense<0.000000e+00> : vector<4x128xf32>
    %452 = tpu.matmul %449, %451, %cst_242 {dimension_numbers = #tpu.dot_dimension_numbers<[1], [0], [0], [1], [0, 0, 1, 1], [], []>} : vector<4x128xf32>, vector<128x128xf32>, vector<4x128xf32> -> vector<4x128xf32>
    %453 = arith.addf %448, %452 : vector<4x128xf32>
    %c3_243 = arith.constant 3 : index
    %c0_244 = arith.constant 0 : index
    %c0_245 = arith.constant 0 : index
    %454 = vector.load %arg3[%c3_243, %c0_244, %c0_245] : memref<6x3x128xf32, #tpu.memory_space<vmem>>, vector<1x1x128xf32>
    %455 = vector.shape_cast %454 : vector<1x1x128xf32> to vector<1x128xf32>
    %456 = vector.broadcast %455 : vector<1x128xf32> to vector<4x128xf32>
    %457 = arith.addf %453, %456 : vector<4x128xf32>
    %cst_246 = arith.constant dense<0.000000e+00> : vector<128xf32>
    %458 = vector.multi_reduction <add>, %457, %cst_246 [0] : vector<4x128xf32> to vector<128xf32>
    %459 = vector.shape_cast %458 : vector<128xf32> to vector<1x128xf32>
    %460 = vector.extract_strided_slice %459 {offsets = [0, 1], sizes = [1, 127], strides = [1, 1]} : vector<1x128xf32> to vector<1x127xf32>
    %461 = vector.extract_strided_slice %459 {offsets = [0, 0], sizes = [1, 1], strides = [1, 1]} : vector<1x128xf32> to vector<1x1xf32>
    %462 = tpu.concatenate %460, %461 in 1 : vector<1x127xf32>, vector<1x1xf32> -> vector<1x128xf32>
    %463 = vector.extract_strided_slice %459 {offsets = [0, 127], sizes = [1, 1], strides = [1, 1]} : vector<1x128xf32> to vector<1x1xf32>
    %464 = vector.extract_strided_slice %459 {offsets = [0, 0], sizes = [1, 127], strides = [1, 1]} : vector<1x128xf32> to vector<1x127xf32>
    %465 = tpu.concatenate %463, %464 in 1 : vector<1x1xf32>, vector<1x127xf32> -> vector<1x128xf32>
    %466 = tpu.iota {dimensions = array<i32: 1>} : vector<1x128xi32>
    %c2_i32_247 = arith.constant 2 : i32
    %c0_i32_248 = arith.constant 0 : i32
    %467 = arith.cmpi eq, %c2_i32_247, %c0_i32_248 : i32
    %c1_i32_249 = arith.constant 1 : i32
    %468 = arith.select %467, %c1_i32_249, %c2_i32_247 : i32
    %469 = vector.broadcast %468 : i32 to vector<1x128xi32>
    %470 = arith.remsi %466, %469 : vector<1x128xi32>
    %c0_i32_250 = arith.constant 0 : i32
    %471 = vector.broadcast %c0_i32_250 : i32 to vector<1x128xi32>
    %472 = arith.cmpi ne, %470, %471 : vector<1x128xi32>
    %c0_i32_251 = arith.constant 0 : i32
    %473 = vector.broadcast %c0_i32_251 : i32 to vector<1x128xi32>
    %474 = arith.cmpi slt, %470, %473 : vector<1x128xi32>
    %c0_i32_252 = arith.constant 0 : i32
    %475 = arith.cmpi slt, %468, %c0_i32_252 : i32
    %476 = vector.broadcast %475 : i1 to vector<1x128xi1>
    %477 = vector.broadcast %476 : vector<1x128xi1> to vector<1x128xi1>
    %478 = arith.xori %474, %477 : vector<1x128xi1>
    %479 = arith.andi %478, %472 : vector<1x128xi1>
    %480 = vector.broadcast %468 : i32 to vector<1x128xi32>
    %481 = arith.addi %470, %480 : vector<1x128xi32>
    %482 = arith.select %479, %481, %470 : vector<1x128xi1>, vector<1x128xi32>
    %c0_i32_253 = arith.constant 0 : i32
    %483 = vector.broadcast %c0_i32_253 : i32 to vector<1x128xi32>
    %484 = arith.cmpi eq, %482, %483 : vector<1x128xi32>
    %485 = arith.select %484, %462, %465 : vector<1x128xi1>, vector<1x128xf32>
    %486 = arith.addf %459, %485 : vector<1x128xf32>
    %cst_254 = arith.constant 1.250000e-01 : f32
    %487 = vector.broadcast %cst_254 : f32 to vector<1x128xf32>
    %488 = arith.mulf %486, %487 : vector<1x128xf32>
    %489 = vector.broadcast %488 : vector<1x128xf32> to vector<4x128xf32>
    %490 = arith.subf %457, %489 : vector<4x128xf32>
    %491 = arith.mulf %490, %490 : vector<4x128xf32>
    %cst_255 = arith.constant dense<0.000000e+00> : vector<128xf32>
    %492 = vector.multi_reduction <add>, %491, %cst_255 [0] : vector<4x128xf32> to vector<128xf32>
    %493 = vector.shape_cast %492 : vector<128xf32> to vector<1x128xf32>
    %494 = vector.extract_strided_slice %493 {offsets = [0, 1], sizes = [1, 127], strides = [1, 1]} : vector<1x128xf32> to vector<1x127xf32>
    %495 = vector.extract_strided_slice %493 {offsets = [0, 0], sizes = [1, 1], strides = [1, 1]} : vector<1x128xf32> to vector<1x1xf32>
    %496 = tpu.concatenate %494, %495 in 1 : vector<1x127xf32>, vector<1x1xf32> -> vector<1x128xf32>
    %497 = vector.extract_strided_slice %493 {offsets = [0, 127], sizes = [1, 1], strides = [1, 1]} : vector<1x128xf32> to vector<1x1xf32>
    %498 = vector.extract_strided_slice %493 {offsets = [0, 0], sizes = [1, 127], strides = [1, 1]} : vector<1x128xf32> to vector<1x127xf32>
    %499 = tpu.concatenate %497, %498 in 1 : vector<1x1xf32>, vector<1x127xf32> -> vector<1x128xf32>
    %500 = tpu.iota {dimensions = array<i32: 1>} : vector<1x128xi32>
    %c2_i32_256 = arith.constant 2 : i32
    %c0_i32_257 = arith.constant 0 : i32
    %501 = arith.cmpi eq, %c2_i32_256, %c0_i32_257 : i32
    %c1_i32_258 = arith.constant 1 : i32
    %502 = arith.select %501, %c1_i32_258, %c2_i32_256 : i32
    %503 = vector.broadcast %502 : i32 to vector<1x128xi32>
    %504 = arith.remsi %500, %503 : vector<1x128xi32>
    %c0_i32_259 = arith.constant 0 : i32
    %505 = vector.broadcast %c0_i32_259 : i32 to vector<1x128xi32>
    %506 = arith.cmpi ne, %504, %505 : vector<1x128xi32>
    %c0_i32_260 = arith.constant 0 : i32
    %507 = vector.broadcast %c0_i32_260 : i32 to vector<1x128xi32>
    %508 = arith.cmpi slt, %504, %507 : vector<1x128xi32>
    %c0_i32_261 = arith.constant 0 : i32
    %509 = arith.cmpi slt, %502, %c0_i32_261 : i32
    %510 = vector.broadcast %509 : i1 to vector<1x128xi1>
    %511 = vector.broadcast %510 : vector<1x128xi1> to vector<1x128xi1>
    %512 = arith.xori %508, %511 : vector<1x128xi1>
    %513 = arith.andi %512, %506 : vector<1x128xi1>
    %514 = vector.broadcast %502 : i32 to vector<1x128xi32>
    %515 = arith.addi %504, %514 : vector<1x128xi32>
    %516 = arith.select %513, %515, %504 : vector<1x128xi1>, vector<1x128xi32>
    %c0_i32_262 = arith.constant 0 : i32
    %517 = vector.broadcast %c0_i32_262 : i32 to vector<1x128xi32>
    %518 = arith.cmpi eq, %516, %517 : vector<1x128xi32>
    %519 = arith.select %518, %496, %499 : vector<1x128xi1>, vector<1x128xf32>
    %520 = arith.addf %493, %519 : vector<1x128xf32>
    %cst_263 = arith.constant 1.250000e-01 : f32
    %521 = vector.broadcast %cst_263 : f32 to vector<1x128xf32>
    %522 = arith.mulf %520, %521 : vector<1x128xf32>
    %cst_264 = arith.constant 9.99999974E-6 : f32
    %523 = vector.broadcast %cst_264 : f32 to vector<1x128xf32>
    %524 = arith.addf %522, %523 : vector<1x128xf32>
    %525 = math.rsqrt %524 : vector<1x128xf32>
    %526 = vector.broadcast %525 : vector<1x128xf32> to vector<4x128xf32>
    %527 = arith.mulf %490, %526 : vector<4x128xf32>
    %c3_265 = arith.constant 3 : index
    %c1_266 = arith.constant 1 : index
    %c0_267 = arith.constant 0 : index
    %528 = vector.load %arg3[%c3_265, %c1_266, %c0_267] : memref<6x3x128xf32, #tpu.memory_space<vmem>>, vector<1x1x128xf32>
    %529 = vector.shape_cast %528 : vector<1x1x128xf32> to vector<1x128xf32>
    %530 = vector.broadcast %529 : vector<1x128xf32> to vector<4x128xf32>
    %531 = arith.mulf %527, %530 : vector<4x128xf32>
    %c3_268 = arith.constant 3 : index
    %c2_269 = arith.constant 2 : index
    %c0_270 = arith.constant 0 : index
    %532 = vector.load %arg3[%c3_268, %c2_269, %c0_270] : memref<6x3x128xf32, #tpu.memory_space<vmem>>, vector<1x1x128xf32>
    %533 = vector.shape_cast %532 : vector<1x1x128xf32> to vector<1x128xf32>
    %534 = vector.broadcast %533 : vector<1x128xf32> to vector<4x128xf32>
    %535 = arith.addf %531, %534 : vector<4x128xf32>
    %cst_271 = arith.constant 5.000000e-01 : f32
    %536 = vector.broadcast %cst_271 : f32 to vector<4x128xf32>
    %537 = arith.mulf %536, %535 : vector<4x128xf32>
    %cst_272 = arith.constant 0.707106769 : f32
    %538 = vector.broadcast %cst_272 : f32 to vector<4x128xf32>
    %539 = arith.mulf %535, %538 : vector<4x128xf32>
    %cst_273 = arith.constant 0.000000e+00 : f32
    %540 = vector.broadcast %cst_273 : f32 to vector<4x128xf32>
    %541 = arith.cmpf oge, %539, %540 : vector<4x128xf32>
    %cst_274 = arith.constant 1.000000e+00 : f32
    %cst_275 = arith.constant -1.000000e+00 : f32
    %542 = vector.broadcast %cst_274 : f32 to vector<4x128xf32>
    %543 = vector.broadcast %cst_275 : f32 to vector<4x128xf32>
    %544 = arith.select %541, %542, %543 : vector<4x128xi1>, vector<4x128xf32>
    %545 = math.absf %539 : vector<4x128xf32>
    %cst_276 = arith.constant 0.327591091 : f32
    %546 = vector.broadcast %cst_276 : f32 to vector<4x128xf32>
    %547 = arith.mulf %546, %545 : vector<4x128xf32>
    %cst_277 = arith.constant 1.000000e+00 : f32
    %548 = vector.broadcast %cst_277 : f32 to vector<4x128xf32>
    %549 = arith.addf %548, %547 : vector<4x128xf32>
    %550 = tpu.reciprocal %549 {approx = true} : vector<4x128xf32> -> vector<4x128xf32>
    %cst_278 = arith.constant 1.06140542 : f32
    %551 = vector.broadcast %cst_278 : f32 to vector<4x128xf32>
    %552 = arith.mulf %551, %550 : vector<4x128xf32>
    %cst_279 = arith.constant -1.45315206 : f32
    %553 = vector.broadcast %cst_279 : f32 to vector<4x128xf32>
    %554 = arith.addf %552, %553 : vector<4x128xf32>
    %555 = arith.mulf %554, %550 : vector<4x128xf32>
    %cst_280 = arith.constant 1.42141378 : f32
    %556 = vector.broadcast %cst_280 : f32 to vector<4x128xf32>
    %557 = arith.addf %555, %556 : vector<4x128xf32>
    %558 = arith.mulf %557, %550 : vector<4x128xf32>
    %cst_281 = arith.constant -0.284496725 : f32
    %559 = vector.broadcast %cst_281 : f32 to vector<4x128xf32>
    %560 = arith.addf %558, %559 : vector<4x128xf32>
    %561 = arith.mulf %560, %550 : vector<4x128xf32>
    %cst_282 = arith.constant 0.254829586 : f32
    %562 = vector.broadcast %cst_282 : f32 to vector<4x128xf32>
    %563 = arith.addf %561, %562 : vector<4x128xf32>
    %564 = arith.mulf %563, %550 : vector<4x128xf32>
    %cst_283 = arith.constant 0.000000e+00 : f32
    %565 = vector.broadcast %cst_283 : f32 to vector<4x128xf32>
    %566 = arith.subf %565, %545 : vector<4x128xf32>
    %567 = arith.mulf %566, %545 : vector<4x128xf32>
    %568 = math.exp %567 : vector<4x128xf32>
    %569 = arith.mulf %564, %568 : vector<4x128xf32>
    %cst_284 = arith.constant 1.000000e+00 : f32
    %570 = vector.broadcast %cst_284 : f32 to vector<4x128xf32>
    %571 = arith.subf %570, %569 : vector<4x128xf32>
    %572 = arith.mulf %544, %571 : vector<4x128xf32>
    %cst_285 = arith.constant 1.000000e+00 : f32
    %573 = vector.broadcast %cst_285 : f32 to vector<4x128xf32>
    %574 = arith.addf %573, %572 : vector<4x128xf32>
    %575 = arith.mulf %537, %574 : vector<4x128xf32>
    %cst_286 = arith.constant 0.000000e+00 : f32
    %576 = vector.broadcast %cst_286 : f32 to vector<1x128xf32>
    %c0_287 = arith.constant 0 : index
    %c0_288 = arith.constant 0 : index
    %577 = vector.load %arg5[%c0_287, %c0_288] : memref<98x128xf32, #tpu.memory_space<vmem>>, vector<1x128xf32>
    tpu.vector_store %arg5[%c0_287, %c0_288], %576 {strides = array<i32>} : memref<98x128xf32, #tpu.memory_space<vmem>>, vector<1x128xf32>,
    %cst_289 = arith.constant 0.000000e+00 : f32
    %578 = vector.broadcast %cst_289 : f32 to vector<1x128xf32>
    %c5 = arith.constant 5 : index
    %c0_290 = arith.constant 0 : index
    %579 = vector.load %arg5[%c5, %c0_290] : memref<98x128xf32, #tpu.memory_space<vmem>>, vector<1x128xf32>
    tpu.vector_store %arg5[%c5, %c0_290], %578 {strides = array<i32>} : memref<98x128xf32, #tpu.memory_space<vmem>>, vector<1x128xf32>,
    %c1_291 = arith.constant 1 : index
    %c0_292 = arith.constant 0 : index
    %580 = vector.load %arg5[%c1_291, %c0_292] : memref<98x128xf32, #tpu.memory_space<vmem>>, vector<4x128xf32>
    tpu.vector_store %arg5[%c1_291, %c0_292], %575 {strides = array<i32>} : memref<98x128xf32, #tpu.memory_space<vmem>>, vector<4x128xf32>,
    %cst_293 = arith.constant 0.000000e+00 : f32
    %581 = vector.broadcast %cst_293 : f32 to vector<2x128xf32>
    %c0_294 = arith.constant 0 : index
    %c0_295 = arith.constant 0 : index
    %582 = tpu.strided_load %arg5[%c0_294, %c0_295] {strides = array<i32: 2, 1>} : memref<98x128xf32, #tpu.memory_space<vmem>>, vector<2x128xf32>
    %c4 = arith.constant 4 : index
    %c0_296 = arith.constant 0 : index
    %c0_297 = arith.constant 0 : index
    %c0_298 = arith.constant 0 : index
    %583 = vector.load %arg2[%c4, %c0_296, %c0_297, %c0_298] : memref<6x3x128x128xf32, #tpu.memory_space<vmem>>, vector<1x1x128x128xf32>
    %584 = vector.shape_cast %583 : vector<1x1x128x128xf32> to vector<128x128xf32>
    %cst_299 = arith.constant dense<0.000000e+00> : vector<2x128xf32>
    %585 = tpu.matmul %582, %584, %cst_299 {dimension_numbers = #tpu.dot_dimension_numbers<[1], [0], [0], [1], [0, 0, 1, 1], [], []>} : vector<2x128xf32>, vector<128x128xf32>, vector<2x128xf32> -> vector<2x128xf32>
    %586 = arith.addf %581, %585 : vector<2x128xf32>
    %c1_300 = arith.constant 1 : index
    %c0_301 = arith.constant 0 : index
    %587 = tpu.strided_load %arg5[%c1_300, %c0_301] {strides = array<i32: 2, 1>} : memref<98x128xf32, #tpu.memory_space<vmem>>, vector<2x128xf32>
    %c4_302 = arith.constant 4 : index
    %c1_303 = arith.constant 1 : index
    %c0_304 = arith.constant 0 : index
    %c0_305 = arith.constant 0 : index
    %588 = vector.load %arg2[%c4_302, %c1_303, %c0_304, %c0_305] : memref<6x3x128x128xf32, #tpu.memory_space<vmem>>, vector<1x1x128x128xf32>
    %589 = vector.shape_cast %588 : vector<1x1x128x128xf32> to vector<128x128xf32>
    %cst_306 = arith.constant dense<0.000000e+00> : vector<2x128xf32>
    %590 = tpu.matmul %587, %589, %cst_306 {dimension_numbers = #tpu.dot_dimension_numbers<[1], [0], [0], [1], [0, 0, 1, 1], [], []>} : vector<2x128xf32>, vector<128x128xf32>, vector<2x128xf32> -> vector<2x128xf32>
    %591 = arith.addf %586, %590 : vector<2x128xf32>
    %c2_307 = arith.constant 2 : index
    %c0_308 = arith.constant 0 : index
    %592 = tpu.strided_load %arg5[%c2_307, %c0_308] {strides = array<i32: 2, 1>} : memref<98x128xf32, #tpu.memory_space<vmem>>, vector<2x128xf32>
    %c4_309 = arith.constant 4 : index
    %c2_310 = arith.constant 2 : index
    %c0_311 = arith.constant 0 : index
    %c0_312 = arith.constant 0 : index
    %593 = vector.load %arg2[%c4_309, %c2_310, %c0_311, %c0_312] : memref<6x3x128x128xf32, #tpu.memory_space<vmem>>, vector<1x1x128x128xf32>
    %594 = vector.shape_cast %593 : vector<1x1x128x128xf32> to vector<128x128xf32>
    %cst_313 = arith.constant dense<0.000000e+00> : vector<2x128xf32>
    %595 = tpu.matmul %592, %594, %cst_313 {dimension_numbers = #tpu.dot_dimension_numbers<[1], [0], [0], [1], [0, 0, 1, 1], [], []>} : vector<2x128xf32>, vector<128x128xf32>, vector<2x128xf32> -> vector<2x128xf32>
    %596 = arith.addf %591, %595 : vector<2x128xf32>
    %c4_314 = arith.constant 4 : index
    %c0_315 = arith.constant 0 : index
    %c0_316 = arith.constant 0 : index
    %597 = vector.load %arg3[%c4_314, %c0_315, %c0_316] : memref<6x3x128xf32, #tpu.memory_space<vmem>>, vector<1x1x128xf32>
    %598 = vector.shape_cast %597 : vector<1x1x128xf32> to vector<1x128xf32>
    %599 = vector.broadcast %598 : vector<1x128xf32> to vector<2x128xf32>
    %600 = arith.addf %596, %599 : vector<2x128xf32>
    %cst_317 = arith.constant dense<0.000000e+00> : vector<128xf32>
    %601 = vector.multi_reduction <add>, %600, %cst_317 [0] : vector<2x128xf32> to vector<128xf32>
    %602 = vector.shape_cast %601 : vector<128xf32> to vector<1x128xf32>
    %603 = vector.extract_strided_slice %602 {offsets = [0, 1], sizes = [1, 127], strides = [1, 1]} : vector<1x128xf32> to vector<1x127xf32>
    %604 = vector.extract_strided_slice %602 {offsets = [0, 0], sizes = [1, 1], strides = [1, 1]} : vector<1x128xf32> to vector<1x1xf32>
    %605 = tpu.concatenate %603, %604 in 1 : vector<1x127xf32>, vector<1x1xf32> -> vector<1x128xf32>
    %606 = vector.extract_strided_slice %602 {offsets = [0, 127], sizes = [1, 1], strides = [1, 1]} : vector<1x128xf32> to vector<1x1xf32>
    %607 = vector.extract_strided_slice %602 {offsets = [0, 0], sizes = [1, 127], strides = [1, 1]} : vector<1x128xf32> to vector<1x127xf32>
    %608 = tpu.concatenate %606, %607 in 1 : vector<1x1xf32>, vector<1x127xf32> -> vector<1x128xf32>
    %609 = tpu.iota {dimensions = array<i32: 1>} : vector<1x128xi32>
    %c2_i32_318 = arith.constant 2 : i32
    %c0_i32_319 = arith.constant 0 : i32
    %610 = arith.cmpi eq, %c2_i32_318, %c0_i32_319 : i32
    %c1_i32_320 = arith.constant 1 : i32
    %611 = arith.select %610, %c1_i32_320, %c2_i32_318 : i32
    %612 = vector.broadcast %611 : i32 to vector<1x128xi32>
    %613 = arith.remsi %609, %612 : vector<1x128xi32>
    %c0_i32_321 = arith.constant 0 : i32
    %614 = vector.broadcast %c0_i32_321 : i32 to vector<1x128xi32>
    %615 = arith.cmpi ne, %613, %614 : vector<1x128xi32>
    %c0_i32_322 = arith.constant 0 : i32
    %616 = vector.broadcast %c0_i32_322 : i32 to vector<1x128xi32>
    %617 = arith.cmpi slt, %613, %616 : vector<1x128xi32>
    %c0_i32_323 = arith.constant 0 : i32
    %618 = arith.cmpi slt, %611, %c0_i32_323 : i32
    %619 = vector.broadcast %618 : i1 to vector<1x128xi1>
    %620 = vector.broadcast %619 : vector<1x128xi1> to vector<1x128xi1>
    %621 = arith.xori %617, %620 : vector<1x128xi1>
    %622 = arith.andi %621, %615 : vector<1x128xi1>
    %623 = vector.broadcast %611 : i32 to vector<1x128xi32>
    %624 = arith.addi %613, %623 : vector<1x128xi32>
    %625 = arith.select %622, %624, %613 : vector<1x128xi1>, vector<1x128xi32>
    %c0_i32_324 = arith.constant 0 : i32
    %626 = vector.broadcast %c0_i32_324 : i32 to vector<1x128xi32>
    %627 = arith.cmpi eq, %625, %626 : vector<1x128xi32>
    %628 = arith.select %627, %605, %608 : vector<1x128xi1>, vector<1x128xf32>
    %629 = arith.addf %602, %628 : vector<1x128xf32>
    %cst_325 = arith.constant 2.500000e-01 : f32
    %630 = vector.broadcast %cst_325 : f32 to vector<1x128xf32>
    %631 = arith.mulf %629, %630 : vector<1x128xf32>
    %632 = vector.broadcast %631 : vector<1x128xf32> to vector<2x128xf32>
    %633 = arith.subf %600, %632 : vector<2x128xf32>
    %634 = arith.mulf %633, %633 : vector<2x128xf32>
    %cst_326 = arith.constant dense<0.000000e+00> : vector<128xf32>
    %635 = vector.multi_reduction <add>, %634, %cst_326 [0] : vector<2x128xf32> to vector<128xf32>
    %636 = vector.shape_cast %635 : vector<128xf32> to vector<1x128xf32>
    %637 = vector.extract_strided_slice %636 {offsets = [0, 1], sizes = [1, 127], strides = [1, 1]} : vector<1x128xf32> to vector<1x127xf32>
    %638 = vector.extract_strided_slice %636 {offsets = [0, 0], sizes = [1, 1], strides = [1, 1]} : vector<1x128xf32> to vector<1x1xf32>
    %639 = tpu.concatenate %637, %638 in 1 : vector<1x127xf32>, vector<1x1xf32> -> vector<1x128xf32>
    %640 = vector.extract_strided_slice %636 {offsets = [0, 127], sizes = [1, 1], strides = [1, 1]} : vector<1x128xf32> to vector<1x1xf32>
    %641 = vector.extract_strided_slice %636 {offsets = [0, 0], sizes = [1, 127], strides = [1, 1]} : vector<1x128xf32> to vector<1x127xf32>
    %642 = tpu.concatenate %640, %641 in 1 : vector<1x1xf32>, vector<1x127xf32> -> vector<1x128xf32>
    %643 = tpu.iota {dimensions = array<i32: 1>} : vector<1x128xi32>
    %c2_i32_327 = arith.constant 2 : i32
    %c0_i32_328 = arith.constant 0 : i32
    %644 = arith.cmpi eq, %c2_i32_327, %c0_i32_328 : i32
    %c1_i32_329 = arith.constant 1 : i32
    %645 = arith.select %644, %c1_i32_329, %c2_i32_327 : i32
    %646 = vector.broadcast %645 : i32 to vector<1x128xi32>
    %647 = arith.remsi %643, %646 : vector<1x128xi32>
    %c0_i32_330 = arith.constant 0 : i32
    %648 = vector.broadcast %c0_i32_330 : i32 to vector<1x128xi32>
    %649 = arith.cmpi ne, %647, %648 : vector<1x128xi32>
    %c0_i32_331 = arith.constant 0 : i32
    %650 = vector.broadcast %c0_i32_331 : i32 to vector<1x128xi32>
    %651 = arith.cmpi slt, %647, %650 : vector<1x128xi32>
    %c0_i32_332 = arith.constant 0 : i32
    %652 = arith.cmpi slt, %645, %c0_i32_332 : i32
    %653 = vector.broadcast %652 : i1 to vector<1x128xi1>
    %654 = vector.broadcast %653 : vector<1x128xi1> to vector<1x128xi1>
    %655 = arith.xori %651, %654 : vector<1x128xi1>
    %656 = arith.andi %655, %649 : vector<1x128xi1>
    %657 = vector.broadcast %645 : i32 to vector<1x128xi32>
    %658 = arith.addi %647, %657 : vector<1x128xi32>
    %659 = arith.select %656, %658, %647 : vector<1x128xi1>, vector<1x128xi32>
    %c0_i32_333 = arith.constant 0 : i32
    %660 = vector.broadcast %c0_i32_333 : i32 to vector<1x128xi32>
    %661 = arith.cmpi eq, %659, %660 : vector<1x128xi32>
    %662 = arith.select %661, %639, %642 : vector<1x128xi1>, vector<1x128xf32>
    %663 = arith.addf %636, %662 : vector<1x128xf32>
    %cst_334 = arith.constant 2.500000e-01 : f32
    %664 = vector.broadcast %cst_334 : f32 to vector<1x128xf32>
    %665 = arith.mulf %663, %664 : vector<1x128xf32>
    %cst_335 = arith.constant 9.99999974E-6 : f32
    %666 = vector.broadcast %cst_335 : f32 to vector<1x128xf32>
    %667 = arith.addf %665, %666 : vector<1x128xf32>
    %668 = math.rsqrt %667 : vector<1x128xf32>
    %669 = vector.broadcast %668 : vector<1x128xf32> to vector<2x128xf32>
    %670 = arith.mulf %633, %669 : vector<2x128xf32>
    %c4_336 = arith.constant 4 : index
    %c1_337 = arith.constant 1 : index
    %c0_338 = arith.constant 0 : index
    %671 = vector.load %arg3[%c4_336, %c1_337, %c0_338] : memref<6x3x128xf32, #tpu.memory_space<vmem>>, vector<1x1x128xf32>
    %672 = vector.shape_cast %671 : vector<1x1x128xf32> to vector<1x128xf32>
    %673 = vector.broadcast %672 : vector<1x128xf32> to vector<2x128xf32>
    %674 = arith.mulf %670, %673 : vector<2x128xf32>
    %c4_339 = arith.constant 4 : index
    %c2_340 = arith.constant 2 : index
    %c0_341 = arith.constant 0 : index
    %675 = vector.load %arg3[%c4_339, %c2_340, %c0_341] : memref<6x3x128xf32, #tpu.memory_space<vmem>>, vector<1x1x128xf32>
    %676 = vector.shape_cast %675 : vector<1x1x128xf32> to vector<1x128xf32>
    %677 = vector.broadcast %676 : vector<1x128xf32> to vector<2x128xf32>
    %678 = arith.addf %674, %677 : vector<2x128xf32>
    %cst_342 = arith.constant 5.000000e-01 : f32
    %679 = vector.broadcast %cst_342 : f32 to vector<2x128xf32>
    %680 = arith.mulf %679, %678 : vector<2x128xf32>
    %cst_343 = arith.constant 0.707106769 : f32
    %681 = vector.broadcast %cst_343 : f32 to vector<2x128xf32>
    %682 = arith.mulf %678, %681 : vector<2x128xf32>
    %cst_344 = arith.constant 0.000000e+00 : f32
    %683 = vector.broadcast %cst_344 : f32 to vector<2x128xf32>
    %684 = arith.cmpf oge, %682, %683 : vector<2x128xf32>
    %cst_345 = arith.constant 1.000000e+00 : f32
    %cst_346 = arith.constant -1.000000e+00 : f32
    %685 = vector.broadcast %cst_345 : f32 to vector<2x128xf32>
    %686 = vector.broadcast %cst_346 : f32 to vector<2x128xf32>
    %687 = arith.select %684, %685, %686 : vector<2x128xi1>, vector<2x128xf32>
    %688 = math.absf %682 : vector<2x128xf32>
    %cst_347 = arith.constant 0.327591091 : f32
    %689 = vector.broadcast %cst_347 : f32 to vector<2x128xf32>
    %690 = arith.mulf %689, %688 : vector<2x128xf32>
    %cst_348 = arith.constant 1.000000e+00 : f32
    %691 = vector.broadcast %cst_348 : f32 to vector<2x128xf32>
    %692 = arith.addf %691, %690 : vector<2x128xf32>
    %693 = tpu.reciprocal %692 {approx = true} : vector<2x128xf32> -> vector<2x128xf32>
    %cst_349 = arith.constant 1.06140542 : f32
    %694 = vector.broadcast %cst_349 : f32 to vector<2x128xf32>
    %695 = arith.mulf %694, %693 : vector<2x128xf32>
    %cst_350 = arith.constant -1.45315206 : f32
    %696 = vector.broadcast %cst_350 : f32 to vector<2x128xf32>
    %697 = arith.addf %695, %696 : vector<2x128xf32>
    %698 = arith.mulf %697, %693 : vector<2x128xf32>
    %cst_351 = arith.constant 1.42141378 : f32
    %699 = vector.broadcast %cst_351 : f32 to vector<2x128xf32>
    %700 = arith.addf %698, %699 : vector<2x128xf32>
    %701 = arith.mulf %700, %693 : vector<2x128xf32>
    %cst_352 = arith.constant -0.284496725 : f32
    %702 = vector.broadcast %cst_352 : f32 to vector<2x128xf32>
    %703 = arith.addf %701, %702 : vector<2x128xf32>
    %704 = arith.mulf %703, %693 : vector<2x128xf32>
    %cst_353 = arith.constant 0.254829586 : f32
    %705 = vector.broadcast %cst_353 : f32 to vector<2x128xf32>
    %706 = arith.addf %704, %705 : vector<2x128xf32>
    %707 = arith.mulf %706, %693 : vector<2x128xf32>
    %cst_354 = arith.constant 0.000000e+00 : f32
    %708 = vector.broadcast %cst_354 : f32 to vector<2x128xf32>
    %709 = arith.subf %708, %688 : vector<2x128xf32>
    %710 = arith.mulf %709, %688 : vector<2x128xf32>
    %711 = math.exp %710 : vector<2x128xf32>
    %712 = arith.mulf %707, %711 : vector<2x128xf32>
    %cst_355 = arith.constant 1.000000e+00 : f32
    %713 = vector.broadcast %cst_355 : f32 to vector<2x128xf32>
    %714 = arith.subf %713, %712 : vector<2x128xf32>
    %715 = arith.mulf %687, %714 : vector<2x128xf32>
    %cst_356 = arith.constant 1.000000e+00 : f32
    %716 = vector.broadcast %cst_356 : f32 to vector<2x128xf32>
    %717 = arith.addf %716, %715 : vector<2x128xf32>
    %718 = arith.mulf %680, %717 : vector<2x128xf32>
    %cst_357 = arith.constant 0.000000e+00 : f32
    %719 = vector.broadcast %cst_357 : f32 to vector<1x128xf32>
    %c0_358 = arith.constant 0 : index
    %c0_359 = arith.constant 0 : index
    %720 = vector.load %arg5[%c0_358, %c0_359] : memref<98x128xf32, #tpu.memory_space<vmem>>, vector<1x128xf32>
    tpu.vector_store %arg5[%c0_358, %c0_359], %719 {strides = array<i32>} : memref<98x128xf32, #tpu.memory_space<vmem>>, vector<1x128xf32>,
    %cst_360 = arith.constant 0.000000e+00 : f32
    %721 = vector.broadcast %cst_360 : f32 to vector<1x128xf32>
    %c3_361 = arith.constant 3 : index
    %c0_362 = arith.constant 0 : index
    %722 = vector.load %arg5[%c3_361, %c0_362] : memref<98x128xf32, #tpu.memory_space<vmem>>, vector<1x128xf32>
    tpu.vector_store %arg5[%c3_361, %c0_362], %721 {strides = array<i32>} : memref<98x128xf32, #tpu.memory_space<vmem>>, vector<1x128xf32>,
    %c1_363 = arith.constant 1 : index
    %c0_364 = arith.constant 0 : index
    %723 = vector.load %arg5[%c1_363, %c0_364] : memref<98x128xf32, #tpu.memory_space<vmem>>, vector<2x128xf32>
    tpu.vector_store %arg5[%c1_363, %c0_364], %718 {strides = array<i32>} : memref<98x128xf32, #tpu.memory_space<vmem>>, vector<2x128xf32>,
    %cst_365 = arith.constant 0.000000e+00 : f32
    %724 = vector.broadcast %cst_365 : f32 to vector<1x128xf32>
    %c0_366 = arith.constant 0 : index
    %c0_367 = arith.constant 0 : index
    %725 = tpu.strided_load %arg5[%c0_366, %c0_367] {strides = array<i32: 2, 1>} : memref<98x128xf32, #tpu.memory_space<vmem>>, vector<1x128xf32>
    %c5_368 = arith.constant 5 : index
    %c0_369 = arith.constant 0 : index
    %c0_370 = arith.constant 0 : index
    %c0_371 = arith.constant 0 : index
    %726 = vector.load %arg2[%c5_368, %c0_369, %c0_370, %c0_371] : memref<6x3x128x128xf32, #tpu.memory_space<vmem>>, vector<1x1x128x128xf32>
    %727 = vector.shape_cast %726 : vector<1x1x128x128xf32> to vector<128x128xf32>
    %cst_372 = arith.constant dense<0.000000e+00> : vector<1x128xf32>
    %728 = tpu.matmul %725, %727, %cst_372 {dimension_numbers = #tpu.dot_dimension_numbers<[1], [0], [0], [1], [0, 0, 1, 1], [], []>} : vector<1x128xf32>, vector<128x128xf32>, vector<1x128xf32> -> vector<1x128xf32>
    %729 = arith.addf %724, %728 : vector<1x128xf32>
    %c1_373 = arith.constant 1 : index
    %c0_374 = arith.constant 0 : index
    %730 = tpu.strided_load %arg5[%c1_373, %c0_374] {strides = array<i32: 2, 1>} : memref<98x128xf32, #tpu.memory_space<vmem>>, vector<1x128xf32>
    %c5_375 = arith.constant 5 : index
    %c1_376 = arith.constant 1 : index
    %c0_377 = arith.constant 0 : index
    %c0_378 = arith.constant 0 : index
    %731 = vector.load %arg2[%c5_375, %c1_376, %c0_377, %c0_378] : memref<6x3x128x128xf32, #tpu.memory_space<vmem>>, vector<1x1x128x128xf32>
    %732 = vector.shape_cast %731 : vector<1x1x128x128xf32> to vector<128x128xf32>
    %cst_379 = arith.constant dense<0.000000e+00> : vector<1x128xf32>
    %733 = tpu.matmul %730, %732, %cst_379 {dimension_numbers = #tpu.dot_dimension_numbers<[1], [0], [0], [1], [0, 0, 1, 1], [], []>} : vector<1x128xf32>, vector<128x128xf32>, vector<1x128xf32> -> vector<1x128xf32>
    %734 = arith.addf %729, %733 : vector<1x128xf32>
    %c2_380 = arith.constant 2 : index
    %c0_381 = arith.constant 0 : index
    %735 = tpu.strided_load %arg5[%c2_380, %c0_381] {strides = array<i32: 2, 1>} : memref<98x128xf32, #tpu.memory_space<vmem>>, vector<1x128xf32>
    %c5_382 = arith.constant 5 : index
    %c2_383 = arith.constant 2 : index
    %c0_384 = arith.constant 0 : index
    %c0_385 = arith.constant 0 : index
    %736 = vector.load %arg2[%c5_382, %c2_383, %c0_384, %c0_385] : memref<6x3x128x128xf32, #tpu.memory_space<vmem>>, vector<1x1x128x128xf32>
    %737 = vector.shape_cast %736 : vector<1x1x128x128xf32> to vector<128x128xf32>
    %cst_386 = arith.constant dense<0.000000e+00> : vector<1x128xf32>
    %738 = tpu.matmul %735, %737, %cst_386 {dimension_numbers = #tpu.dot_dimension_numbers<[1], [0], [0], [1], [0, 0, 1, 1], [], []>} : vector<1x128xf32>, vector<128x128xf32>, vector<1x128xf32> -> vector<1x128xf32>
    %739 = arith.addf %734, %738 : vector<1x128xf32>
    %c5_387 = arith.constant 5 : index
    %c0_388 = arith.constant 0 : index
    %c0_389 = arith.constant 0 : index
    %740 = vector.load %arg3[%c5_387, %c0_388, %c0_389] : memref<6x3x128xf32, #tpu.memory_space<vmem>>, vector<1x1x128xf32>
    %741 = vector.shape_cast %740 : vector<1x1x128xf32> to vector<1x128xf32>
    %742 = arith.addf %739, %741 : vector<1x128xf32>
    %cst_390 = arith.constant dense<0.000000e+00> : vector<128xf32>
    %743 = vector.multi_reduction <add>, %742, %cst_390 [0] : vector<1x128xf32> to vector<128xf32>
    %744 = vector.shape_cast %743 : vector<128xf32> to vector<1x128xf32>
    %745 = vector.extract_strided_slice %744 {offsets = [0, 1], sizes = [1, 127], strides = [1, 1]} : vector<1x128xf32> to vector<1x127xf32>
    %746 = vector.extract_strided_slice %744 {offsets = [0, 0], sizes = [1, 1], strides = [1, 1]} : vector<1x128xf32> to vector<1x1xf32>
    %747 = tpu.concatenate %745, %746 in 1 : vector<1x127xf32>, vector<1x1xf32> -> vector<1x128xf32>
    %748 = vector.extract_strided_slice %744 {offsets = [0, 127], sizes = [1, 1], strides = [1, 1]} : vector<1x128xf32> to vector<1x1xf32>
    %749 = vector.extract_strided_slice %744 {offsets = [0, 0], sizes = [1, 127], strides = [1, 1]} : vector<1x128xf32> to vector<1x127xf32>
    %750 = tpu.concatenate %748, %749 in 1 : vector<1x1xf32>, vector<1x127xf32> -> vector<1x128xf32>
    %751 = tpu.iota {dimensions = array<i32: 1>} : vector<1x128xi32>
    %c2_i32_391 = arith.constant 2 : i32
    %c0_i32_392 = arith.constant 0 : i32
    %752 = arith.cmpi eq, %c2_i32_391, %c0_i32_392 : i32
    %c1_i32_393 = arith.constant 1 : i32
    %753 = arith.select %752, %c1_i32_393, %c2_i32_391 : i32
    %754 = vector.broadcast %753 : i32 to vector<1x128xi32>
    %755 = arith.remsi %751, %754 : vector<1x128xi32>
    %c0_i32_394 = arith.constant 0 : i32
    %756 = vector.broadcast %c0_i32_394 : i32 to vector<1x128xi32>
    %757 = arith.cmpi ne, %755, %756 : vector<1x128xi32>
    %c0_i32_395 = arith.constant 0 : i32
    %758 = vector.broadcast %c0_i32_395 : i32 to vector<1x128xi32>
    %759 = arith.cmpi slt, %755, %758 : vector<1x128xi32>
    %c0_i32_396 = arith.constant 0 : i32
    %760 = arith.cmpi slt, %753, %c0_i32_396 : i32
    %761 = vector.broadcast %760 : i1 to vector<1x128xi1>
    %762 = vector.broadcast %761 : vector<1x128xi1> to vector<1x128xi1>
    %763 = arith.xori %759, %762 : vector<1x128xi1>
    %764 = arith.andi %763, %757 : vector<1x128xi1>
    %765 = vector.broadcast %753 : i32 to vector<1x128xi32>
    %766 = arith.addi %755, %765 : vector<1x128xi32>
    %767 = arith.select %764, %766, %755 : vector<1x128xi1>, vector<1x128xi32>
    %c0_i32_397 = arith.constant 0 : i32
    %768 = vector.broadcast %c0_i32_397 : i32 to vector<1x128xi32>
    %769 = arith.cmpi eq, %767, %768 : vector<1x128xi32>
    %770 = arith.select %769, %747, %750 : vector<1x128xi1>, vector<1x128xf32>
    %771 = arith.addf %744, %770 : vector<1x128xf32>
    %cst_398 = arith.constant 5.000000e-01 : f32
    %772 = vector.broadcast %cst_398 : f32 to vector<1x128xf32>
    %773 = arith.mulf %771, %772 : vector<1x128xf32>
    %774 = arith.subf %742, %773 : vector<1x128xf32>
    %775 = arith.mulf %774, %774 : vector<1x128xf32>
    %cst_399 = arith.constant dense<0.000000e+00> : vector<128xf32>
    %776 = vector.multi_reduction <add>, %775, %cst_399 [0] : vector<1x128xf32> to vector<128xf32>
    %777 = vector.shape_cast %776 : vector<128xf32> to vector<1x128xf32>
    %778 = vector.extract_strided_slice %777 {offsets = [0, 1], sizes = [1, 127], strides = [1, 1]} : vector<1x128xf32> to vector<1x127xf32>
    %779 = vector.extract_strided_slice %777 {offsets = [0, 0], sizes = [1, 1], strides = [1, 1]} : vector<1x128xf32> to vector<1x1xf32>
    %780 = tpu.concatenate %778, %779 in 1 : vector<1x127xf32>, vector<1x1xf32> -> vector<1x128xf32>
    %781 = vector.extract_strided_slice %777 {offsets = [0, 127], sizes = [1, 1], strides = [1, 1]} : vector<1x128xf32> to vector<1x1xf32>
    %782 = vector.extract_strided_slice %777 {offsets = [0, 0], sizes = [1, 127], strides = [1, 1]} : vector<1x128xf32> to vector<1x127xf32>
    %783 = tpu.concatenate %781, %782 in 1 : vector<1x1xf32>, vector<1x127xf32> -> vector<1x128xf32>
    %784 = tpu.iota {dimensions = array<i32: 1>} : vector<1x128xi32>
    %c2_i32_400 = arith.constant 2 : i32
    %c0_i32_401 = arith.constant 0 : i32
    %785 = arith.cmpi eq, %c2_i32_400, %c0_i32_401 : i32
    %c1_i32_402 = arith.constant 1 : i32
    %786 = arith.select %785, %c1_i32_402, %c2_i32_400 : i32
    %787 = vector.broadcast %786 : i32 to vector<1x128xi32>
    %788 = arith.remsi %784, %787 : vector<1x128xi32>
    %c0_i32_403 = arith.constant 0 : i32
    %789 = vector.broadcast %c0_i32_403 : i32 to vector<1x128xi32>
    %790 = arith.cmpi ne, %788, %789 : vector<1x128xi32>
    %c0_i32_404 = arith.constant 0 : i32
    %791 = vector.broadcast %c0_i32_404 : i32 to vector<1x128xi32>
    %792 = arith.cmpi slt, %788, %791 : vector<1x128xi32>
    %c0_i32_405 = arith.constant 0 : i32
    %793 = arith.cmpi slt, %786, %c0_i32_405 : i32
    %794 = vector.broadcast %793 : i1 to vector<1x128xi1>
    %795 = vector.broadcast %794 : vector<1x128xi1> to vector<1x128xi1>
    %796 = arith.xori %792, %795 : vector<1x128xi1>
    %797 = arith.andi %796, %790 : vector<1x128xi1>
    %798 = vector.broadcast %786 : i32 to vector<1x128xi32>
    %799 = arith.addi %788, %798 : vector<1x128xi32>
    %800 = arith.select %797, %799, %788 : vector<1x128xi1>, vector<1x128xi32>
    %c0_i32_406 = arith.constant 0 : i32
    %801 = vector.broadcast %c0_i32_406 : i32 to vector<1x128xi32>
    %802 = arith.cmpi eq, %800, %801 : vector<1x128xi32>
    %803 = arith.select %802, %780, %783 : vector<1x128xi1>, vector<1x128xf32>
    %804 = arith.addf %777, %803 : vector<1x128xf32>
    %cst_407 = arith.constant 5.000000e-01 : f32
    %805 = vector.broadcast %cst_407 : f32 to vector<1x128xf32>
    %806 = arith.mulf %804, %805 : vector<1x128xf32>
    %cst_408 = arith.constant 9.99999974E-6 : f32
    %807 = vector.broadcast %cst_408 : f32 to vector<1x128xf32>
    %808 = arith.addf %806, %807 : vector<1x128xf32>
    %809 = math.rsqrt %808 : vector<1x128xf32>
    %810 = arith.mulf %774, %809 : vector<1x128xf32>
    %c5_409 = arith.constant 5 : index
    %c1_410 = arith.constant 1 : index
    %c0_411 = arith.constant 0 : index
    %811 = vector.load %arg3[%c5_409, %c1_410, %c0_411] : memref<6x3x128xf32, #tpu.memory_space<vmem>>, vector<1x1x128xf32>
    %812 = vector.shape_cast %811 : vector<1x1x128xf32> to vector<1x128xf32>
    %813 = arith.mulf %810, %812 : vector<1x128xf32>
    %c5_412 = arith.constant 5 : index
    %c2_413 = arith.constant 2 : index
    %c0_414 = arith.constant 0 : index
    %814 = vector.load %arg3[%c5_412, %c2_413, %c0_414] : memref<6x3x128xf32, #tpu.memory_space<vmem>>, vector<1x1x128xf32>
    %815 = vector.shape_cast %814 : vector<1x1x128xf32> to vector<1x128xf32>
    %816 = arith.addf %813, %815 : vector<1x128xf32>
    %cst_415 = arith.constant 5.000000e-01 : f32
    %817 = vector.broadcast %cst_415 : f32 to vector<1x128xf32>
    %818 = arith.mulf %817, %816 : vector<1x128xf32>
    %cst_416 = arith.constant 0.707106769 : f32
    %819 = vector.broadcast %cst_416 : f32 to vector<1x128xf32>
    %820 = arith.mulf %816, %819 : vector<1x128xf32>
    %cst_417 = arith.constant 0.000000e+00 : f32
    %821 = vector.broadcast %cst_417 : f32 to vector<1x128xf32>
    %822 = arith.cmpf oge, %820, %821 : vector<1x128xf32>
    %cst_418 = arith.constant 1.000000e+00 : f32
    %cst_419 = arith.constant -1.000000e+00 : f32
    %823 = vector.broadcast %cst_418 : f32 to vector<1x128xf32>
    %824 = vector.broadcast %cst_419 : f32 to vector<1x128xf32>
    %825 = arith.select %822, %823, %824 : vector<1x128xi1>, vector<1x128xf32>
    %826 = math.absf %820 : vector<1x128xf32>
    %cst_420 = arith.constant 0.327591091 : f32
    %827 = vector.broadcast %cst_420 : f32 to vector<1x128xf32>
    %828 = arith.mulf %827, %826 : vector<1x128xf32>
    %cst_421 = arith.constant 1.000000e+00 : f32
    %829 = vector.broadcast %cst_421 : f32 to vector<1x128xf32>
    %830 = arith.addf %829, %828 : vector<1x128xf32>
    %831 = tpu.reciprocal %830 {approx = true} : vector<1x128xf32> -> vector<1x128xf32>
    %cst_422 = arith.constant 1.06140542 : f32
    %832 = vector.broadcast %cst_422 : f32 to vector<1x128xf32>
    %833 = arith.mulf %832, %831 : vector<1x128xf32>
    %cst_423 = arith.constant -1.45315206 : f32
    %834 = vector.broadcast %cst_423 : f32 to vector<1x128xf32>
    %835 = arith.addf %833, %834 : vector<1x128xf32>
    %836 = arith.mulf %835, %831 : vector<1x128xf32>
    %cst_424 = arith.constant 1.42141378 : f32
    %837 = vector.broadcast %cst_424 : f32 to vector<1x128xf32>
    %838 = arith.addf %836, %837 : vector<1x128xf32>
    %839 = arith.mulf %838, %831 : vector<1x128xf32>
    %cst_425 = arith.constant -0.284496725 : f32
    %840 = vector.broadcast %cst_425 : f32 to vector<1x128xf32>
    %841 = arith.addf %839, %840 : vector<1x128xf32>
    %842 = arith.mulf %841, %831 : vector<1x128xf32>
    %cst_426 = arith.constant 0.254829586 : f32
    %843 = vector.broadcast %cst_426 : f32 to vector<1x128xf32>
    %844 = arith.addf %842, %843 : vector<1x128xf32>
    %845 = arith.mulf %844, %831 : vector<1x128xf32>
    %cst_427 = arith.constant 0.000000e+00 : f32
    %846 = vector.broadcast %cst_427 : f32 to vector<1x128xf32>
    %847 = arith.subf %846, %826 : vector<1x128xf32>
    %848 = arith.mulf %847, %826 : vector<1x128xf32>
    %849 = math.exp %848 : vector<1x128xf32>
    %850 = arith.mulf %845, %849 : vector<1x128xf32>
    %cst_428 = arith.constant 1.000000e+00 : f32
    %851 = vector.broadcast %cst_428 : f32 to vector<1x128xf32>
    %852 = arith.subf %851, %850 : vector<1x128xf32>
    %853 = arith.mulf %825, %852 : vector<1x128xf32>
    %cst_429 = arith.constant 1.000000e+00 : f32
    %854 = vector.broadcast %cst_429 : f32 to vector<1x128xf32>
    %855 = arith.addf %854, %853 : vector<1x128xf32>
    %856 = arith.mulf %818, %855 : vector<1x128xf32>
    %c0_430 = arith.constant 0 : index
    %c0_431 = arith.constant 0 : index
    %c0_432 = arith.constant 0 : index
    %857 = vector.load %arg4[%c0_430, %c0_431, %c0_432] : memref<1x1x128xf32, #tpu.memory_space<vmem>>, vector<1x1x128xf32>
    %858 = vector.shape_cast %857 : vector<1x1x128xf32> to vector<1x128xf32>
    %859 = vector.shape_cast %856 : vector<1x128xf32> to vector<1x1x128xf32>
    tpu.vector_store %arg4[%c0_430, %c0_431, %c0_432], %859 {strides = array<i32>} : memref<1x1x128xf32, #tpu.memory_space<vmem>>, vector<1x1x128xf32>,
    return
  }
  func.func @transform_0(%arg0: i32) -> (i32, i32, i32) {
    %c0_i32 = arith.constant 0 : i32
    %c0_i32_0 = arith.constant 0 : i32
    %c0_i32_1 = arith.constant 0 : i32
    return %arg0, %c0_i32, %c0_i32_0 : i32, i32, i32
  }
  func.func @transform_1(%arg0: i32) -> (i32, i32, i32, i32) {
    %c0_i32 = arith.constant 0 : i32
    %c0_i32_0 = arith.constant 0 : i32
    %c0_i32_1 = arith.constant 0 : i32
    %c0_i32_2 = arith.constant 0 : i32
    %c0_i32_3 = arith.constant 0 : i32
    return %c0_i32, %c0_i32_0, %c0_i32_1, %c0_i32_2 : i32, i32, i32, i32
  }
  func.func @transform_2(%arg0: i32) -> (i32, i32, i32) {
    %c0_i32 = arith.constant 0 : i32
    %c0_i32_0 = arith.constant 0 : i32
    %c0_i32_1 = arith.constant 0 : i32
    %c0_i32_2 = arith.constant 0 : i32
    return %c0_i32, %c0_i32_0, %c0_i32_1 : i32, i32, i32
  }
  func.func @transform_3(%arg0: i32) -> (i32, i32, i32) {
    %c0_i32 = arith.constant 0 : i32
    %c0_i32_0 = arith.constant 0 : i32
    %c0_i32_1 = arith.constant 0 : i32
    return %arg0, %c0_i32, %c0_i32_0 : i32, i32, i32
  }
}

</mosaic_0001>

<llo_original>
// kernel: conv_encoder_bendr_forward.1
$region0: #{conv_encoder_bendr_forward.1}
  #allocation0 [shape = 'u32[]', space=smem, size = 0x4, offset = 0x4, fixed_abs, tag = 'smem constant byte address 0x4 - core index']
  #allocation1 [shape = 'u32[144,128]{1,0:T(1,128)}', space=vmem, size = 0x12000, scoped, tag = 'internal scratch']
  #allocation2 [shape = 'f32[98,128]{1,0:T(8,128)}', space=vmem, size = 0xd000, scoped, tag = 'scratch operand']
  %s0 = inlined_call_operand.vmem [shape: f32[1,96,128], index: 0, kind: input, shape index: {}]
  %s1 = inlined_call_operand.hbm [shape: f32[6,3,128,128], index: 1, kind: input, shape index: {}]
  %s2 = inlined_call_operand.hbm [shape: f32[6,3,128], index: 2, kind: input, shape index: {}]
  %s3 = inlined_call_operand.vmem [shape: f32[1,1,128], index: 3, kind: output, shape index: {}]
  %s4 = sld [smem:[#allocation0]]
  $region30: #{conv_encoder_bendr_forward.1} parent=0
    _
  %s6 = ssub.s32 1, %s4
  %s7 = scalar_select 0, %s6, %s4
  $region1: #{conv_encoder_bendr_forward.1} parent=0
    #allocation3 [shape = 'u8[1179648]{0}', space=vmem, size = 0x120000, scoped, tag = 'input window, operand 1, single buffered']
    #allocation4 [shape = 's32[1]{0}', space=sflag, size = 0x4, scoped, tag = 'scoped memory for conv_encoder_bendr_forward.1']
    #allocation5 [shape = 'u8[12288]{0}', space=vmem, size = 0x3000, scoped, tag = 'input window, operand 2, single buffered']
    #allocation6 [shape = 's32[1]{0}', space=sflag, size = 0x4, scoped, tag = 'scoped memory for conv_encoder_bendr_forward.1']
    %8 = vsyncpa [#allocation4], 0
    %9 = vsyncpa [#allocation6], 0
    // Predicated region
    $region2: #{conv_encoder_bendr_forward.1} parent=1 // pred_check
      _
    $region3: #{conv_encoder_bendr_forward.1} parent=1 // pred_check_branch
      %11 = sbr.rel (0) target = $region5
    $region4: #{conv_encoder_bendr_forward.1} parent=1 // pred_region
      _
    $region5: #{conv_encoder_bendr_forward.1} parent=1 // pred_fallthru
      _
    // Predicated region
    $region6: #{conv_encoder_bendr_forward.1} parent=1 // pred_check
      _
    $region7: #{conv_encoder_bendr_forward.1} parent=1 // pred_check_branch
      %13 = sbr.rel (0) target = $region9
    $region8: #{conv_encoder_bendr_forward.1} parent=1 // pred_region
      %s15 = ssub.s32 36864, 36864
      %16 = vsyncadd [#allocation4], %s15
      %s17 = sshll.u32 [#allocation3], 4
      %s18 = int_to_ptr.vmem [resolvable:$true] %s17
      %23 = dma.hbm_to_vmem [thread:$0]  %s1, 36864, %s18, [#allocation4], 128, 128, 8
    $region9: #{conv_encoder_bendr_forward.1} parent=1 // pred_fallthru
      _
    // Predicated region
    $region10: #{conv_encoder_bendr_forward.1} parent=1 // pred_check
      _
    $region11: #{conv_encoder_bendr_forward.1} parent=1 // pred_check_branch
      %25 = sbr.rel (0) target = $region13
    $region12: #{conv_encoder_bendr_forward.1} parent=1 // pred_region
      %s27 = ssub.s32 384, 384
      %28 = vsyncadd [#allocation6], %s27
      %s29 = sshll.u32 [#allocation5], 4
      %s30 = int_to_ptr.vmem [resolvable:$true] %s29
      %35 = dma.hbm_to_vmem [thread:$0]  %s2, 384, %s30, [#allocation6], 64, 64, 4
    $region13: #{conv_encoder_bendr_forward.1} parent=1 // pred_fallthru
      _
    // Predicated region
    $region14: #{conv_encoder_bendr_forward.1} parent=1 // pred_check
      _
    $region15: #{conv_encoder_bendr_forward.1} parent=1 // pred_check_branch
      %37 = sbr.rel (0) target = $region17
    $region16: #{conv_encoder_bendr_forward.1} parent=1 // pred_region
      %38 = dma.done [#allocation4], 36864
    $region17: #{conv_encoder_bendr_forward.1} parent=1 // pred_fallthru
      _
    // Predicated region
    $region18: #{conv_encoder_bendr_forward.1} parent=1 // pred_check
      _
    $region19: #{conv_encoder_bendr_forward.1} parent=1 // pred_check_branch
      %40 = sbr.rel (0) target = $region21
    $region20: #{conv_encoder_bendr_forward.1} parent=1 // pred_region
      %41 = dma.done [#allocation6], 384
    $region21: #{conv_encoder_bendr_forward.1} parent=1 // pred_fallthru
      _
    %42 = vst [vmem:[#allocation2] sm:$0xff] 0.0
    %43 = vst [vmem:[#allocation2 + $0x8] sm:$0xff] 0.0
    %44 = vst [vmem:[#allocation2 + $0x10] sm:$0xff] 0.0
    %45 = vst [vmem:[#allocation2 + $0x18] sm:$0xff] 0.0
    %46 = vst [vmem:[#allocation2 + $0x20] sm:$0xff] 0.0
    %47 = vst [vmem:[#allocation2 + $0x28] sm:$0xff] 0.0
    %48 = vst [vmem:[#allocation2 + $0x30] sm:$0xff] 0.0
    %49 = vst [vmem:[#allocation2 + $0x38] sm:$0xff] 0.0
    %50 = vst [vmem:[#allocation2 + $0x40] sm:$0xff] 0.0
    %51 = vst [vmem:[#allocation2 + $0x48] sm:$0xff] 0.0
    %52 = vst [vmem:[#allocation2 + $0x50] sm:$0xff] 0.0
    %53 = vst [vmem:[#allocation2 + $0x58] sm:$0xff] 0.0
    %54 = vst [vmem:[#allocation2 + $0x60] sm:$0x3] 0.0
    %v55 = vld [vmem:[%s0] sm:$0xff]
    %v56 = vld [vmem:[%s0 + $0x8] sm:$0xff]
    %v57 = vld [vmem:[%s0 + $0x10] sm:$0xff]
    %v58 = vld [vmem:[%s0 + $0x18] sm:$0xff]
    %v59 = vld [vmem:[%s0 + $0x20] sm:$0xff]
    %v60 = vld [vmem:[%s0 + $0x28] sm:$0xff]
    %v61 = vld [vmem:[%s0 + $0x30] sm:$0xff]
    %v62 = vld [vmem:[%s0 + $0x38] sm:$0xff]
    %v63 = vld [vmem:[%s0 + $0x40] sm:$0xff]
    %v64 = vld [vmem:[%s0 + $0x48] sm:$0xff]
    %v65 = vld [vmem:[%s0 + $0x50] sm:$0xff]
    %v66 = vld [vmem:[%s0 + $0x58] sm:$0xff]
    %67 = vst [vmem:[#allocation2] sm:$0x1] 0.0
    %68 = vst [vmem:[#allocation2 + $0x61] sm:$0x1] 0.0
    %69 = vst [vmem:[#allocation2 + $0x1] sm:$0xff] %v55
    %70 = vst [vmem:[#allocation2 + $0x9] sm:$0xff] %v56
    %71 = vst [vmem:[#allocation2 + $0x11] sm:$0xff] %v57
    %72 = vst [vmem:[#allocation2 + $0x19] sm:$0xff] %v58
    %73 = vst [vmem:[#allocation2 + $0x21] sm:$0xff] %v59
    %74 = vst [vmem:[#allocation2 + $0x29] sm:$0xff] %v60
    %75 = vst [vmem:[#allocation2 + $0x31] sm:$0xff] %v61
    %76 = vst [vmem:[#allocation2 + $0x39] sm:$0xff] %v62
    %77 = vst [vmem:[#allocation2 + $0x41] sm:$0xff] %v63
    %78 = vst [vmem:[#allocation2 + $0x49] sm:$0xff] %v64
    %79 = vst [vmem:[#allocation2 + $0x51] sm:$0xff] %v65
    %80 = vst [vmem:[#allocation2 + $0x59] sm:$0xff] %v66
    %v81 = vld [vmem:[#allocation2] ss:$3 sm:$0xff]
    %s82 = scalar_lea.vmem [#allocation2], 24
    %v83 = vld [vmem:[%s82] ss:$3 sm:$0xff]
    %s84 = scalar_lea.vmem [#allocation2], 48
    %v85 = vld [vmem:[%s84] ss:$3 sm:$0xff]
    %s86 = scalar_lea.vmem [#allocation2], 72
    %v87 = vld [vmem:[%s86] ss:$3 sm:$0xff]
    %v88 = vld [vmem:[#allocation3] sm:$0xff]
    %v89 = vld [vmem:[#allocation3 + $0x8] sm:$0xff]
    %v90 = vld [vmem:[#allocation3 + $0x10] sm:$0xff]
    %v91 = vld [vmem:[#allocation3 + $0x18] sm:$0xff]
    %v92 = vld [vmem:[#allocation3 + $0x20] sm:$0xff]
    %v93 = vld [vmem:[#allocation3 + $0x28] sm:$0xff]
    %v94 = vld [vmem:[#allocation3 + $0x30] sm:$0xff]
    %v95 = vld [vmem:[#allocation3 + $0x38] sm:$0xff]
    %v96 = vld [vmem:[#allocation3 + $0x40] sm:$0xff]
    %v97 = vld [vmem:[#allocation3 + $0x48] sm:$0xff]
    %v98 = vld [vmem:[#allocation3 + $0x50] sm:$0xff]
    %v99 = vld [vmem:[#allocation3 + $0x58] sm:$0xff]
    %v100 = vld [vmem:[#allocation3 + $0x60] sm:$0xff]
    %v101 = vld [vmem:[#allocation3 + $0x68] sm:$0xff]
    %v102 = vld [vmem:[#allocation3 + $0x70] sm:$0xff]
    %v103 = vld [vmem:[#allocation3 + $0x78] sm:$0xff]
    %s104 = scalar_lea.vmem [#allocation2], 1
    %v105 = vld [vmem:[%s104] ss:$3 sm:$0xff]
    %s106 = scalar_lea.vmem [#allocation2], 25
    %v107 = vld [vmem:[%s106] ss:$3 sm:$0xff]
    %s108 = scalar_lea.vmem [#allocation2], 49
    %v109 = vld [vmem:[%s108] ss:$3 sm:$0xff]
    %s110 = scalar_lea.vmem [#allocation2], 73
    %v111 = vld [vmem:[%s110] ss:$3 sm:$0xff]
    %s112 = scalar_lea.vmem [#allocation3], 128
    %v113 = vld [vmem:[%s112] sm:$0xff]
    %v114 = vld [vmem:[%s112 + $0x8] sm:$0xff]
    %v115 = vld [vmem:[%s112 + $0x10] sm:$0xff]
    %v116 = vld [vmem:[%s112 + $0x18] sm:$0xff]
    %v117 = vld [vmem:[%s112 + $0x20] sm:$0xff]
    %v118 = vld [vmem:[%s112 + $0x28] sm:$0xff]
    %v119 = vld [vmem:[%s112 + $0x30] sm:$0xff]
    %v120 = vld [vmem:[%s112 + $0x38] sm:$0xff]
    %v121 = vld [vmem:[%s112 + $0x40] sm:$0xff]
    %v122 = vld [vmem:[%s112 + $0x48] sm:$0xff]
    %v123 = vld [vmem:[%s112 + $0x50] sm:$0xff]
    %v124 = vld [vmem:[%s112 + $0x58] sm:$0xff]
    %v125 = vld [vmem:[%s112 + $0x60] sm:$0xff]
    %v126 = vld [vmem:[%s112 + $0x68] sm:$0xff]
    %v127 = vld [vmem:[%s112 + $0x70] sm:$0xff]
    %v128 = vld [vmem:[%s112 + $0x78] sm:$0xff]
    %129 = vmatprep.subr.mxu0 0.0
    %130 = vmatpush1.msra.mxu0 %v128
    %131 = vmatprep.subr.mxu0 0.0
    %132 = vmatpush1.msra.mxu0 %v127
    %133 = vmatprep.subr.mxu0 0.0
    %134 = vmatpush1.msra.mxu0 %v126
    %135 = vmatprep.subr.mxu0 0.0
    %136 = vmatpush1.msra.mxu0 %v125
    %137 = vmatprep.subr.mxu0 0.0
    %138 = vmatpush1.msra.mxu0 %v124
    %139 = vmatprep.subr.mxu0 0.0
    %140 = vmatpush1.msra.mxu0 %v123
    %141 = vmatprep.subr.mxu0 0.0
    %142 = vmatpush1.msra.mxu0 %v122
    %143 = vmatprep.subr.mxu0 0.0
    %144 = vmatpush1.msra.mxu0 %v121
    %145 = vmatprep.subr.mxu0 0.0
    %146 = vmatpush1.msra.mxu0 %v120
    %147 = vmatprep.subr.mxu0 0.0
    %148 = vmatpush1.msra.mxu0 %v119
    %149 = vmatprep.subr.mxu0 0.0
    %150 = vmatpush1.msra.mxu0 %v118
    %151 = vmatprep.subr.mxu0 0.0
    %152 = vmatpush1.msra.mxu0 %v117
    %153 = vmatprep.subr.mxu0 0.0
    %154 = vmatpush1.msra.mxu0 %v116
    %155 = vmatprep.subr.mxu0 0.0
    %156 = vmatpush1.msra.mxu0 %v115
    %157 = vmatprep.subr.mxu0 0.0
    %158 = vmatpush1.msra.mxu0 %v114
    %159 = vmatprep.subr.mxu0 0.0
    %160 = vmatpush1.msra.mxu0 %v113
    %161 = vmatprep.subr.mxu0 0.0
    %162 = vmatpush2.msra.mxu0 0.0
    %163 = vmatprep.subr.mxu0 0.0
    %164 = vmatpush2.msra.mxu0 0.0
    %165 = vmatprep.subr.mxu0 0.0
    %166 = vmatpush2.msra.mxu0 0.0
    %167 = vmatprep.subr.mxu0 0.0
    %168 = vmatpush2.msra.mxu0 0.0
    %169 = vmatprep.subr.mxu0 0.0
    %170 = vmatpush2.msra.mxu0 0.0
    %171 = vmatprep.subr.mxu0 0.0
    %172 = vmatpush2.msra.mxu0 0.0
    %173 = vmatprep.subr.mxu0 0.0
    %174 = vmatpush2.msra.mxu0 0.0
    %175 = vmatprep.subr.mxu0 0.0
    %176 = vmatpush2.msra.mxu0 0.0
    %177 = vmatprep.subr.mxu0 0.0
    %178 = vmatpush2.msra.mxu0 0.0
    %179 = vmatprep.subr.mxu0 0.0
    %180 = vmatpush2.msra.mxu0 0.0
    %181 = vmatprep.subr.mxu0 0.0
    %182 = vmatpush2.msra.mxu0 0.0
    %183 = vmatprep.subr.mxu0 0.0
    %184 = vmatpush2.msra.mxu0 0.0
    %185 = vmatprep.subr.mxu0 0.0
    %186 = vmatpush2.msra.mxu0 0.0
    %187 = vmatprep.subr.mxu0 0.0
    %188 = vmatpush2.msra.mxu0 0.0
    %189 = vmatprep.subr.mxu0 0.0
    %190 = vmatpush2.msra.mxu0 0.0
    %191 = vmatprep.subr.mxu0 0.0
    %192 = vmatpush2.msra.mxu0 0.0
    %193 = vmatprep.mubr.f32.mxu0 0.0
    %194 = vmatmul.mubr.f32.gmra.mxu0 %v105
    %v195 = vpop.f32.mrf.mxu0
    %v196 = vadd.f32 0.0, %v195
    %v197 = vpop.f32.mrf.mxu0
    %198 = vmatprep.mubr.f32.mxu0 0.0
    %199 = vmatmul.mubr.f32.gmra.mxu0 %v107
    %v200 = vpop.f32.mrf.mxu0
    %v201 = vadd.f32 0.0, %v200
    %v202 = vpop.f32.mrf.mxu0
    %203 = vmatprep.mubr.f32.mxu0 0.0
    %204 = vmatmul.mubr.f32.gmra.mxu0 %v109
    %v205 = vpop.f32.mrf.mxu0
    %v206 = vadd.f32 0.0, %v205
    %v207 = vpop.f32.mrf.mxu0
    %208 = vmatprep.mubr.f32.mxu0 0.0
    %209 = vmatmul.mubr.f32.gmra.mxu0 %v111
    %v210 = vpop.f32.mrf.mxu0
    %v211 = vadd.f32 0.0, %v210
    %v212 = vpop.f32.mrf.mxu0
    %213 = vdwg.mxu0
    %214 = vmatprep.subr.mxu0 0.0
    %215 = vmatpush1.msra.mxu0 %v103
    %216 = vmatprep.subr.mxu0 0.0
    %217 = vmatpush1.msra.mxu0 %v102
    %218 = vmatprep.subr.mxu0 0.0
    %219 = vmatpush1.msra.mxu0 %v101
    %220 = vmatprep.subr.mxu0 0.0
    %221 = vmatpush1.msra.mxu0 %v100
    %222 = vmatprep.subr.mxu0 0.0
    %223 = vmatpush1.msra.mxu0 %v99
    %224 = vmatprep.subr.mxu0 0.0
    %225 = vmatpush1.msra.mxu0 %v98
    %226 = vmatprep.subr.mxu0 0.0
    %227 = vmatpush1.msra.mxu0 %v97
    %228 = vmatprep.subr.mxu0 0.0
    %229 = vmatpush1.msra.mxu0 %v96
    %230 = vmatprep.subr.mxu0 0.0
    %231 = vmatpush1.msra.mxu0 %v95
    %232 = vmatprep.subr.mxu0 0.0
    %233 = vmatpush1.msra.mxu0 %v94
    %234 = vmatprep.subr.mxu0 0.0
    %235 = vmatpush1.msra.mxu0 %v93
    %236 = vmatprep.subr.mxu0 0.0
    %237 = vmatpush1.msra.mxu0 %v92
    %238 = vmatprep.subr.mxu0 0.0
    %239 = vmatpush1.msra.mxu0 %v91
    %240 = vmatprep.subr.mxu0 0.0
    %241 = vmatpush1.msra.mxu0 %v90
    %242 = vmatprep.subr.mxu0 0.0
    %243 = vmatpush1.msra.mxu0 %v89
    %244 = vmatprep.subr.mxu0 0.0
    %245 = vmatpush1.msra.mxu0 %v88
    %246 = vmatprep.subr.mxu0 0.0
    %247 = vmatpush2.msra.mxu0 0.0
    %248 = vmatprep.subr.mxu0 0.0
    %249 = vmatpush2.msra.mxu0 0.0
    %250 = vmatprep.subr.mxu0 0.0
    %251 = vmatpush2.msra.mxu0 0.0
    %252 = vmatprep.subr.mxu0 0.0
    %253 = vmatpush2.msra.mxu0 0.0
    %254 = vmatprep.subr.mxu0 0.0
    %255 = vmatpush2.msra.mxu0 0.0
    %256 = vmatprep.subr.mxu0 0.0
    %257 = vmatpush2.msra.mxu0 0.0
    %258 = vmatprep.subr.mxu0 0.0
    %259 = vmatpush2.msra.mxu0 0.0
    %260 = vmatprep.subr.mxu0 0.0
    %261 = vmatpush2.msra.mxu0 0.0
    %262 = vmatprep.subr.mxu0 0.0
    %263 = vmatpush2.msra.mxu0 0.0
    %264 = vmatprep.subr.mxu0 0.0
    %265 = vmatpush2.msra.mxu0 0.0
    %266 = vmatprep.subr.mxu0 0.0
    %267 = vmatpush2.msra.mxu0 0.0
    %268 = vmatprep.subr.mxu0 0.0
    %269 = vmatpush2.msra.mxu0 0.0
    %270 = vmatprep.subr.mxu0 0.0
    %271 = vmatpush2.msra.mxu0 0.0
    %272 = vmatprep.subr.mxu0 0.0
    %273 = vmatpush2.msra.mxu0 0.0
    %274 = vmatprep.subr.mxu0 0.0
    %275 = vmatpush2.msra.mxu0 0.0
    %276 = vmatprep.subr.mxu0 0.0
    %277 = vmatpush2.msra.mxu0 0.0
    %278 = vmatprep.mubr.f32.mxu0 0.0
    %279 = vmatmul.mubr.f32.gmra.mxu0 %v81
    %v280 = vpop.f32.mrf.mxu0
    %v281 = vadd.f32 %v196, %v280
    %v282 = vpop.f32.mrf.mxu0
    %283 = vmatprep.mubr.f32.mxu0 0.0
    %284 = vmatmul.mubr.f32.gmra.mxu0 %v83
    %v285 = vpop.f32.mrf.mxu0
    %v286 = vadd.f32 %v201, %v285
    %v287 = vpop.f32.mrf.mxu0
    %288 = vmatprep.mubr.f32.mxu0 0.0
    %289 = vmatmul.mubr.f32.gmra.mxu0 %v85
    %v290 = vpop.f32.mrf.mxu0
    %v291 = vadd.f32 %v206, %v290
    %v292 = vpop.f32.mrf.mxu0
    %293 = vmatprep.mubr.f32.mxu0 0.0
    %294 = vmatmul.mubr.f32.gmra.mxu0 %v87
    %v295 = vpop.f32.mrf.mxu0
    %v296 = vadd.f32 %v211, %v295
    %v297 = vpop.f32.mrf.mxu0
    %298 = vdwg.mxu0
    %s299 = scalar_lea.vmem [#allocation2], 2
    %v300 = vld [vmem:[%s299] ss:$3 sm:$0xff]
    %s301 = scalar_lea.vmem [#allocation2], 26
    %v302 = vld [vmem:[%s301] ss:$3 sm:$0xff]
    %s303 = scalar_lea.vmem [#allocation2], 50
    %v304 = vld [vmem:[%s303] ss:$3 sm:$0xff]
    %s305 = scalar_lea.vmem [#allocation2], 74
    %v306 = vld [vmem:[%s305] ss:$3 sm:$0xff]
    %s307 = scalar_lea.vmem [#allocation3], 256
    %v308 = vld [vmem:[%s307] sm:$0xff]
    %v309 = vld [vmem:[%s307 + $0x8] sm:$0xff]
    %v310 = vld [vmem:[%s307 + $0x10] sm:$0xff]
    %v311 = vld [vmem:[%s307 + $0x18] sm:$0xff]
    %v312 = vld [vmem:[%s307 + $0x20] sm:$0xff]
    %v313 = vld [vmem:[%s307 + $0x28] sm:$0xff]
    %v314 = vld [vmem:[%s307 + $0x30] sm:$0xff]
    %v315 = vld [vmem:[%s307 + $0x38] sm:$0xff]
    %v316 = vld [vmem:[%s307 + $0x40] sm:$0xff]
    %v317 = vld [vmem:[%s307 + $0x48] sm:$0xff]
    %v318 = vld [vmem:[%s307 + $0x50] sm:$0xff]
    %v319 = vld [vmem:[%s307 + $0x58] sm:$0xff]
    %v320 = vld [vmem:[%s307 + $0x60] sm:$0xff]
    %v321 = vld [vmem:[%s307 + $0x68] sm:$0xff]
    %v322 = vld [vmem:[%s307 + $0x70] sm:$0xff]
    %v323 = vld [vmem:[%s307 + $0x78] sm:$0xff]
    %324 = vmatprep.subr.mxu0 0.0
    %325 = vmatpush1.msra.mxu0 %v323
    %326 = vmatprep.subr.mxu0 0.0
    %327 = vmatpush1.msra.mxu0 %v322
    %328 = vmatprep.subr.mxu0 0.0
    %329 = vmatpush1.msra.mxu0 %v321
    %330 = vmatprep.subr.mxu0 0.0
    %331 = vmatpush1.msra.mxu0 %v320
    %332 = vmatprep.subr.mxu0 0.0
    %333 = vmatpush1.msra.mxu0 %v319
    %334 = vmatprep.subr.mxu0 0.0
    %335 = vmatpush1.msra.mxu0 %v318
    %336 = vmatprep.subr.mxu0 0.0
    %337 = vmatpush1.msra.mxu0 %v317
    %338 = vmatprep.subr.mxu0 0.0
    %339 = vmatpush1.msra.mxu0 %v316
    %340 = vmatprep.subr.mxu0 0.0
    %341 = vmatpush1.msra.mxu0 %v315
    %342 = vmatprep.subr.mxu0 0.0
    %343 = vmatpush1.msra.mxu0 %v314
    %344 = vmatprep.subr.mxu0 0.0
    %345 = vmatpush1.msra.mxu0 %v313
    %346 = vmatprep.subr.mxu0 0.0
    %347 = vmatpush1.msra.mxu0 %v312
    %348 = vmatprep.subr.mxu0 0.0
    %349 = vmatpush1.msra.mxu0 %v311
    %350 = vmatprep.subr.mxu0 0.0
    %351 = vmatpush1.msra.mxu0 %v310
    %352 = vmatprep.subr.mxu0 0.0
    %353 = vmatpush1.msra.mxu0 %v309
    %354 = vmatprep.subr.mxu0 0.0
    %355 = vmatpush1.msra.mxu0 %v308
    %356 = vmatprep.subr.mxu0 0.0
    %357 = vmatpush2.msra.mxu0 0.0
    %358 = vmatprep.subr.mxu0 0.0
    %359 = vmatpush2.msra.mxu0 0.0
    %360 = vmatprep.subr.mxu0 0.0
    %361 = vmatpush2.msra.mxu0 0.0
    %362 = vmatprep.subr.mxu0 0.0
    %363 = vmatpush2.msra.mxu0 0.0
    %364 = vmatprep.subr.mxu0 0.0
    %365 = vmatpush2.msra.mxu0 0.0
    %366 = vmatprep.subr.mxu0 0.0
    %367 = vmatpush2.msra.mxu0 0.0
    %368 = vmatprep.subr.mxu0 0.0
    %369 = vmatpush2.msra.mxu0 0.0
    %370 = vmatprep.subr.mxu0 0.0
    %371 = vmatpush2.msra.mxu0 0.0
    %372 = vmatprep.subr.mxu0 0.0
    %373 = vmatpush2.msra.mxu0 0.0
    %374 = vmatprep.subr.mxu0 0.0
    %375 = vmatpush2.msra.mxu0 0.0
    %376 = vmatprep.subr.mxu0 0.0
    %377 = vmatpush2.msra.mxu0 0.0
    %378 = vmatprep.subr.mxu0 0.0
    %379 = vmatpush2.msra.mxu0 0.0
    %380 = vmatprep.subr.mxu0 0.0
    %381 = vmatpush2.msra.mxu0 0.0
    %382 = vmatprep.subr.mxu0 0.0
    %383 = vmatpush2.msra.mxu0 0.0
    %384 = vmatprep.subr.mxu0 0.0
    %385 = vmatpush2.msra.mxu0 0.0
    %386 = vmatprep.subr.mxu0 0.0
    %387 = vmatpush2.msra.mxu0 0.0
    %388 = vmatprep.mubr.f32.mxu0 0.0
    %389 = vmatmul.mubr.f32.gmra.mxu0 %v300
    %v390 = vpop.f32.mrf.mxu0
    %v391 = vadd.f32 0.0, %v390
    %v392 = vpop.f32.mrf.mxu0
    %393 = vmatprep.mubr.f32.mxu0 0.0
    %394 = vmatmul.mubr.f32.gmra.mxu0 %v302
    %v395 = vpop.f32.mrf.mxu0
    %v396 = vadd.f32 0.0, %v395
    %v397 = vpop.f32.mrf.mxu0
    %398 = vmatprep.mubr.f32.mxu0 0.0
    %399 = vmatmul.mubr.f32.gmra.mxu0 %v304
    %v400 = vpop.f32.mrf.mxu0
    %v401 = vadd.f32 0.0, %v400
    %v402 = vpop.f32.mrf.mxu0
    %403 = vmatprep.mubr.f32.mxu0 0.0
    %404 = vmatmul.mubr.f32.gmra.mxu0 %v306
    %v405 = vpop.f32.mrf.mxu0
    %v406 = vadd.f32 0.0, %v405
    %v407 = vpop.f32.mrf.mxu0
    %408 = vdwg.mxu0
    %v409 = vadd.f32 %v281, %v391
    %v410 = vadd.f32 %v286, %v396
    %v411 = vadd.f32 %v291, %v401
    %v412 = vadd.f32 %v296, %v406
    %v413 = vld [vmem:[#allocation5] sm:$0x1]
    %v414 = vlaneseq
    %v415 = vshrl.u32 %v414, 7
    %v416 = vsub.s32 0, %v415
    %v417 = vrot.slane %v413, %v416
    %v418 = vadd.f32 %v409, %v417
    %v419 = vadd.f32 %v410, %v417
    %v420 = vadd.f32 %v411, %v417
    %v421 = vadd.f32 %v412, %v417
    %v422 = vadd.f32 %v418, %v419
    %v423 = vadd.f32 %v422, %v420
    %v424 = vadd.f32 %v423, %v421
    %v425 = vrot.slane %v424, 4
    %v426 = vadd.f32 %v424, %v425
    %v427 = vrot.slane %v426, 2
    %v428 = vadd.f32 %v426, %v427
    %v429 = vrot.slane %v428, 1
    %v430 = vadd.f32 %v428, %v429
    %432 = vrot.lane.b32.xlu0 %v430, 127
    %v433 = vpop.permute.xlu0 %432
    %435 = vrot.lane.b32.xlu0 %v430, 1
    %v436 = vpop.permute.xlu0 %435
    %v438 = vlaneseq
    %v439 = vand.u32 %v438, 127
    %vm440 = vcmp.lt.s32.totalorder %v439, 0
    %v441 = vsub.s32 0, %v439
    %v442 = vsel %vm440, %v441, %v439
    %v443 = vshrl.u32 %v442, 1
    %v444 = vand.u32 %v442, 1
    %v445 = vsub.s32 0, %v444
    %v446 = vsel %vm440, %v445, %v444
    %vm447 = vcmp.ne.s32.totalorder %v446, 0
    %vm448 = vcmp.lt.s32.totalorder %v446, 0
    %vm449 = vmand %vm448, %vm447
    %v450 = vadd.s32 %v446, 2
    %v451 = vsel %vm449, %v450, %v446
    %vm452 = vcmp.eq.s32.totalorder %v451, 0
    %v453 = vsel %vm452, %v433, %v436
    %v454 = vadd.f32 %v430, %v453
    %v455 = vmul.f32 %v454, 0.015625
    %v456 = vlaneseq
    %v457 = vshrl.u32 %v456, 7
    %v458 = vsub.s32 0, %v457
    %v459 = vrot.slane %v455, %v458
    %v460 = vsub.f32 %v418, %v459
    %v461 = vsub.f32 %v419, %v459
    %v462 = vsub.f32 %v420, %v459
    %v463 = vsub.f32 %v421, %v459
    %v464 = vmul.f32 %v460, %v460
    %v465 = vmul.f32 %v461, %v461
    %v466 = vmul.f32 %v462, %v462
    %v467 = vmul.f32 %v463, %v463
    %v468 = vadd.f32 %v464, %v465
    %v469 = vadd.f32 %v468, %v466
    %v470 = vadd.f32 %v469, %v467
    %v471 = vrot.slane %v470, 4
    %v472 = vadd.f32 %v470, %v471
    %v473 = vrot.slane %v472, 2
    %v474 = vadd.f32 %v472, %v473
    %v475 = vrot.slane %v474, 1
    %v476 = vadd.f32 %v474, %v475
    %478 = vrot.lane.b32.xlu0 %v476, 127
    %v479 = vpop.permute.xlu0 %478
    %481 = vrot.lane.b32.xlu0 %v476, 1
    %v482 = vpop.permute.xlu0 %481
    %v484 = vsel %vm452, %v479, %v482
    %v485 = vadd.f32 %v476, %v484
    %v486 = vmul.f32 %v485, 0.015625
    %v487 = vadd.f32 %v486, 1e-05
    %v488 = vrsqrt.pop %v487
    %v489 = vlaneseq
    %v490 = vshrl.u32 %v489, 7
    %v491 = vsub.s32 0, %v490
    %v492 = vrot.slane %v488, %v491
    %v493 = vmul.f32 %v460, %v492
    %v494 = vmul.f32 %v461, %v492
    %v495 = vmul.f32 %v462, %v492
    %v496 = vmul.f32 %v463, %v492
    %v497 = vld [vmem:[#allocation5 + $0x1] sm:$0x1]
    %v498 = vlaneseq
    %v499 = vshrl.u32 %v498, 7
    %v500 = vsub.s32 0, %v499
    %v501 = vrot.slane %v497, %v500
    %v502 = vmul.f32 %v493, %v501
    %v503 = vmul.f32 %v494, %v501
    %v504 = vmul.f32 %v495, %v501
    %v505 = vmul.f32 %v496, %v501
    %v506 = vld [vmem:[#allocation5 + $0x2] sm:$0x1]
    %v507 = vlaneseq
    %v508 = vshrl.u32 %v507, 7
    %v509 = vsub.s32 0, %v508
    %v510 = vrot.slane %v506, %v509
    %v511 = vadd.f32 %v502, %v510
    %v512 = vadd.f32 %v503, %v510
    %v513 = vadd.f32 %v504, %v510
    %v514 = vadd.f32 %v505, %v510
    %v515 = vmul.f32 %v511, 0.5
    %v516 = vmul.f32 %v512, 0.5
    %v517 = vmul.f32 %v513, 0.5
    %v518 = vmul.f32 %v514, 0.5
    %v519 = vmul.f32 %v511, 0.70710677
    %v520 = vmul.f32 %v512, 0.70710677
    %v521 = vmul.f32 %v513, 0.70710677
    %v522 = vmul.f32 %v514, 0.70710677
    %vm523 = vcmp.ge.f32.partialorder %v519, 0.0
    %vm524 = vcmp.ge.f32.partialorder %v520, 0.0
    %vm525 = vcmp.ge.f32.partialorder %v521, 0.0
    %vm526 = vcmp.ge.f32.partialorder %v522, 0.0
    %v527 = vsel %vm523, 1.0, -1.0
    %v528 = vsel %vm524, 1.0, -1.0
    %v529 = vsel %vm525, 1.0, -1.0
    %v530 = vsel %vm526, 1.0, -1.0
    %v531 = vand.u32 2147483647, %v519
    %v532 = vand.u32 2147483647, %v520
    %v533 = vand.u32 2147483647, %v521
    %v534 = vand.u32 2147483647, %v522
    %v535 = vmul.f32 %v531, 0.3275911
    %v536 = vmul.f32 %v532, 0.3275911
    %v537 = vmul.f32 %v533, 0.3275911
    %v538 = vmul.f32 %v534, 0.3275911
    %v539 = vadd.f32 %v535, 1.0
    %v540 = vadd.f32 %v536, 1.0
    %v541 = vadd.f32 %v537, 1.0
    %v542 = vadd.f32 %v538, 1.0
    %v543 = vrcp.pop %v539
    %v544 = vrcp.pop %v540
    %v545 = vrcp.pop %v541
    %v546 = vrcp.pop %v542
    %v547 = vmul.f32 %v543, 1.0614054
    %v548 = vmul.f32 %v544, 1.0614054
    %v549 = vmul.f32 %v545, 1.0614054
    %v550 = vmul.f32 %v546, 1.0614054
    %v551 = vadd.f32 %v547, -1.4531521
    %v552 = vadd.f32 %v548, -1.4531521
    %v553 = vadd.f32 %v549, -1.4531521
    %v554 = vadd.f32 %v550, -1.4531521
    %v555 = vmul.f32 %v551, %v543
    %v556 = vmul.f32 %v552, %v544
    %v557 = vmul.f32 %v553, %v545
    %v558 = vmul.f32 %v554, %v546
    %v559 = vadd.f32 %v555, 1.4214138
    %v560 = vadd.f32 %v556, 1.4214138
    %v561 = vadd.f32 %v557, 1.4214138
    %v562 = vadd.f32 %v558, 1.4214138
    %v563 = vmul.f32 %v559, %v543
    %v564 = vmul.f32 %v560, %v544
    %v565 = vmul.f32 %v561, %v545
    %v566 = vmul.f32 %v562, %v546
    %v567 = vadd.f32 %v563, -0.28449672
    %v568 = vadd.f32 %v564, -0.28449672
    %v569 = vadd.f32 %v565, -0.28449672
    %v570 = vadd.f32 %v566, -0.28449672
    %v571 = vmul.f32 %v567, %v543
    %v572 = vmul.f32 %v568, %v544
    %v573 = vmul.f32 %v569, %v545
    %v574 = vmul.f32 %v570, %v546
    %v575 = vadd.f32 %v571, 0.2548296
    %v576 = vadd.f32 %v572, 0.2548296
    %v577 = vadd.f32 %v573, 0.2548296
    %v578 = vadd.f32 %v574, 0.2548296
    %v579 = vmul.f32 %v575, %v543
    %v580 = vmul.f32 %v576, %v544
    %v581 = vmul.f32 %v577, %v545
    %v582 = vmul.f32 %v578, %v546
    %v583 = vsub.f32 0.0, %v531
    %v584 = vsub.f32 0.0, %v532
    %v585 = vsub.f32 0.0, %v533
    %v586 = vsub.f32 0.0, %v534
    %v587 = vmul.f32 %v583, %v531
    %v588 = vmul.f32 %v584, %v532
    %v589 = vmul.f32 %v585, %v533
    %v590 = vmul.f32 %v586, %v534
    %v591 = vmul.f32 %v587, 1.442695
    %v592 = vpow.pop %v591
    %v593 = vmul.f32 %v588, 1.442695
    %v594 = vpow.pop %v593
    %v595 = vmul.f32 %v589, 1.442695
    %v596 = vpow.pop %v595
    %v597 = vmul.f32 %v590, 1.442695
    %v598 = vpow.pop %v597
    %v599 = vmul.f32 %v579, %v592
    %v600 = vmul.f32 %v580, %v594
    %v601 = vmul.f32 %v581, %v596
    %v602 = vmul.f32 %v582, %v598
    %v603 = vsub.f32 1.0, %v599
    %v604 = vsub.f32 1.0, %v600
    %v605 = vsub.f32 1.0, %v601
    %v606 = vsub.f32 1.0, %v602
    %v607 = vmul.f32 %v527, %v603
    %v608 = vmul.f32 %v528, %v604
    %v609 = vmul.f32 %v529, %v605
    %v610 = vmul.f32 %v530, %v606
    %v611 = vadd.f32 %v607, 1.0
    %v612 = vadd.f32 %v608, 1.0
    %v613 = vadd.f32 %v609, 1.0
    %v614 = vadd.f32 %v610, 1.0
    %v615 = vmul.f32 %v515, %v611
    %v616 = vmul.f32 %v516, %v612
    %v617 = vmul.f32 %v517, %v613
    %v618 = vmul.f32 %v518, %v614
    %619 = vst [vmem:[#allocation2] sm:$0x1] 0.0
    %620 = vst [vmem:[#allocation2 + $0x21] sm:$0x1] 0.0
    %621 = vst [vmem:[#allocation2 + $0x1] sm:$0xff] %v615
    %622 = vst [vmem:[#allocation2 + $0x9] sm:$0xff] %v616
    %623 = vst [vmem:[#allocation2 + $0x11] sm:$0xff] %v617
    %624 = vst [vmem:[#allocation2 + $0x19] sm:$0xff] %v618
    %v625 = vld [vmem:[#allocation2] ss:$2 sm:$0xff]
    %s626 = scalar_lea.vmem [#allocation2], 16
    %v627 = vld [vmem:[%s626] ss:$2 sm:$0xff]
    %s628 = scalar_lea.vmem [#allocation3], 384
    %v629 = vld [vmem:[%s628] sm:$0xff]
    %v630 = vld [vmem:[%s628 + $0x8] sm:$0xff]
    %v631 = vld [vmem:[%s628 + $0x10] sm:$0xff]
    %v632 = vld [vmem:[%s628 + $0x18] sm:$0xff]
    %v633 = vld [vmem:[%s628 + $0x20] sm:$0xff]
    %v634 = vld [vmem:[%s628 + $0x28] sm:$0xff]
    %v635 = vld [vmem:[%s628 + $0x30] sm:$0xff]
    %v636 = vld [vmem:[%s628 + $0x38] sm:$0xff]
    %v637 = vld [vmem:[%s628 + $0x40] sm:$0xff]
    %v638 = vld [vmem:[%s628 + $0x48] sm:$0xff]
    %v639 = vld [vmem:[%s628 + $0x50] sm:$0xff]
    %v640 = vld [vmem:[%s628 + $0x58] sm:$0xff]
    %v641 = vld [vmem:[%s628 + $0x60] sm:$0xff]
    %v642 = vld [vmem:[%s628 + $0x68] sm:$0xff]
    %v643 = vld [vmem:[%s628 + $0x70] sm:$0xff]
    %v644 = vld [vmem:[%s628 + $0x78] sm:$0xff]
    %v645 = vld [vmem:[%s104] ss:$2 sm:$0xff]
    %s646 = scalar_lea.vmem [#allocation2], 17
    %v647 = vld [vmem:[%s646] ss:$2 sm:$0xff]
    %s648 = scalar_lea.vmem [#allocation3], 512
    %v649 = vld [vmem:[%s648] sm:$0xff]
    %v650 = vld [vmem:[%s648 + $0x8] sm:$0xff]
    %v651 = vld [vmem:[%s648 + $0x10] sm:$0xff]
    %v652 = vld [vmem:[%s648 + $0x18] sm:$0xff]
    %v653 = vld [vmem:[%s648 + $0x20] sm:$0xff]
    %v654 = vld [vmem:[%s648 + $0x28] sm:$0xff]
    %v655 = vld [vmem:[%s648 + $0x30] sm:$0xff]
    %v656 = vld [vmem:[%s648 + $0x38] sm:$0xff]
    %v657 = vld [vmem:[%s648 + $0x40] sm:$0xff]
    %v658 = vld [vmem:[%s648 + $0x48] sm:$0xff]
    %v659 = vld [vmem:[%s648 + $0x50] sm:$0xff]
    %v660 = vld [vmem:[%s648 + $0x58] sm:$0xff]
    %v661 = vld [vmem:[%s648 + $0x60] sm:$0xff]
    %v662 = vld [vmem:[%s648 + $0x68] sm:$0xff]
    %v663 = vld [vmem:[%s648 + $0x70] sm:$0xff]
    %v664 = vld [vmem:[%s648 + $0x78] sm:$0xff]
    %665 = vmatprep.subr.mxu0 0.0
    %666 = vmatpush1.msra.mxu0 %v664
    %667 = vmatprep.subr.mxu0 0.0
    %668 = vmatpush1.msra.mxu0 %v663
    %669 = vmatprep.subr.mxu0 0.0
    %670 = vmatpush1.msra.mxu0 %v662
    %671 = vmatprep.subr.mxu0 0.0
    %672 = vmatpush1.msra.mxu0 %v661
    %673 = vmatprep.subr.mxu0 0.0
    %674 = vmatpush1.msra.mxu0 %v660
    %675 = vmatprep.subr.mxu0 0.0
    %676 = vmatpush1.msra.mxu0 %v659
    %677 = vmatprep.subr.mxu0 0.0
    %678 = vmatpush1.msra.mxu0 %v658
    %679 = vmatprep.subr.mxu0 0.0
    %680 = vmatpush1.msra.mxu0 %v657
    %681 = vmatprep.subr.mxu0 0.0
    %682 = vmatpush1.msra.mxu0 %v656
    %683 = vmatprep.subr.mxu0 0.0
    %684 = vmatpush1.msra.mxu0 %v655
    %685 = vmatprep.subr.mxu0 0.0
    %686 = vmatpush1.msra.mxu0 %v654
    %687 = vmatprep.subr.mxu0 0.0
    %688 = vmatpush1.msra.mxu0 %v653
    %689 = vmatprep.subr.mxu0 0.0
    %690 = vmatpush1.msra.mxu0 %v652
    %691 = vmatprep.subr.mxu0 0.0
    %692 = vmatpush1.msra.mxu0 %v651
    %693 = vmatprep.subr.mxu0 0.0
    %694 = vmatpush1.msra.mxu0 %v650
    %695 = vmatprep.subr.mxu0 0.0
    %696 = vmatpush1.msra.mxu0 %v649
    %697 = vmatprep.subr.mxu0 0.0
    %698 = vmatpush2.msra.mxu0 0.0
    %699 = vmatprep.subr.mxu0 0.0
    %700 = vmatpush2.msra.mxu0 0.0
    %701 = vmatprep.subr.mxu0 0.0
    %702 = vmatpush2.msra.mxu0 0.0
    %703 = vmatprep.subr.mxu0 0.0
    %704 = vmatpush2.msra.mxu0 0.0
    %705 = vmatprep.subr.mxu0 0.0
    %706 = vmatpush2.msra.mxu0 0.0
    %707 = vmatprep.subr.mxu0 0.0
    %708 = vmatpush2.msra.mxu0 0.0
    %709 = vmatprep.subr.mxu0 0.0
    %710 = vmatpush2.msra.mxu0 0.0
    %711 = vmatprep.subr.mxu0 0.0
    %712 = vmatpush2.msra.mxu0 0.0
    %713 = vmatprep.subr.mxu0 0.0
    %714 = vmatpush2.msra.mxu0 0.0
    %715 = vmatprep.subr.mxu0 0.0
    %716 = vmatpush2.msra.mxu0 0.0
    %717 = vmatprep.subr.mxu0 0.0
    %718 = vmatpush2.msra.mxu0 0.0
    %719 = vmatprep.subr.mxu0 0.0
    %720 = vmatpush2.msra.mxu0 0.0
    %721 = vmatprep.subr.mxu0 0.0
    %722 = vmatpush2.msra.mxu0 0.0
    %723 = vmatprep.subr.mxu0 0.0
    %724 = vmatpush2.msra.mxu0 0.0
    %725 = vmatprep.subr.mxu0 0.0
    %726 = vmatpush2.msra.mxu0 0.0
    %727 = vmatprep.subr.mxu0 0.0
    %728 = vmatpush2.msra.mxu0 0.0
    %729 = vmatprep.mubr.f32.mxu0 0.0
    %730 = vmatmul.mubr.f32.gmra.mxu0 %v645
    %v731 = vpop.f32.mrf.mxu0
    %v732 = vadd.f32 0.0, %v731
    %v733 = vpop.f32.mrf.mxu0
    %734 = vmatprep.mubr.f32.mxu0 0.0
    %735 = vmatmul.mubr.f32.gmra.mxu0 %v647
    %v736 = vpop.f32.mrf.mxu0
    %v737 = vadd.f32 0.0, %v736
    %v738 = vpop.f32.mrf.mxu0
    %739 = vdwg.mxu0
    %740 = vmatprep.subr.mxu0 0.0
    %741 = vmatpush1.msra.mxu0 %v644
    %742 = vmatprep.subr.mxu0 0.0
    %743 = vmatpush1.msra.mxu0 %v643
    %744 = vmatprep.subr.mxu0 0.0
    %745 = vmatpush1.msra.mxu0 %v642
    %746 = vmatprep.subr.mxu0 0.0
    %747 = vmatpush1.msra.mxu0 %v641
    %748 = vmatprep.subr.mxu0 0.0
    %749 = vmatpush1.msra.mxu0 %v640
    %750 = vmatprep.subr.mxu0 0.0
    %751 = vmatpush1.msra.mxu0 %v639
    %752 = vmatprep.subr.mxu0 0.0
    %753 = vmatpush1.msra.mxu0 %v638
    %754 = vmatprep.subr.mxu0 0.0
    %755 = vmatpush1.msra.mxu0 %v637
    %756 = vmatprep.subr.mxu0 0.0
    %757 = vmatpush1.msra.mxu0 %v636
    %758 = vmatprep.subr.mxu0 0.0
    %759 = vmatpush1.msra.mxu0 %v635
    %760 = vmatprep.subr.mxu0 0.0
    %761 = vmatpush1.msra.mxu0 %v634
    %762 = vmatprep.subr.mxu0 0.0
    %763 = vmatpush1.msra.mxu0 %v633
    %764 = vmatprep.subr.mxu0 0.0
    %765 = vmatpush1.msra.mxu0 %v632
    %766 = vmatprep.subr.mxu0 0.0
    %767 = vmatpush1.msra.mxu0 %v631
    %768 = vmatprep.subr.mxu0 0.0
    %769 = vmatpush1.msra.mxu0 %v630
    %770 = vmatprep.subr.mxu0 0.0
    %771 = vmatpush1.msra.mxu0 %v629
    %772 = vmatprep.subr.mxu0 0.0
    %773 = vmatpush2.msra.mxu0 0.0
    %774 = vmatprep.subr.mxu0 0.0
    %775 = vmatpush2.msra.mxu0 0.0
    %776 = vmatprep.subr.mxu0 0.0
    %777 = vmatpush2.msra.mxu0 0.0
    %778 = vmatprep.subr.mxu0 0.0
    %779 = vmatpush2.msra.mxu0 0.0
    %780 = vmatprep.subr.mxu0 0.0
    %781 = vmatpush2.msra.mxu0 0.0
    %782 = vmatprep.subr.mxu0 0.0
    %783 = vmatpush2.msra.mxu0 0.0
    %784 = vmatprep.subr.mxu0 0.0
    %785 = vmatpush2.msra.mxu0 0.0
    %786 = vmatprep.subr.mxu0 0.0
    %787 = vmatpush2.msra.mxu0 0.0
    %788 = vmatprep.subr.mxu0 0.0
    %789 = vmatpush2.msra.mxu0 0.0
    %790 = vmatprep.subr.mxu0 0.0
    %791 = vmatpush2.msra.mxu0 0.0
    %792 = vmatprep.subr.mxu0 0.0
    %793 = vmatpush2.msra.mxu0 0.0
    %794 = vmatprep.subr.mxu0 0.0
    %795 = vmatpush2.msra.mxu0 0.0
    %796 = vmatprep.subr.mxu0 0.0
    %797 = vmatpush2.msra.mxu0 0.0
    %798 = vmatprep.subr.mxu0 0.0
    %799 = vmatpush2.msra.mxu0 0.0
    %800 = vmatprep.subr.mxu0 0.0
    %801 = vmatpush2.msra.mxu0 0.0
    %802 = vmatprep.subr.mxu0 0.0
    %803 = vmatpush2.msra.mxu0 0.0
    %804 = vmatprep.mubr.f32.mxu0 0.0
    %805 = vmatmul.mubr.f32.gmra.mxu0 %v625
    %v806 = vpop.f32.mrf.mxu0
    %v807 = vadd.f32 %v732, %v806
    %v808 = vpop.f32.mrf.mxu0
    %809 = vmatprep.mubr.f32.mxu0 0.0
    %810 = vmatmul.mubr.f32.gmra.mxu0 %v627
    %v811 = vpop.f32.mrf.mxu0
    %v812 = vadd.f32 %v737, %v811
    %v813 = vpop.f32.mrf.mxu0
    %814 = vdwg.mxu0
    %s815 = scalar_lea.vmem [#allocation2], 2
    %v816 = vld [vmem:[%s815] ss:$2 sm:$0xff]
    %s817 = scalar_lea.vmem [#allocation2], 18
    %v818 = vld [vmem:[%s817] ss:$2 sm:$0xff]
    %s819 = scalar_lea.vmem [#allocation3], 640
    %v820 = vld [vmem:[%s819] sm:$0xff]
    %v821 = vld [vmem:[%s819 + $0x8] sm:$0xff]
    %v822 = vld [vmem:[%s819 + $0x10] sm:$0xff]
    %v823 = vld [vmem:[%s819 + $0x18] sm:$0xff]
    %v824 = vld [vmem:[%s819 + $0x20] sm:$0xff]
    %v825 = vld [vmem:[%s819 + $0x28] sm:$0xff]
    %v826 = vld [vmem:[%s819 + $0x30] sm:$0xff]
    %v827 = vld [vmem:[%s819 + $0x38] sm:$0xff]
    %v828 = vld [vmem:[%s819 + $0x40] sm:$0xff]
    %v829 = vld [vmem:[%s819 + $0x48] sm:$0xff]
    %v830 = vld [vmem:[%s819 + $0x50] sm:$0xff]
    %v831 = vld [vmem:[%s819 + $0x58] sm:$0xff]
    %v832 = vld [vmem:[%s819 + $0x60] sm:$0xff]
    %v833 = vld [vmem:[%s819 + $0x68] sm:$0xff]
    %v834 = vld [vmem:[%s819 + $0x70] sm:$0xff]
    %v835 = vld [vmem:[%s819 + $0x78] sm:$0xff]
    %836 = vmatprep.subr.mxu0 0.0
    %837 = vmatpush1.msra.mxu0 %v835
    %838 = vmatprep.subr.mxu0 0.0
    %839 = vmatpush1.msra.mxu0 %v834
    %840 = vmatprep.subr.mxu0 0.0
    %841 = vmatpush1.msra.mxu0 %v833
    %842 = vmatprep.subr.mxu0 0.0
    %843 = vmatpush1.msra.mxu0 %v832
    %844 = vmatprep.subr.mxu0 0.0
    %845 = vmatpush1.msra.mxu0 %v831
    %846 = vmatprep.subr.mxu0 0.0
    %847 = vmatpush1.msra.mxu0 %v830
    %848 = vmatprep.subr.mxu0 0.0
    %849 = vmatpush1.msra.mxu0 %v829
    %850 = vmatprep.subr.mxu0 0.0
    %851 = vmatpush1.msra.mxu0 %v828
    %852 = vmatprep.subr.mxu0 0.0
    %853 = vmatpush1.msra.mxu0 %v827
    %854 = vmatprep.subr.mxu0 0.0
    %855 = vmatpush1.msra.mxu0 %v826
    %856 = vmatprep.subr.mxu0 0.0
    %857 = vmatpush1.msra.mxu0 %v825
    %858 = vmatprep.subr.mxu0 0.0
    %859 = vmatpush1.msra.mxu0 %v824
    %860 = vmatprep.subr.mxu0 0.0
    %861 = vmatpush1.msra.mxu0 %v823
    %862 = vmatprep.subr.mxu0 0.0
    %863 = vmatpush1.msra.mxu0 %v822
    %864 = vmatprep.subr.mxu0 0.0
    %865 = vmatpush1.msra.mxu0 %v821
    %866 = vmatprep.subr.mxu0 0.0
    %867 = vmatpush1.msra.mxu0 %v820
    %868 = vmatprep.subr.mxu0 0.0
    %869 = vmatpush2.msra.mxu0 0.0
    %870 = vmatprep.subr.mxu0 0.0
    %871 = vmatpush2.msra.mxu0 0.0
    %872 = vmatprep.subr.mxu0 0.0
    %873 = vmatpush2.msra.mxu0 0.0
    %874 = vmatprep.subr.mxu0 0.0
    %875 = vmatpush2.msra.mxu0 0.0
    %876 = vmatprep.subr.mxu0 0.0
    %877 = vmatpush2.msra.mxu0 0.0
    %878 = vmatprep.subr.mxu0 0.0
    %879 = vmatpush2.msra.mxu0 0.0
    %880 = vmatprep.subr.mxu0 0.0
    %881 = vmatpush2.msra.mxu0 0.0
    %882 = vmatprep.subr.mxu0 0.0
    %883 = vmatpush2.msra.mxu0 0.0
    %884 = vmatprep.subr.mxu0 0.0
    %885 = vmatpush2.msra.mxu0 0.0
    %886 = vmatprep.subr.mxu0 0.0
    %887 = vmatpush2.msra.mxu0 0.0
    %888 = vmatprep.subr.mxu0 0.0
    %889 = vmatpush2.msra.mxu0 0.0
    %890 = vmatprep.subr.mxu0 0.0
    %891 = vmatpush2.msra.mxu0 0.0
    %892 = vmatprep.subr.mxu0 0.0
    %893 = vmatpush2.msra.mxu0 0.0
    %894 = vmatprep.subr.mxu0 0.0
    %895 = vmatpush2.msra.mxu0 0.0
    %896 = vmatprep.subr.mxu0 0.0
    %897 = vmatpush2.msra.mxu0 0.0
    %898 = vmatprep.subr.mxu0 0.0
    %899 = vmatpush2.msra.mxu0 0.0
    %900 = vmatprep.mubr.f32.mxu0 0.0
    %901 = vmatmul.mubr.f32.gmra.mxu0 %v816
    %v902 = vpop.f32.mrf.mxu0
    %v903 = vadd.f32 0.0, %v902
    %v904 = vpop.f32.mrf.mxu0
    %905 = vmatprep.mubr.f32.mxu0 0.0
    %906 = vmatmul.mubr.f32.gmra.mxu0 %v818
    %v907 = vpop.f32.mrf.mxu0
    %v908 = vadd.f32 0.0, %v907
    %v909 = vpop.f32.mrf.mxu0
    %910 = vdwg.mxu0
    %v911 = vadd.f32 %v807, %v903
    %v912 = vadd.f32 %v812, %v908
    %s913 = scalar_lea.vmem [#allocation5], 4
    %v914 = vld [vmem:[%s913] sm:$0x1]
    %v915 = vlaneseq
    %v916 = vshrl.u32 %v915, 7
    %v917 = vsub.s32 0, %v916
    %v918 = vrot.slane %v914, %v917
    %v919 = vadd.f32 %v911, %v918
    %v920 = vadd.f32 %v912, %v918
    %v921 = vadd.f32 %v919, %v920
    %v922 = vrot.slane %v921, 4
    %v923 = vadd.f32 %v921, %v922
    %v924 = vrot.slane %v923, 2
    %v925 = vadd.f32 %v923, %v924
    %v926 = vrot.slane %v925, 1
    %v927 = vadd.f32 %v925, %v926
    %929 = vrot.lane.b32.xlu0 %v927, 127
    %v930 = vpop.permute.xlu0 %929
    %932 = vrot.lane.b32.xlu0 %v927, 1
    %v933 = vpop.permute.xlu0 %932
    %v935 = vsel %vm452, %v930, %v933
    %v936 = vadd.f32 %v927, %v935
    %v937 = vmul.f32 %v936, 0.03125
    %v938 = vlaneseq
    %v939 = vshrl.u32 %v938, 7
    %v940 = vsub.s32 0, %v939
    %v941 = vrot.slane %v937, %v940
    %v942 = vsub.f32 %v919, %v941
    %v943 = vsub.f32 %v920, %v941
    %v944 = vmul.f32 %v942, %v942
    %v945 = vmul.f32 %v943, %v943
    %v946 = vadd.f32 %v944, %v945
    %v947 = vrot.slane %v946, 4
    %v948 = vadd.f32 %v946, %v947
    %v949 = vrot.slane %v948, 2
    %v950 = vadd.f32 %v948, %v949
    %v951 = vrot.slane %v950, 1
    %v952 = vadd.f32 %v950, %v951
    %954 = vrot.lane.b32.xlu0 %v952, 127
    %v955 = vpop.permute.xlu0 %954
    %957 = vrot.lane.b32.xlu0 %v952, 1
    %v958 = vpop.permute.xlu0 %957
    %v960 = vsel %vm452, %v955, %v958
    %v961 = vadd.f32 %v952, %v960
    %v962 = vmul.f32 %v961, 0.03125
    %v963 = vadd.f32 %v962, 1e-05
    %v964 = vrsqrt.pop %v963
    %v965 = vlaneseq
    %v966 = vshrl.u32 %v965, 7
    %v967 = vsub.s32 0, %v966
    %v968 = vrot.slane %v964, %v967
    %v969 = vmul.f32 %v942, %v968
    %v970 = vmul.f32 %v943, %v968
    %v971 = vld [vmem:[%s913 + $0x1] sm:$0x1]
    %v972 = vlaneseq
    %v973 = vshrl.u32 %v972, 7
    %v974 = vsub.s32 0, %v973
    %v975 = vrot.slane %v971, %v974
    %v976 = vmul.f32 %v969, %v975
    %v977 = vmul.f32 %v970, %v975
    %v978 = vld [vmem:[%s913 + $0x2] sm:$0x1]
    %v979 = vlaneseq
    %v980 = vshrl.u32 %v979, 7
    %v981 = vsub.s32 0, %v980
    %v982 = vrot.slane %v978, %v981
    %v983 = vadd.f32 %v976, %v982
    %v984 = vadd.f32 %v977, %v982
    %v985 = vmul.f32 %v983, 0.5
    %v986 = vmul.f32 %v984, 0.5
    %v987 = vmul.f32 %v983, 0.70710677
    %v988 = vmul.f32 %v984, 0.70710677
    %vm989 = vcmp.ge.f32.partialorder %v987, 0.0
    %vm990 = vcmp.ge.f32.partialorder %v988, 0.0
    %v991 = vsel %vm989, 1.0, -1.0
    %v992 = vsel %vm990, 1.0, -1.0
    %v993 = vand.u32 2147483647, %v987
    %v994 = vand.u32 2147483647, %v988
    %v995 = vmul.f32 %v993, 0.3275911
    %v996 = vmul.f32 %v994, 0.3275911
    %v997 = vadd.f32 %v995, 1.0
    %v998 = vadd.f32 %v996, 1.0
    %v999 = vrcp.pop %v997
    %v1000 = vrcp.pop %v998
    %v1001 = vmul.f32 %v999, 1.0614054
    %v1002 = vmul.f32 %v1000, 1.0614054
    %v1003 = vadd.f32 %v1001, -1.4531521
    %v1004 = vadd.f32 %v1002, -1.4531521
    %v1005 = vmul.f32 %v1003, %v999
    %v1006 = vmul.f32 %v1004, %v1000
    %v1007 = vadd.f32 %v1005, 1.4214138
    %v1008 = vadd.f32 %v1006, 1.4214138
    %v1009 = vmul.f32 %v1007, %v999
    %v1010 = vmul.f32 %v1008, %v1000
    %v1011 = vadd.f32 %v1009, -0.28449672
    %v1012 = vadd.f32 %v1010, -0.28449672
    %v1013 = vmul.f32 %v1011, %v999
    %v1014 = vmul.f32 %v1012, %v1000
    %v1015 = vadd.f32 %v1013, 0.2548296
    %v1016 = vadd.f32 %v1014, 0.2548296
    %v1017 = vmul.f32 %v1015, %v999
    %v1018 = vmul.f32 %v1016, %v1000
    %v1019 = vsub.f32 0.0, %v993
    %v1020 = vsub.f32 0.0, %v994
    %v1021 = vmul.f32 %v1019, %v993
    %v1022 = vmul.f32 %v1020, %v994
    %v1023 = vmul.f32 %v1021, 1.442695
    %v1024 = vpow.pop %v1023
    %v1025 = vmul.f32 %v1022, 1.442695
    %v1026 = vpow.pop %v1025
    %v1027 = vmul.f32 %v1017, %v1024
    %v1028 = vmul.f32 %v1018, %v1026
    %v1029 = vsub.f32 1.0, %v1027
    %v1030 = vsub.f32 1.0, %v1028
    %v1031 = vmul.f32 %v991, %v1029
    %v1032 = vmul.f32 %v992, %v1030
    %v1033 = vadd.f32 %v1031, 1.0
    %v1034 = vadd.f32 %v1032, 1.0
    %v1035 = vmul.f32 %v985, %v1033
    %v1036 = vmul.f32 %v986, %v1034
    %1037 = vst [vmem:[#allocation2] sm:$0x1] 0.0
    %1038 = vst [vmem:[#allocation2 + $0x11] sm:$0x1] 0.0
    %1039 = vst [vmem:[#allocation2 + $0x1] sm:$0xff] %v1035
    %1040 = vst [vmem:[#allocation2 + $0x9] sm:$0xff] %v1036
    %v1041 = vld [vmem:[#allocation2] ss:$2 sm:$0xff]
    %s1042 = scalar_lea.vmem [#allocation3], 768
    %v1043 = vld [vmem:[%s1042] sm:$0xff]
    %v1044 = vld [vmem:[%s1042 + $0x8] sm:$0xff]
    %v1045 = vld [vmem:[%s1042 + $0x10] sm:$0xff]
    %v1046 = vld [vmem:[%s1042 + $0x18] sm:$0xff]
    %v1047 = vld [vmem:[%s1042 + $0x20] sm:$0xff]
    %v1048 = vld [vmem:[%s1042 + $0x28] sm:$0xff]
    %v1049 = vld [vmem:[%s1042 + $0x30] sm:$0xff]
    %v1050 = vld [vmem:[%s1042 + $0x38] sm:$0xff]
    %v1051 = vld [vmem:[%s1042 + $0x40] sm:$0xff]
    %v1052 = vld [vmem:[%s1042 + $0x48] sm:$0xff]
    %v1053 = vld [vmem:[%s1042 + $0x50] sm:$0xff]
    %v1054 = vld [vmem:[%s1042 + $0x58] sm:$0xff]
    %v1055 = vld [vmem:[%s1042 + $0x60] sm:$0xff]
    %v1056 = vld [vmem:[%s1042 + $0x68] sm:$0xff]
    %v1057 = vld [vmem:[%s1042 + $0x70] sm:$0xff]
    %v1058 = vld [vmem:[%s1042 + $0x78] sm:$0xff]
    %v1059 = vld [vmem:[%s104] ss:$2 sm:$0xff]
    %s1060 = scalar_lea.vmem [#allocation3], 896
    %v1061 = vld [vmem:[%s1060] sm:$0xff]
    %v1062 = vld [vmem:[%s1060 + $0x8] sm:$0xff]
    %v1063 = vld [vmem:[%s1060 + $0x10] sm:$0xff]
    %v1064 = vld [vmem:[%s1060 + $0x18] sm:$0xff]
    %v1065 = vld [vmem:[%s1060 + $0x20] sm:$0xff]
    %v1066 = vld [vmem:[%s1060 + $0x28] sm:$0xff]
    %v1067 = vld [vmem:[%s1060 + $0x30] sm:$0xff]
    %v1068 = vld [vmem:[%s1060 + $0x38] sm:$0xff]
    %v1069 = vld [vmem:[%s1060 + $0x40] sm:$0xff]
    %v1070 = vld [vmem:[%s1060 + $0x48] sm:$0xff]
    %v1071 = vld [vmem:[%s1060 + $0x50] sm:$0xff]
    %v1072 = vld [vmem:[%s1060 + $0x58] sm:$0xff]
    %v1073 = vld [vmem:[%s1060 + $0x60] sm:$0xff]
    %v1074 = vld [vmem:[%s1060 + $0x68] sm:$0xff]
    %v1075 = vld [vmem:[%s1060 + $0x70] sm:$0xff]
    %v1076 = vld [vmem:[%s1060 + $0x78] sm:$0xff]
    %1077 = vmatprep.subr.mxu0 0.0
    %1078 = vmatpush1.msra.mxu0 %v1076
    %1079 = vmatprep.subr.mxu0 0.0
    %1080 = vmatpush1.msra.mxu0 %v1075
    %1081 = vmatprep.subr.mxu0 0.0
    %1082 = vmatpush1.msra.mxu0 %v1074
    %1083 = vmatprep.subr.mxu0 0.0
    %1084 = vmatpush1.msra.mxu0 %v1073
    %1085 = vmatprep.subr.mxu0 0.0
    %1086 = vmatpush1.msra.mxu0 %v1072
    %1087 = vmatprep.subr.mxu0 0.0
    %1088 = vmatpush1.msra.mxu0 %v1071
    %1089 = vmatprep.subr.mxu0 0.0
    %1090 = vmatpush1.msra.mxu0 %v1070
    %1091 = vmatprep.subr.mxu0 0.0
    %1092 = vmatpush1.msra.mxu0 %v1069
    %1093 = vmatprep.subr.mxu0 0.0
    %1094 = vmatpush1.msra.mxu0 %v1068
    %1095 = vmatprep.subr.mxu0 0.0
    %1096 = vmatpush1.msra.mxu0 %v1067
    %1097 = vmatprep.subr.mxu0 0.0
    %1098 = vmatpush1.msra.mxu0 %v1066
    %1099 = vmatprep.subr.mxu0 0.0
    %1100 = vmatpush1.msra.mxu0 %v1065
    %1101 = vmatprep.subr.mxu0 0.0
    %1102 = vmatpush1.msra.mxu0 %v1064
    %1103 = vmatprep.subr.mxu0 0.0
    %1104 = vmatpush1.msra.mxu0 %v1063
    %1105 = vmatprep.subr.mxu0 0.0
    %1106 = vmatpush1.msra.mxu0 %v1062
    %1107 = vmatprep.subr.mxu0 0.0
    %1108 = vmatpush1.msra.mxu0 %v1061
    %1109 = vmatprep.subr.mxu0 0.0
    %1110 = vmatpush2.msra.mxu0 0.0
    %1111 = vmatprep.subr.mxu0 0.0
    %1112 = vmatpush2.msra.mxu0 0.0
    %1113 = vmatprep.subr.mxu0 0.0
    %1114 = vmatpush2.msra.mxu0 0.0
    %1115 = vmatprep.subr.mxu0 0.0
    %1116 = vmatpush2.msra.mxu0 0.0
    %1117 = vmatprep.subr.mxu0 0.0
    %1118 = vmatpush2.msra.mxu0 0.0
    %1119 = vmatprep.subr.mxu0 0.0
    %1120 = vmatpush2.msra.mxu0 0.0
    %1121 = vmatprep.subr.mxu0 0.0
    %1122 = vmatpush2.msra.mxu0 0.0
    %1123 = vmatprep.subr.mxu0 0.0
    %1124 = vmatpush2.msra.mxu0 0.0
    %1125 = vmatprep.subr.mxu0 0.0
    %1126 = vmatpush2.msra.mxu0 0.0
    %1127 = vmatprep.subr.mxu0 0.0
    %1128 = vmatpush2.msra.mxu0 0.0
    %1129 = vmatprep.subr.mxu0 0.0
    %1130 = vmatpush2.msra.mxu0 0.0
    %1131 = vmatprep.subr.mxu0 0.0
    %1132 = vmatpush2.msra.mxu0 0.0
    %1133 = vmatprep.subr.mxu0 0.0
    %1134 = vmatpush2.msra.mxu0 0.0
    %1135 = vmatprep.subr.mxu0 0.0
    %1136 = vmatpush2.msra.mxu0 0.0
    %1137 = vmatprep.subr.mxu0 0.0
    %1138 = vmatpush2.msra.mxu0 0.0
    %1139 = vmatprep.subr.mxu0 0.0
    %1140 = vmatpush2.msra.mxu0 0.0
    %1141 = vmatprep.mubr.f32.mxu0 0.0
    %1142 = vmatmul.mubr.f32.gmra.mxu0 %v1059
    %v1143 = vpop.f32.mrf.mxu0
    %v1144 = vadd.f32 0.0, %v1143
    %v1145 = vpop.f32.mrf.mxu0
    %1146 = vdwg.mxu0
    %1147 = vmatprep.subr.mxu0 0.0
    %1148 = vmatpush1.msra.mxu0 %v1058
    %1149 = vmatprep.subr.mxu0 0.0
    %1150 = vmatpush1.msra.mxu0 %v1057
    %1151 = vmatprep.subr.mxu0 0.0
    %1152 = vmatpush1.msra.mxu0 %v1056
    %1153 = vmatprep.subr.mxu0 0.0
    %1154 = vmatpush1.msra.mxu0 %v1055
    %1155 = vmatprep.subr.mxu0 0.0
    %1156 = vmatpush1.msra.mxu0 %v1054
    %1157 = vmatprep.subr.mxu0 0.0
    %1158 = vmatpush1.msra.mxu0 %v1053
    %1159 = vmatprep.subr.mxu0 0.0
    %1160 = vmatpush1.msra.mxu0 %v1052
    %1161 = vmatprep.subr.mxu0 0.0
    %1162 = vmatpush1.msra.mxu0 %v1051
    %1163 = vmatprep.subr.mxu0 0.0
    %1164 = vmatpush1.msra.mxu0 %v1050
    %1165 = vmatprep.subr.mxu0 0.0
    %1166 = vmatpush1.msra.mxu0 %v1049
    %1167 = vmatprep.subr.mxu0 0.0
    %1168 = vmatpush1.msra.mxu0 %v1048
    %1169 = vmatprep.subr.mxu0 0.0
    %1170 = vmatpush1.msra.mxu0 %v1047
    %1171 = vmatprep.subr.mxu0 0.0
    %1172 = vmatpush1.msra.mxu0 %v1046
    %1173 = vmatprep.subr.mxu0 0.0
    %1174 = vmatpush1.msra.mxu0 %v1045
    %1175 = vmatprep.subr.mxu0 0.0
    %1176 = vmatpush1.msra.mxu0 %v1044
    %1177 = vmatprep.subr.mxu0 0.0
    %1178 = vmatpush1.msra.mxu0 %v1043
    %1179 = vmatprep.subr.mxu0 0.0
    %1180 = vmatpush2.msra.mxu0 0.0
    %1181 = vmatprep.subr.mxu0 0.0
    %1182 = vmatpush2.msra.mxu0 0.0
    %1183 = vmatprep.subr.mxu0 0.0
    %1184 = vmatpush2.msra.mxu0 0.0
    %1185 = vmatprep.subr.mxu0 0.0
    %1186 = vmatpush2.msra.mxu0 0.0
    %1187 = vmatprep.subr.mxu0 0.0
    %1188 = vmatpush2.msra.mxu0 0.0
    %1189 = vmatprep.subr.mxu0 0.0
    %1190 = vmatpush2.msra.mxu0 0.0
    %1191 = vmatprep.subr.mxu0 0.0
    %1192 = vmatpush2.msra.mxu0 0.0
    %1193 = vmatprep.subr.mxu0 0.0
    %1194 = vmatpush2.msra.mxu0 0.0
    %1195 = vmatprep.subr.mxu0 0.0
    %1196 = vmatpush2.msra.mxu0 0.0
    %1197 = vmatprep.subr.mxu0 0.0
    %1198 = vmatpush2.msra.mxu0 0.0
    %1199 = vmatprep.subr.mxu0 0.0
    %1200 = vmatpush2.msra.mxu0 0.0
    %1201 = vmatprep.subr.mxu0 0.0
    %1202 = vmatpush2.msra.mxu0 0.0
    %1203 = vmatprep.subr.mxu0 0.0
    %1204 = vmatpush2.msra.mxu0 0.0
    %1205 = vmatprep.subr.mxu0 0.0
    %1206 = vmatpush2.msra.mxu0 0.0
    %1207 = vmatprep.subr.mxu0 0.0
    %1208 = vmatpush2.msra.mxu0 0.0
    %1209 = vmatprep.subr.mxu0 0.0
    %1210 = vmatpush2.msra.mxu0 0.0
    %1211 = vmatprep.mubr.f32.mxu0 0.0
    %1212 = vmatmul.mubr.f32.gmra.mxu0 %v1041
    %v1213 = vpop.f32.mrf.mxu0
    %v1214 = vadd.f32 %v1144, %v1213
    %v1215 = vpop.f32.mrf.mxu0
    %1216 = vdwg.mxu0
    %v1217 = vld [vmem:[%s815] ss:$2 sm:$0xff]
    %s1218 = scalar_lea.vmem [#allocation3], 1024
    %v1219 = vld [vmem:[%s1218] sm:$0xff]
    %v1220 = vld [vmem:[%s1218 + $0x8] sm:$0xff]
    %v1221 = vld [vmem:[%s1218 + $0x10] sm:$0xff]
    %v1222 = vld [vmem:[%s1218 + $0x18] sm:$0xff]
    %v1223 = vld [vmem:[%s1218 + $0x20] sm:$0xff]
    %v1224 = vld [vmem:[%s1218 + $0x28] sm:$0xff]
    %v1225 = vld [vmem:[%s1218 + $0x30] sm:$0xff]
    %v1226 = vld [vmem:[%s1218 + $0x38] sm:$0xff]
    %v1227 = vld [vmem:[%s1218 + $0x40] sm:$0xff]
    %v1228 = vld [vmem:[%s1218 + $0x48] sm:$0xff]
    %v1229 = vld [vmem:[%s1218 + $0x50] sm:$0xff]
    %v1230 = vld [vmem:[%s1218 + $0x58] sm:$0xff]
    %v1231 = vld [vmem:[%s1218 + $0x60] sm:$0xff]
    %v1232 = vld [vmem:[%s1218 + $0x68] sm:$0xff]
    %v1233 = vld [vmem:[%s1218 + $0x70] sm:$0xff]
    %v1234 = vld [vmem:[%s1218 + $0x78] sm:$0xff]
    %1235 = vmatprep.subr.mxu0 0.0
    %1236 = vmatpush1.msra.mxu0 %v1234
    %1237 = vmatprep.subr.mxu0 0.0
    %1238 = vmatpush1.msra.mxu0 %v1233
    %1239 = vmatprep.subr.mxu0 0.0
    %1240 = vmatpush1.msra.mxu0 %v1232
    %1241 = vmatprep.subr.mxu0 0.0
    %1242 = vmatpush1.msra.mxu0 %v1231
    %1243 = vmatprep.subr.mxu0 0.0
    %1244 = vmatpush1.msra.mxu0 %v1230
    %1245 = vmatprep.subr.mxu0 0.0
    %1246 = vmatpush1.msra.mxu0 %v1229
    %1247 = vmatprep.subr.mxu0 0.0
    %1248 = vmatpush1.msra.mxu0 %v1228
    %1249 = vmatprep.subr.mxu0 0.0
    %1250 = vmatpush1.msra.mxu0 %v1227
    %1251 = vmatprep.subr.mxu0 0.0
    %1252 = vmatpush1.msra.mxu0 %v1226
    %1253 = vmatprep.subr.mxu0 0.0
    %1254 = vmatpush1.msra.mxu0 %v1225
    %1255 = vmatprep.subr.mxu0 0.0
    %1256 = vmatpush1.msra.mxu0 %v1224
    %1257 = vmatprep.subr.mxu0 0.0
    %1258 = vmatpush1.msra.mxu0 %v1223
    %1259 = vmatprep.subr.mxu0 0.0
    %1260 = vmatpush1.msra.mxu0 %v1222
    %1261 = vmatprep.subr.mxu0 0.0
    %1262 = vmatpush1.msra.mxu0 %v1221
    %1263 = vmatprep.subr.mxu0 0.0
    %1264 = vmatpush1.msra.mxu0 %v1220
    %1265 = vmatprep.subr.mxu0 0.0
    %1266 = vmatpush1.msra.mxu0 %v1219
    %1267 = vmatprep.subr.mxu0 0.0
    %1268 = vmatpush2.msra.mxu0 0.0
    %1269 = vmatprep.subr.mxu0 0.0
    %1270 = vmatpush2.msra.mxu0 0.0
    %1271 = vmatprep.subr.mxu0 0.0
    %1272 = vmatpush2.msra.mxu0 0.0
    %1273 = vmatprep.subr.mxu0 0.0
    %1274 = vmatpush2.msra.mxu0 0.0
    %1275 = vmatprep.subr.mxu0 0.0
    %1276 = vmatpush2.msra.mxu0 0.0
    %1277 = vmatprep.subr.mxu0 0.0
    %1278 = vmatpush2.msra.mxu0 0.0
    %1279 = vmatprep.subr.mxu0 0.0
    %1280 = vmatpush2.msra.mxu0 0.0
    %1281 = vmatprep.subr.mxu0 0.0
    %1282 = vmatpush2.msra.mxu0 0.0
    %1283 = vmatprep.subr.mxu0 0.0
    %1284 = vmatpush2.msra.mxu0 0.0
    %1285 = vmatprep.subr.mxu0 0.0
    %1286 = vmatpush2.msra.mxu0 0.0
    %1287 = vmatprep.subr.mxu0 0.0
    %1288 = vmatpush2.msra.mxu0 0.0
    %1289 = vmatprep.subr.mxu0 0.0
    %1290 = vmatpush2.msra.mxu0 0.0
    %1291 = vmatprep.subr.mxu0 0.0
    %1292 = vmatpush2.msra.mxu0 0.0
    %1293 = vmatprep.subr.mxu0 0.0
    %1294 = vmatpush2.msra.mxu0 0.0
    %1295 = vmatprep.subr.mxu0 0.0
    %1296 = vmatpush2.msra.mxu0 0.0
    %1297 = vmatprep.subr.mxu0 0.0
    %1298 = vmatpush2.msra.mxu0 0.0
    %1299 = vmatprep.mubr.f32.mxu0 0.0
    %1300 = vmatmul.mubr.f32.gmra.mxu0 %v1217
    %v1301 = vpop.f32.mrf.mxu0
    %v1302 = vadd.f32 0.0, %v1301
    %v1303 = vpop.f32.mrf.mxu0
    %1304 = vdwg.mxu0
    %v1305 = vadd.f32 %v1214, %v1302
    %s1306 = scalar_lea.vmem [#allocation5], 8
    %v1307 = vld [vmem:[%s1306] sm:$0x1]
    %v1308 = vlaneseq
    %v1309 = vshrl.u32 %v1308, 7
    %v1310 = vsub.s32 0, %v1309
    %v1311 = vrot.slane %v1307, %v1310
    %v1312 = vadd.f32 %v1305, %v1311
    %v1313 = vrot.slane %v1312, 4
    %v1314 = vadd.f32 %v1312, %v1313
    %v1315 = vrot.slane %v1314, 2
    %v1316 = vadd.f32 %v1314, %v1315
    %v1317 = vrot.slane %v1316, 1
    %v1318 = vadd.f32 %v1316, %v1317
    %1320 = vrot.lane.b32.xlu0 %v1318, 127
    %v1321 = vpop.permute.xlu0 %1320
    %1323 = vrot.lane.b32.xlu0 %v1318, 1
    %v1324 = vpop.permute.xlu0 %1323
    %v1326 = vsel %vm452, %v1321, %v1324
    %v1327 = vadd.f32 %v1318, %v1326
    %v1328 = vmul.f32 %v1327, 0.0625
    %v1329 = vlaneseq
    %v1330 = vshrl.u32 %v1329, 7
    %v1331 = vsub.s32 0, %v1330
    %v1332 = vrot.slane %v1328, %v1331
    %v1333 = vsub.f32 %v1312, %v1332
    %v1334 = vmul.f32 %v1333, %v1333
    %v1335 = vrot.slane %v1334, 4
    %v1336 = vadd.f32 %v1334, %v1335
    %v1337 = vrot.slane %v1336, 2
    %v1338 = vadd.f32 %v1336, %v1337
    %v1339 = vrot.slane %v1338, 1
    %v1340 = vadd.f32 %v1338, %v1339
    %1342 = vrot.lane.b32.xlu0 %v1340, 127
    %v1343 = vpop.permute.xlu0 %1342
    %1345 = vrot.lane.b32.xlu0 %v1340, 1
    %v1346 = vpop.permute.xlu0 %1345
    %v1348 = vsel %vm452, %v1343, %v1346
    %v1349 = vadd.f32 %v1340, %v1348
    %v1350 = vmul.f32 %v1349, 0.0625
    %v1351 = vadd.f32 %v1350, 1e-05
    %v1352 = vrsqrt.pop %v1351
    %v1353 = vlaneseq
    %v1354 = vshrl.u32 %v1353, 7
    %v1355 = vsub.s32 0, %v1354
    %v1356 = vrot.slane %v1352, %v1355
    %v1357 = vmul.f32 %v1333, %v1356
    %v1358 = vld [vmem:[%s1306 + $0x1] sm:$0x1]
    %v1359 = vlaneseq
    %v1360 = vshrl.u32 %v1359, 7
    %v1361 = vsub.s32 0, %v1360
    %v1362 = vrot.slane %v1358, %v1361
    %v1363 = vmul.f32 %v1357, %v1362
    %v1364 = vld [vmem:[%s1306 + $0x2] sm:$0x1]
    %v1365 = vlaneseq
    %v1366 = vshrl.u32 %v1365, 7
    %v1367 = vsub.s32 0, %v1366
    %v1368 = vrot.slane %v1364, %v1367
    %v1369 = vadd.f32 %v1363, %v1368
    %v1370 = vmul.f32 %v1369, 0.5
    %v1371 = vmul.f32 %v1369, 0.70710677
    %vm1372 = vcmp.ge.f32.partialorder %v1371, 0.0
    %v1373 = vsel %vm1372, 1.0, -1.0
    %v1374 = vand.u32 2147483647, %v1371
    %v1375 = vmul.f32 %v1374, 0.3275911
    %v1376 = vadd.f32 %v1375, 1.0
    %v1377 = vrcp.pop %v1376
    %v1378 = vmul.f32 %v1377, 1.0614054
    %v1379 = vadd.f32 %v1378, -1.4531521
    %v1380 = vmul.f32 %v1379, %v1377
    %v1381 = vadd.f32 %v1380, 1.4214138
    %v1382 = vmul.f32 %v1381, %v1377
    %v1383 = vadd.f32 %v1382, -0.28449672
    %v1384 = vmul.f32 %v1383, %v1377
    %v1385 = vadd.f32 %v1384, 0.2548296
    %v1386 = vmul.f32 %v1385, %v1377
    %v1387 = vsub.f32 0.0, %v1374
    %v1388 = vmul.f32 %v1387, %v1374
    %v1389 = vmul.f32 %v1388, 1.442695
    %v1390 = vpow.pop %v1389
    %v1391 = vmul.f32 %v1386, %v1390
    %v1392 = vsub.f32 1.0, %v1391
    %v1393 = vmul.f32 %v1373, %v1392
    %v1394 = vadd.f32 %v1393, 1.0
    %v1395 = vmul.f32 %v1370, %v1394
    %1396 = vst [vmem:[#allocation2] sm:$0x1] 0.0
    %1397 = vst [vmem:[#allocation2 + $0x9] sm:$0x1] 0.0
    %1398 = vst [vmem:[#allocation2 + $0x1] sm:$0xff] %v1395
    %v1399 = vld [vmem:[#allocation2] ss:$2 sm:$0xf]
    %s1400 = scalar_lea.vmem [#allocation3], 1152
    %v1401 = vld [vmem:[%s1400] sm:$0xff]
    %v1402 = vld [vmem:[%s1400 + $0x8] sm:$0xff]
    %v1403 = vld [vmem:[%s1400 + $0x10] sm:$0xff]
    %v1404 = vld [vmem:[%s1400 + $0x18] sm:$0xff]
    %v1405 = vld [vmem:[%s1400 + $0x20] sm:$0xff]
    %v1406 = vld [vmem:[%s1400 + $0x28] sm:$0xff]
    %v1407 = vld [vmem:[%s1400 + $0x30] sm:$0xff]
    %v1408 = vld [vmem:[%s1400 + $0x38] sm:$0xff]
    %v1409 = vld [vmem:[%s1400 + $0x40] sm:$0xff]
    %v1410 = vld [vmem:[%s1400 + $0x48] sm:$0xff]
    %v1411 = vld [vmem:[%s1400 + $0x50] sm:$0xff]
    %v1412 = vld [vmem:[%s1400 + $0x58] sm:$0xff]
    %v1413 = vld [vmem:[%s1400 + $0x60] sm:$0xff]
    %v1414 = vld [vmem:[%s1400 + $0x68] sm:$0xff]
    %v1415 = vld [vmem:[%s1400 + $0x70] sm:$0xff]
    %v1416 = vld [vmem:[%s1400 + $0x78] sm:$0xff]
    %v1417 = vld [vmem:[%s104] ss:$2 sm:$0xf]
    %s1418 = scalar_lea.vmem [#allocation3], 1280
    %v1419 = vld [vmem:[%s1418] sm:$0xff]
    %v1420 = vld [vmem:[%s1418 + $0x8] sm:$0xff]
    %v1421 = vld [vmem:[%s1418 + $0x10] sm:$0xff]
    %v1422 = vld [vmem:[%s1418 + $0x18] sm:$0xff]
    %v1423 = vld [vmem:[%s1418 + $0x20] sm:$0xff]
    %v1424 = vld [vmem:[%s1418 + $0x28] sm:$0xff]
    %v1425 = vld [vmem:[%s1418 + $0x30] sm:$0xff]
    %v1426 = vld [vmem:[%s1418 + $0x38] sm:$0xff]
    %v1427 = vld [vmem:[%s1418 + $0x40] sm:$0xff]
    %v1428 = vld [vmem:[%s1418 + $0x48] sm:$0xff]
    %v1429 = vld [vmem:[%s1418 + $0x50] sm:$0xff]
    %v1430 = vld [vmem:[%s1418 + $0x58] sm:$0xff]
    %v1431 = vld [vmem:[%s1418 + $0x60] sm:$0xff]
    %v1432 = vld [vmem:[%s1418 + $0x68] sm:$0xff]
    %v1433 = vld [vmem:[%s1418 + $0x70] sm:$0xff]
    %v1434 = vld [vmem:[%s1418 + $0x78] sm:$0xff]
    %1435 = vmatprep.subr.mxu0 0.0
    %1436 = vmatpush1.msra.mxu0 %v1434
    %1437 = vmatprep.subr.mxu0 0.0
    %1438 = vmatpush1.msra.mxu0 %v1433
    %1439 = vmatprep.subr.mxu0 0.0
    %1440 = vmatpush1.msra.mxu0 %v1432
    %1441 = vmatprep.subr.mxu0 0.0
    %1442 = vmatpush1.msra.mxu0 %v1431
    %1443 = vmatprep.subr.mxu0 0.0
    %1444 = vmatpush1.msra.mxu0 %v1430
    %1445 = vmatprep.subr.mxu0 0.0
    %1446 = vmatpush1.msra.mxu0 %v1429
    %1447 = vmatprep.subr.mxu0 0.0
    %1448 = vmatpush1.msra.mxu0 %v1428
    %1449 = vmatprep.subr.mxu0 0.0
    %1450 = vmatpush1.msra.mxu0 %v1427
    %1451 = vmatprep.subr.mxu0 0.0
    %1452 = vmatpush1.msra.mxu0 %v1426
    %1453 = vmatprep.subr.mxu0 0.0
    %1454 = vmatpush1.msra.mxu0 %v1425
    %1455 = vmatprep.subr.mxu0 0.0
    %1456 = vmatpush1.msra.mxu0 %v1424
    %1457 = vmatprep.subr.mxu0 0.0
    %1458 = vmatpush1.msra.mxu0 %v1423
    %1459 = vmatprep.subr.mxu0 0.0
    %1460 = vmatpush1.msra.mxu0 %v1422
    %1461 = vmatprep.subr.mxu0 0.0
    %1462 = vmatpush1.msra.mxu0 %v1421
    %1463 = vmatprep.subr.mxu0 0.0
    %1464 = vmatpush1.msra.mxu0 %v1420
    %1465 = vmatprep.subr.mxu0 0.0
    %1466 = vmatpush1.msra.mxu0 %v1419
    %1467 = vmatprep.subr.mxu0 0.0
    %1468 = vmatpush2.msra.mxu0 0.0
    %1469 = vmatprep.subr.mxu0 0.0
    %1470 = vmatpush2.msra.mxu0 0.0
    %1471 = vmatprep.subr.mxu0 0.0
    %1472 = vmatpush2.msra.mxu0 0.0
    %1473 = vmatprep.subr.mxu0 0.0
    %1474 = vmatpush2.msra.mxu0 0.0
    %1475 = vmatprep.subr.mxu0 0.0
    %1476 = vmatpush2.msra.mxu0 0.0
    %1477 = vmatprep.subr.mxu0 0.0
    %1478 = vmatpush2.msra.mxu0 0.0
    %1479 = vmatprep.subr.mxu0 0.0
    %1480 = vmatpush2.msra.mxu0 0.0
    %1481 = vmatprep.subr.mxu0 0.0
    %1482 = vmatpush2.msra.mxu0 0.0
    %1483 = vmatprep.subr.mxu0 0.0
    %1484 = vmatpush2.msra.mxu0 0.0
    %1485 = vmatprep.subr.mxu0 0.0
    %1486 = vmatpush2.msra.mxu0 0.0
    %1487 = vmatprep.subr.mxu0 0.0
    %1488 = vmatpush2.msra.mxu0 0.0
    %1489 = vmatprep.subr.mxu0 0.0
    %1490 = vmatpush2.msra.mxu0 0.0
    %1491 = vmatprep.subr.mxu0 0.0
    %1492 = vmatpush2.msra.mxu0 0.0
    %1493 = vmatprep.subr.mxu0 0.0
    %1494 = vmatpush2.msra.mxu0 0.0
    %1495 = vmatprep.subr.mxu0 0.0
    %1496 = vmatpush2.msra.mxu0 0.0
    %1497 = vmatprep.subr.mxu0 0.0
    %1498 = vmatpush2.msra.mxu0 0.0
    %1499 = vmatprep.mubr.f32.mxu0 0.0
    %1500 = vmatmul.mubr.f32.gmra.mxu0 %v1417
    %v1501 = vpop.f32.mrf.mxu0
    %v1502 = vadd.f32 0.0, %v1501
    %v1503 = vpop.f32.mrf.mxu0
    %1504 = vdwg.mxu0
    %1505 = vmatprep.subr.mxu0 0.0
    %1506 = vmatpush1.msra.mxu0 %v1416
    %1507 = vmatprep.subr.mxu0 0.0
    %1508 = vmatpush1.msra.mxu0 %v1415
    %1509 = vmatprep.subr.mxu0 0.0
    %1510 = vmatpush1.msra.mxu0 %v1414
    %1511 = vmatprep.subr.mxu0 0.0
    %1512 = vmatpush1.msra.mxu0 %v1413
    %1513 = vmatprep.subr.mxu0 0.0
    %1514 = vmatpush1.msra.mxu0 %v1412
    %1515 = vmatprep.subr.mxu0 0.0
    %1516 = vmatpush1.msra.mxu0 %v1411
    %1517 = vmatprep.subr.mxu0 0.0
    %1518 = vmatpush1.msra.mxu0 %v1410
    %1519 = vmatprep.subr.mxu0 0.0
    %1520 = vmatpush1.msra.mxu0 %v1409
    %1521 = vmatprep.subr.mxu0 0.0
    %1522 = vmatpush1.msra.mxu0 %v1408
    %1523 = vmatprep.subr.mxu0 0.0
    %1524 = vmatpush1.msra.mxu0 %v1407
    %1525 = vmatprep.subr.mxu0 0.0
    %1526 = vmatpush1.msra.mxu0 %v1406
    %1527 = vmatprep.subr.mxu0 0.0
    %1528 = vmatpush1.msra.mxu0 %v1405
    %1529 = vmatprep.subr.mxu0 0.0
    %1530 = vmatpush1.msra.mxu0 %v1404
    %1531 = vmatprep.subr.mxu0 0.0
    %1532 = vmatpush1.msra.mxu0 %v1403
    %1533 = vmatprep.subr.mxu0 0.0
    %1534 = vmatpush1.msra.mxu0 %v1402
    %1535 = vmatprep.subr.mxu0 0.0
    %1536 = vmatpush1.msra.mxu0 %v1401
    %1537 = vmatprep.subr.mxu0 0.0
    %1538 = vmatpush2.msra.mxu0 0.0
    %1539 = vmatprep.subr.mxu0 0.0
    %1540 = vmatpush2.msra.mxu0 0.0
    %1541 = vmatprep.subr.mxu0 0.0
    %1542 = vmatpush2.msra.mxu0 0.0
    %1543 = vmatprep.subr.mxu0 0.0
    %1544 = vmatpush2.msra.mxu0 0.0
    %1545 = vmatprep.subr.mxu0 0.0
    %1546 = vmatpush2.msra.mxu0 0.0
    %1547 = vmatprep.subr.mxu0 0.0
    %1548 = vmatpush2.msra.mxu0 0.0
    %1549 = vmatprep.subr.mxu0 0.0
    %1550 = vmatpush2.msra.mxu0 0.0
    %1551 = vmatprep.subr.mxu0 0.0
    %1552 = vmatpush2.msra.mxu0 0.0
    %1553 = vmatprep.subr.mxu0 0.0
    %1554 = vmatpush2.msra.mxu0 0.0
    %1555 = vmatprep.subr.mxu0 0.0
    %1556 = vmatpush2.msra.mxu0 0.0
    %1557 = vmatprep.subr.mxu0 0.0
    %1558 = vmatpush2.msra.mxu0 0.0
    %1559 = vmatprep.subr.mxu0 0.0
    %1560 = vmatpush2.msra.mxu0 0.0
    %1561 = vmatprep.subr.mxu0 0.0
    %1562 = vmatpush2.msra.mxu0 0.0
    %1563 = vmatprep.subr.mxu0 0.0
    %1564 = vmatpush2.msra.mxu0 0.0
    %1565 = vmatprep.subr.mxu0 0.0
    %1566 = vmatpush2.msra.mxu0 0.0
    %1567 = vmatprep.subr.mxu0 0.0
    %1568 = vmatpush2.msra.mxu0 0.0
    %1569 = vmatprep.mubr.f32.mxu0 0.0
    %1570 = vmatmul.mubr.f32.gmra.mxu0 %v1399
    %v1571 = vpop.f32.mrf.mxu0
    %v1572 = vadd.f32 %v1502, %v1571
    %v1573 = vpop.f32.mrf.mxu0
    %1574 = vdwg.mxu0
    %v1575 = vld [vmem:[%s815] ss:$2 sm:$0xf]
    %s1576 = scalar_lea.vmem [#allocation3], 1408
    %v1577 = vld [vmem:[%s1576] sm:$0xff]
    %v1578 = vld [vmem:[%s1576 + $0x8] sm:$0xff]
    %v1579 = vld [vmem:[%s1576 + $0x10] sm:$0xff]
    %v1580 = vld [vmem:[%s1576 + $0x18] sm:$0xff]
    %v1581 = vld [vmem:[%s1576 + $0x20] sm:$0xff]
    %v1582 = vld [vmem:[%s1576 + $0x28] sm:$0xff]
    %v1583 = vld [vmem:[%s1576 + $0x30] sm:$0xff]
    %v1584 = vld [vmem:[%s1576 + $0x38] sm:$0xff]
    %v1585 = vld [vmem:[%s1576 + $0x40] sm:$0xff]
    %v1586 = vld [vmem:[%s1576 + $0x48] sm:$0xff]
    %v1587 = vld [vmem:[%s1576 + $0x50] sm:$0xff]
    %v1588 = vld [vmem:[%s1576 + $0x58] sm:$0xff]
    %v1589 = vld [vmem:[%s1576 + $0x60] sm:$0xff]
    %v1590 = vld [vmem:[%s1576 + $0x68] sm:$0xff]
    %v1591 = vld [vmem:[%s1576 + $0x70] sm:$0xff]
    %v1592 = vld [vmem:[%s1576 + $0x78] sm:$0xff]
    %1593 = vmatprep.subr.mxu0 0.0
    %1594 = vmatpush1.msra.mxu0 %v1592
    %1595 = vmatprep.subr.mxu0 0.0
    %1596 = vmatpush1.msra.mxu0 %v1591
    %1597 = vmatprep.subr.mxu0 0.0
    %1598 = vmatpush1.msra.mxu0 %v1590
    %1599 = vmatprep.subr.mxu0 0.0
    %1600 = vmatpush1.msra.mxu0 %v1589
    %1601 = vmatprep.subr.mxu0 0.0
    %1602 = vmatpush1.msra.mxu0 %v1588
    %1603 = vmatprep.subr.mxu0 0.0
    %1604 = vmatpush1.msra.mxu0 %v1587
    %1605 = vmatprep.subr.mxu0 0.0
    %1606 = vmatpush1.msra.mxu0 %v1586
    %1607 = vmatprep.subr.mxu0 0.0
    %1608 = vmatpush1.msra.mxu0 %v1585
    %1609 = vmatprep.subr.mxu0 0.0
    %1610 = vmatpush1.msra.mxu0 %v1584
    %1611 = vmatprep.subr.mxu0 0.0
    %1612 = vmatpush1.msra.mxu0 %v1583
    %1613 = vmatprep.subr.mxu0 0.0
    %1614 = vmatpush1.msra.mxu0 %v1582
    %1615 = vmatprep.subr.mxu0 0.0
    %1616 = vmatpush1.msra.mxu0 %v1581
    %1617 = vmatprep.subr.mxu0 0.0
    %1618 = vmatpush1.msra.mxu0 %v1580
    %1619 = vmatprep.subr.mxu0 0.0
    %1620 = vmatpush1.msra.mxu0 %v1579
    %1621 = vmatprep.subr.mxu0 0.0
    %1622 = vmatpush1.msra.mxu0 %v1578
    %1623 = vmatprep.subr.mxu0 0.0
    %1624 = vmatpush1.msra.mxu0 %v1577
    %1625 = vmatprep.subr.mxu0 0.0
    %1626 = vmatpush2.msra.mxu0 0.0
    %1627 = vmatprep.subr.mxu0 0.0
    %1628 = vmatpush2.msra.mxu0 0.0
    %1629 = vmatprep.subr.mxu0 0.0
    %1630 = vmatpush2.msra.mxu0 0.0
    %1631 = vmatprep.subr.mxu0 0.0
    %1632 = vmatpush2.msra.mxu0 0.0
    %1633 = vmatprep.subr.mxu0 0.0
    %1634 = vmatpush2.msra.mxu0 0.0
    %1635 = vmatprep.subr.mxu0 0.0
    %1636 = vmatpush2.msra.mxu0 0.0
    %1637 = vmatprep.subr.mxu0 0.0
    %1638 = vmatpush2.msra.mxu0 0.0
    %1639 = vmatprep.subr.mxu0 0.0
    %1640 = vmatpush2.msra.mxu0 0.0
    %1641 = vmatprep.subr.mxu0 0.0
    %1642 = vmatpush2.msra.mxu0 0.0
    %1643 = vmatprep.subr.mxu0 0.0
    %1644 = vmatpush2.msra.mxu0 0.0
    %1645 = vmatprep.subr.mxu0 0.0
    %1646 = vmatpush2.msra.mxu0 0.0
    %1647 = vmatprep.subr.mxu0 0.0
    %1648 = vmatpush2.msra.mxu0 0.0
    %1649 = vmatprep.subr.mxu0 0.0
    %1650 = vmatpush2.msra.mxu0 0.0
    %1651 = vmatprep.subr.mxu0 0.0
    %1652 = vmatpush2.msra.mxu0 0.0
    %1653 = vmatprep.subr.mxu0 0.0
    %1654 = vmatpush2.msra.mxu0 0.0
    %1655 = vmatprep.subr.mxu0 0.0
    %1656 = vmatpush2.msra.mxu0 0.0
    %1657 = vmatprep.mubr.f32.mxu0 0.0
    %1658 = vmatmul.mubr.f32.gmra.mxu0 %v1575
    %v1659 = vpop.f32.mrf.mxu0
    %v1660 = vadd.f32 0.0, %v1659
    %v1661 = vpop.f32.mrf.mxu0
    %1662 = vdwg.mxu0
    %v1663 = vadd.f32 %v1572, %v1660
    %s1664 = scalar_lea.vmem [#allocation5], 12
    %v1665 = vld [vmem:[%s1664] sm:$0x1]
    %v1666 = vlaneseq
    %v1667 = vshrl.u32 %v1666, 7
    %v1668 = vsub.s32 0, %v1667
    %v1669 = vrot.slane %v1665, %v1668
    %v1670 = vadd.f32 %v1663, %v1669
    %vm1671 = vcmask 1043456
    %v1672 = vsel %vm1671, %v1670, 0.0
    %v1673 = vrot.slane %v1672, 4
    %v1674 = vadd.f32 %v1672, %v1673
    %v1675 = vrot.slane %v1674, 2
    %v1676 = vadd.f32 %v1674, %v1675
    %v1677 = vrot.slane %v1676, 1
    %v1678 = vadd.f32 %v1676, %v1677
    %1680 = vrot.lane.b32.xlu0 %v1678, 127
    %v1681 = vpop.permute.xlu0 %1680
    %1683 = vrot.lane.b32.xlu0 %v1678, 1
    %v1684 = vpop.permute.xlu0 %1683
    %v1686 = vsel %vm452, %v1681, %v1684
    %v1687 = vadd.f32 %v1678, %v1686
    %v1688 = vmul.f32 %v1687, 0.125
    %v1689 = vlaneseq
    %v1690 = vshrl.u32 %v1689, 7
    %v1691 = vsub.s32 0, %v1690
    %v1692 = vrot.slane %v1688, %v1691
    %v1693 = vsub.f32 %v1670, %v1692
    %v1694 = vmul.f32 %v1693, %v1693
    %v1695 = vsel %vm1671, %v1694, 0.0
    %v1696 = vrot.slane %v1695, 4
    %v1697 = vadd.f32 %v1695, %v1696
    %v1698 = vrot.slane %v1697, 2
    %v1699 = vadd.f32 %v1697, %v1698
    %v1700 = vrot.slane %v1699, 1
    %v1701 = vadd.f32 %v1699, %v1700
    %1703 = vrot.lane.b32.xlu0 %v1701, 127
    %v1704 = vpop.permute.xlu0 %1703
    %1706 = vrot.lane.b32.xlu0 %v1701, 1
    %v1707 = vpop.permute.xlu0 %1706
    %v1709 = vsel %vm452, %v1704, %v1707
    %v1710 = vadd.f32 %v1701, %v1709
    %v1711 = vmul.f32 %v1710, 0.125
    %v1712 = vadd.f32 %v1711, 1e-05
    %v1713 = vrsqrt.pop %v1712
    %v1714 = vlaneseq
    %v1715 = vshrl.u32 %v1714, 7
    %v1716 = vsub.s32 0, %v1715
    %v1717 = vrot.slane %v1713, %v1716
    %v1718 = vmul.f32 %v1693, %v1717
    %v1719 = vld [vmem:[%s1664 + $0x1] sm:$0x1]
    %v1720 = vlaneseq
    %v1721 = vshrl.u32 %v1720, 7
    %v1722 = vsub.s32 0, %v1721
    %v1723 = vrot.slane %v1719, %v1722
    %v1724 = vmul.f32 %v1718, %v1723
    %v1725 = vld [vmem:[%s1664 + $0x2] sm:$0x1]
    %v1726 = vlaneseq
    %v1727 = vshrl.u32 %v1726, 7
    %v1728 = vsub.s32 0, %v1727
    %v1729 = vrot.slane %v1725, %v1728
    %v1730 = vadd.f32 %v1724, %v1729
    %v1731 = vmul.f32 %v1730, 0.5
    %v1732 = vmul.f32 %v1730, 0.70710677
    %vm1733 = vcmp.ge.f32.partialorder %v1732, 0.0
    %v1734 = vsel %vm1733, 1.0, -1.0
    %v1735 = vand.u32 2147483647, %v1732
    %v1736 = vmul.f32 %v1735, 0.3275911
    %v1737 = vadd.f32 %v1736, 1.0
    %v1738 = vrcp.pop %v1737
    %v1739 = vmul.f32 %v1738, 1.0614054
    %v1740 = vadd.f32 %v1739, -1.4531521
    %v1741 = vmul.f32 %v1740, %v1738
    %v1742 = vadd.f32 %v1741, 1.4214138
    %v1743 = vmul.f32 %v1742, %v1738
    %v1744 = vadd.f32 %v1743, -0.28449672
    %v1745 = vmul.f32 %v1744, %v1738
    %v1746 = vadd.f32 %v1745, 0.2548296
    %v1747 = vmul.f32 %v1746, %v1738
    %v1748 = vsub.f32 0.0, %v1735
    %v1749 = vmul.f32 %v1748, %v1735
    %v1750 = vmul.f32 %v1749, 1.442695
    %v1751 = vpow.pop %v1750
    %v1752 = vmul.f32 %v1747, %v1751
    %v1753 = vsub.f32 1.0, %v1752
    %v1754 = vmul.f32 %v1734, %v1753
    %v1755 = vadd.f32 %v1754, 1.0
    %v1756 = vmul.f32 %v1731, %v1755
    %1757 = vst [vmem:[#allocation2] sm:$0x1] 0.0
    %1758 = vst [vmem:[#allocation2 + $0x5] sm:$0x1] 0.0
    %1759 = vst [vmem:[#allocation2 + $0x1] sm:$0xf] %v1756
    %v1760 = vld [vmem:[#allocation2] ss:$2 sm:$0x3]
    %s1761 = scalar_lea.vmem [#allocation3], 1536
    %v1762 = vld [vmem:[%s1761] sm:$0xff]
    %v1763 = vld [vmem:[%s1761 + $0x8] sm:$0xff]
    %v1764 = vld [vmem:[%s1761 + $0x10] sm:$0xff]
    %v1765 = vld [vmem:[%s1761 + $0x18] sm:$0xff]
    %v1766 = vld [vmem:[%s1761 + $0x20] sm:$0xff]
    %v1767 = vld [vmem:[%s1761 + $0x28] sm:$0xff]
    %v1768 = vld [vmem:[%s1761 + $0x30] sm:$0xff]
    %v1769 = vld [vmem:[%s1761 + $0x38] sm:$0xff]
    %v1770 = vld [vmem:[%s1761 + $0x40] sm:$0xff]
    %v1771 = vld [vmem:[%s1761 + $0x48] sm:$0xff]
    %v1772 = vld [vmem:[%s1761 + $0x50] sm:$0xff]
    %v1773 = vld [vmem:[%s1761 + $0x58] sm:$0xff]
    %v1774 = vld [vmem:[%s1761 + $0x60] sm:$0xff]
    %v1775 = vld [vmem:[%s1761 + $0x68] sm:$0xff]
    %v1776 = vld [vmem:[%s1761 + $0x70] sm:$0xff]
    %v1777 = vld [vmem:[%s1761 + $0x78] sm:$0xff]
    %v1778 = vld [vmem:[%s104] ss:$2 sm:$0x3]
    %s1779 = scalar_lea.vmem [#allocation3], 1664
    %v1780 = vld [vmem:[%s1779] sm:$0xff]
    %v1781 = vld [vmem:[%s1779 + $0x8] sm:$0xff]
    %v1782 = vld [vmem:[%s1779 + $0x10] sm:$0xff]
    %v1783 = vld [vmem:[%s1779 + $0x18] sm:$0xff]
    %v1784 = vld [vmem:[%s1779 + $0x20] sm:$0xff]
    %v1785 = vld [vmem:[%s1779 + $0x28] sm:$0xff]
    %v1786 = vld [vmem:[%s1779 + $0x30] sm:$0xff]
    %v1787 = vld [vmem:[%s1779 + $0x38] sm:$0xff]
    %v1788 = vld [vmem:[%s1779 + $0x40] sm:$0xff]
    %v1789 = vld [vmem:[%s1779 + $0x48] sm:$0xff]
    %v1790 = vld [vmem:[%s1779 + $0x50] sm:$0xff]
    %v1791 = vld [vmem:[%s1779 + $0x58] sm:$0xff]
    %v1792 = vld [vmem:[%s1779 + $0x60] sm:$0xff]
    %v1793 = vld [vmem:[%s1779 + $0x68] sm:$0xff]
    %v1794 = vld [vmem:[%s1779 + $0x70] sm:$0xff]
    %v1795 = vld [vmem:[%s1779 + $0x78] sm:$0xff]
    %1796 = vmatprep.subr.mxu0 0.0
    %1797 = vmatpush1.msra.mxu0 %v1795
    %1798 = vmatprep.subr.mxu0 0.0
    %1799 = vmatpush1.msra.mxu0 %v1794
    %1800 = vmatprep.subr.mxu0 0.0
    %1801 = vmatpush1.msra.mxu0 %v1793
    %1802 = vmatprep.subr.mxu0 0.0
    %1803 = vmatpush1.msra.mxu0 %v1792
    %1804 = vmatprep.subr.mxu0 0.0
    %1805 = vmatpush1.msra.mxu0 %v1791
    %1806 = vmatprep.subr.mxu0 0.0
    %1807 = vmatpush1.msra.mxu0 %v1790
    %1808 = vmatprep.subr.mxu0 0.0
    %1809 = vmatpush1.msra.mxu0 %v1789
    %1810 = vmatprep.subr.mxu0 0.0
    %1811 = vmatpush1.msra.mxu0 %v1788
    %1812 = vmatprep.subr.mxu0 0.0
    %1813 = vmatpush1.msra.mxu0 %v1787
    %1814 = vmatprep.subr.mxu0 0.0
    %1815 = vmatpush1.msra.mxu0 %v1786
    %1816 = vmatprep.subr.mxu0 0.0
    %1817 = vmatpush1.msra.mxu0 %v1785
    %1818 = vmatprep.subr.mxu0 0.0
    %1819 = vmatpush1.msra.mxu0 %v1784
    %1820 = vmatprep.subr.mxu0 0.0
    %1821 = vmatpush1.msra.mxu0 %v1783
    %1822 = vmatprep.subr.mxu0 0.0
    %1823 = vmatpush1.msra.mxu0 %v1782
    %1824 = vmatprep.subr.mxu0 0.0
    %1825 = vmatpush1.msra.mxu0 %v1781
    %1826 = vmatprep.subr.mxu0 0.0
    %1827 = vmatpush1.msra.mxu0 %v1780
    %1828 = vmatprep.subr.mxu0 0.0
    %1829 = vmatpush2.msra.mxu0 0.0
    %1830 = vmatprep.subr.mxu0 0.0
    %1831 = vmatpush2.msra.mxu0 0.0
    %1832 = vmatprep.subr.mxu0 0.0
    %1833 = vmatpush2.msra.mxu0 0.0
    %1834 = vmatprep.subr.mxu0 0.0
    %1835 = vmatpush2.msra.mxu0 0.0
    %1836 = vmatprep.subr.mxu0 0.0
    %1837 = vmatpush2.msra.mxu0 0.0
    %1838 = vmatprep.subr.mxu0 0.0
    %1839 = vmatpush2.msra.mxu0 0.0
    %1840 = vmatprep.subr.mxu0 0.0
    %1841 = vmatpush2.msra.mxu0 0.0
    %1842 = vmatprep.subr.mxu0 0.0
    %1843 = vmatpush2.msra.mxu0 0.0
    %1844 = vmatprep.subr.mxu0 0.0
    %1845 = vmatpush2.msra.mxu0 0.0
    %1846 = vmatprep.subr.mxu0 0.0
    %1847 = vmatpush2.msra.mxu0 0.0
    %1848 = vmatprep.subr.mxu0 0.0
    %1849 = vmatpush2.msra.mxu0 0.0
    %1850 = vmatprep.subr.mxu0 0.0
    %1851 = vmatpush2.msra.mxu0 0.0
    %1852 = vmatprep.subr.mxu0 0.0
    %1853 = vmatpush2.msra.mxu0 0.0
    %1854 = vmatprep.subr.mxu0 0.0
    %1855 = vmatpush2.msra.mxu0 0.0
    %1856 = vmatprep.subr.mxu0 0.0
    %1857 = vmatpush2.msra.mxu0 0.0
    %1858 = vmatprep.subr.mxu0 0.0
    %1859 = vmatpush2.msra.mxu0 0.0
    %1860 = vmatprep.mubr.f32.mxu0 0.0
    %1861 = vmatmul.mubr.f32.gmra.mxu0 %v1778
    %v1862 = vpop.f32.mrf.mxu0
    %v1863 = vadd.f32 0.0, %v1862
    %v1864 = vpop.f32.mrf.mxu0
    %1865 = vdwg.mxu0
    %1866 = vmatprep.subr.mxu0 0.0
    %1867 = vmatpush1.msra.mxu0 %v1777
    %1868 = vmatprep.subr.mxu0 0.0
    %1869 = vmatpush1.msra.mxu0 %v1776
    %1870 = vmatprep.subr.mxu0 0.0
    %1871 = vmatpush1.msra.mxu0 %v1775
    %1872 = vmatprep.subr.mxu0 0.0
    %1873 = vmatpush1.msra.mxu0 %v1774
    %1874 = vmatprep.subr.mxu0 0.0
    %1875 = vmatpush1.msra.mxu0 %v1773
    %1876 = vmatprep.subr.mxu0 0.0
    %1877 = vmatpush1.msra.mxu0 %v1772
    %1878 = vmatprep.subr.mxu0 0.0
    %1879 = vmatpush1.msra.mxu0 %v1771
    %1880 = vmatprep.subr.mxu0 0.0
    %1881 = vmatpush1.msra.mxu0 %v1770
    %1882 = vmatprep.subr.mxu0 0.0
    %1883 = vmatpush1.msra.mxu0 %v1769
    %1884 = vmatprep.subr.mxu0 0.0
    %1885 = vmatpush1.msra.mxu0 %v1768
    %1886 = vmatprep.subr.mxu0 0.0
    %1887 = vmatpush1.msra.mxu0 %v1767
    %1888 = vmatprep.subr.mxu0 0.0
    %1889 = vmatpush1.msra.mxu0 %v1766
    %1890 = vmatprep.subr.mxu0 0.0
    %1891 = vmatpush1.msra.mxu0 %v1765
    %1892 = vmatprep.subr.mxu0 0.0
    %1893 = vmatpush1.msra.mxu0 %v1764
    %1894 = vmatprep.subr.mxu0 0.0
    %1895 = vmatpush1.msra.mxu0 %v1763
    %1896 = vmatprep.subr.mxu0 0.0
    %1897 = vmatpush1.msra.mxu0 %v1762
    %1898 = vmatprep.subr.mxu0 0.0
    %1899 = vmatpush2.msra.mxu0 0.0
    %1900 = vmatprep.subr.mxu0 0.0
    %1901 = vmatpush2.msra.mxu0 0.0
    %1902 = vmatprep.subr.mxu0 0.0
    %1903 = vmatpush2.msra.mxu0 0.0
    %1904 = vmatprep.subr.mxu0 0.0
    %1905 = vmatpush2.msra.mxu0 0.0
    %1906 = vmatprep.subr.mxu0 0.0
    %1907 = vmatpush2.msra.mxu0 0.0
    %1908 = vmatprep.subr.mxu0 0.0
    %1909 = vmatpush2.msra.mxu0 0.0
    %1910 = vmatprep.subr.mxu0 0.0
    %1911 = vmatpush2.msra.mxu0 0.0
    %1912 = vmatprep.subr.mxu0 0.0
    %1913 = vmatpush2.msra.mxu0 0.0
    %1914 = vmatprep.subr.mxu0 0.0
    %1915 = vmatpush2.msra.mxu0 0.0
    %1916 = vmatprep.subr.mxu0 0.0
    %1917 = vmatpush2.msra.mxu0 0.0
    %1918 = vmatprep.subr.mxu0 0.0
    %1919 = vmatpush2.msra.mxu0 0.0
    %1920 = vmatprep.subr.mxu0 0.0
    %1921 = vmatpush2.msra.mxu0 0.0
    %1922 = vmatprep.subr.mxu0 0.0
    %1923 = vmatpush2.msra.mxu0 0.0
    %1924 = vmatprep.subr.mxu0 0.0
    %1925 = vmatpush2.msra.mxu0 0.0
    %1926 = vmatprep.subr.mxu0 0.0
    %1927 = vmatpush2.msra.mxu0 0.0
    %1928 = vmatprep.subr.mxu0 0.0
    %1929 = vmatpush2.msra.mxu0 0.0
    %1930 = vmatprep.mubr.f32.mxu0 0.0
    %1931 = vmatmul.mubr.f32.gmra.mxu0 %v1760
    %v1932 = vpop.f32.mrf.mxu0
    %v1933 = vadd.f32 %v1863, %v1932
    %v1934 = vpop.f32.mrf.mxu0
    %1935 = vdwg.mxu0
    %v1936 = vld [vmem:[%s815] ss:$2 sm:$0x3]
    %s1937 = scalar_lea.vmem [#allocation3], 1792
    %v1938 = vld [vmem:[%s1937] sm:$0xff]
    %v1939 = vld [vmem:[%s1937 + $0x8] sm:$0xff]
    %v1940 = vld [vmem:[%s1937 + $0x10] sm:$0xff]
    %v1941 = vld [vmem:[%s1937 + $0x18] sm:$0xff]
    %v1942 = vld [vmem:[%s1937 + $0x20] sm:$0xff]
    %v1943 = vld [vmem:[%s1937 + $0x28] sm:$0xff]
    %v1944 = vld [vmem:[%s1937 + $0x30] sm:$0xff]
    %v1945 = vld [vmem:[%s1937 + $0x38] sm:$0xff]
    %v1946 = vld [vmem:[%s1937 + $0x40] sm:$0xff]
    %v1947 = vld [vmem:[%s1937 + $0x48] sm:$0xff]
    %v1948 = vld [vmem:[%s1937 + $0x50] sm:$0xff]
    %v1949 = vld [vmem:[%s1937 + $0x58] sm:$0xff]
    %v1950 = vld [vmem:[%s1937 + $0x60] sm:$0xff]
    %v1951 = vld [vmem:[%s1937 + $0x68] sm:$0xff]
    %v1952 = vld [vmem:[%s1937 + $0x70] sm:$0xff]
    %v1953 = vld [vmem:[%s1937 + $0x78] sm:$0xff]
    %1954 = vmatprep.subr.mxu0 0.0
    %1955 = vmatpush1.msra.mxu0 %v1953
    %1956 = vmatprep.subr.mxu0 0.0
    %1957 = vmatpush1.msra.mxu0 %v1952
    %1958 = vmatprep.subr.mxu0 0.0
    %1959 = vmatpush1.msra.mxu0 %v1951
    %1960 = vmatprep.subr.mxu0 0.0
    %1961 = vmatpush1.msra.mxu0 %v1950
    %1962 = vmatprep.subr.mxu0 0.0
    %1963 = vmatpush1.msra.mxu0 %v1949
    %1964 = vmatprep.subr.mxu0 0.0
    %1965 = vmatpush1.msra.mxu0 %v1948
    %1966 = vmatprep.subr.mxu0 0.0
    %1967 = vmatpush1.msra.mxu0 %v1947
    %1968 = vmatprep.subr.mxu0 0.0
    %1969 = vmatpush1.msra.mxu0 %v1946
    %1970 = vmatprep.subr.mxu0 0.0
    %1971 = vmatpush1.msra.mxu0 %v1945
    %1972 = vmatprep.subr.mxu0 0.0
    %1973 = vmatpush1.msra.mxu0 %v1944
    %1974 = vmatprep.subr.mxu0 0.0
    %1975 = vmatpush1.msra.mxu0 %v1943
    %1976 = vmatprep.subr.mxu0 0.0
    %1977 = vmatpush1.msra.mxu0 %v1942
    %1978 = vmatprep.subr.mxu0 0.0
    %1979 = vmatpush1.msra.mxu0 %v1941
    %1980 = vmatprep.subr.mxu0 0.0
    %1981 = vmatpush1.msra.mxu0 %v1940
    %1982 = vmatprep.subr.mxu0 0.0
    %1983 = vmatpush1.msra.mxu0 %v1939
    %1984 = vmatprep.subr.mxu0 0.0
    %1985 = vmatpush1.msra.mxu0 %v1938
    %1986 = vmatprep.subr.mxu0 0.0
    %1987 = vmatpush2.msra.mxu0 0.0
    %1988 = vmatprep.subr.mxu0 0.0
    %1989 = vmatpush2.msra.mxu0 0.0
    %1990 = vmatprep.subr.mxu0 0.0
    %1991 = vmatpush2.msra.mxu0 0.0
    %1992 = vmatprep.subr.mxu0 0.0
    %1993 = vmatpush2.msra.mxu0 0.0
    %1994 = vmatprep.subr.mxu0 0.0
    %1995 = vmatpush2.msra.mxu0 0.0
    %1996 = vmatprep.subr.mxu0 0.0
    %1997 = vmatpush2.msra.mxu0 0.0
    %1998 = vmatprep.subr.mxu0 0.0
    %1999 = vmatpush2.msra.mxu0 0.0
    %2000 = vmatprep.subr.mxu0 0.0
    %2001 = vmatpush2.msra.mxu0 0.0
    %2002 = vmatprep.subr.mxu0 0.0
    %2003 = vmatpush2.msra.mxu0 0.0
    %2004 = vmatprep.subr.mxu0 0.0
    %2005 = vmatpush2.msra.mxu0 0.0
    %2006 = vmatprep.subr.mxu0 0.0
    %2007 = vmatpush2.msra.mxu0 0.0
    %2008 = vmatprep.subr.mxu0 0.0
    %2009 = vmatpush2.msra.mxu0 0.0
    %2010 = vmatprep.subr.mxu0 0.0
    %2011 = vmatpush2.msra.mxu0 0.0
    %2012 = vmatprep.subr.mxu0 0.0
    %2013 = vmatpush2.msra.mxu0 0.0
    %2014 = vmatprep.subr.mxu0 0.0
    %2015 = vmatpush2.msra.mxu0 0.0
    %2016 = vmatprep.subr.mxu0 0.0
    %2017 = vmatpush2.msra.mxu0 0.0
    %2018 = vmatprep.mubr.f32.mxu0 0.0
    %2019 = vmatmul.mubr.f32.gmra.mxu0 %v1936
    %v2020 = vpop.f32.mrf.mxu0
    %v2021 = vadd.f32 0.0, %v2020
    %v2022 = vpop.f32.mrf.mxu0
    %2023 = vdwg.mxu0
    %v2024 = vadd.f32 %v1933, %v2021
    %s2025 = scalar_lea.vmem [#allocation5], 16
    %v2026 = vld [vmem:[%s2025] sm:$0x1]
    %v2027 = vlaneseq
    %v2028 = vshrl.u32 %v2027, 7
    %v2029 = vsub.s32 0, %v2028
    %v2030 = vrot.slane %v2026, %v2029
    %v2031 = vadd.f32 %v2024, %v2030
    %vm2032 = vcmask 1041408
    %v2033 = vsel %vm2032, %v2031, 0.0
    %v2034 = vrot.slane %v2033, 4
    %v2035 = vadd.f32 %v2033, %v2034
    %v2036 = vrot.slane %v2035, 2
    %v2037 = vadd.f32 %v2035, %v2036
    %v2038 = vrot.slane %v2037, 1
    %v2039 = vadd.f32 %v2037, %v2038
    %2041 = vrot.lane.b32.xlu0 %v2039, 127
    %v2042 = vpop.permute.xlu0 %2041
    %2044 = vrot.lane.b32.xlu0 %v2039, 1
    %v2045 = vpop.permute.xlu0 %2044
    %v2047 = vsel %vm452, %v2042, %v2045
    %v2048 = vadd.f32 %v2039, %v2047
    %v2049 = vmul.f32 %v2048, 0.25
    %v2050 = vlaneseq
    %v2051 = vshrl.u32 %v2050, 7
    %v2052 = vsub.s32 0, %v2051
    %v2053 = vrot.slane %v2049, %v2052
    %v2054 = vsub.f32 %v2031, %v2053
    %v2055 = vmul.f32 %v2054, %v2054
    %v2056 = vsel %vm2032, %v2055, 0.0
    %v2057 = vrot.slane %v2056, 4
    %v2058 = vadd.f32 %v2056, %v2057
    %v2059 = vrot.slane %v2058, 2
    %v2060 = vadd.f32 %v2058, %v2059
    %v2061 = vrot.slane %v2060, 1
    %v2062 = vadd.f32 %v2060, %v2061
    %2064 = vrot.lane.b32.xlu0 %v2062, 127
    %v2065 = vpop.permute.xlu0 %2064
    %2067 = vrot.lane.b32.xlu0 %v2062, 1
    %v2068 = vpop.permute.xlu0 %2067
    %v2070 = vsel %vm452, %v2065, %v2068
    %v2071 = vadd.f32 %v2062, %v2070
    %v2072 = vmul.f32 %v2071, 0.25
    %v2073 = vadd.f32 %v2072, 1e-05
    %v2074 = vrsqrt.pop %v2073
    %v2075 = vlaneseq
    %v2076 = vshrl.u32 %v2075, 7
    %v2077 = vsub.s32 0, %v2076
    %v2078 = vrot.slane %v2074, %v2077
    %v2079 = vmul.f32 %v2054, %v2078
    %v2080 = vld [vmem:[%s2025 + $0x1] sm:$0x1]
    %v2081 = vlaneseq
    %v2082 = vshrl.u32 %v2081, 7
    %v2083 = vsub.s32 0, %v2082
    %v2084 = vrot.slane %v2080, %v2083
    %v2085 = vmul.f32 %v2079, %v2084
    %v2086 = vld [vmem:[%s2025 + $0x2] sm:$0x1]
    %v2087 = vlaneseq
    %v2088 = vshrl.u32 %v2087, 7
    %v2089 = vsub.s32 0, %v2088
    %v2090 = vrot.slane %v2086, %v2089
    %v2091 = vadd.f32 %v2085, %v2090
    %v2092 = vmul.f32 %v2091, 0.5
    %v2093 = vmul.f32 %v2091, 0.70710677
    %vm2094 = vcmp.ge.f32.partialorder %v2093, 0.0
    %v2095 = vsel %vm2094, 1.0, -1.0
    %v2096 = vand.u32 2147483647, %v2093
    %v2097 = vmul.f32 %v2096, 0.3275911
    %v2098 = vadd.f32 %v2097, 1.0
    %v2099 = vrcp.pop %v2098
    %v2100 = vmul.f32 %v2099, 1.0614054
    %v2101 = vadd.f32 %v2100, -1.4531521
    %v2102 = vmul.f32 %v2101, %v2099
    %v2103 = vadd.f32 %v2102, 1.4214138
    %v2104 = vmul.f32 %v2103, %v2099
    %v2105 = vadd.f32 %v2104, -0.28449672
    %v2106 = vmul.f32 %v2105, %v2099
    %v2107 = vadd.f32 %v2106, 0.2548296
    %v2108 = vmul.f32 %v2107, %v2099
    %v2109 = vsub.f32 0.0, %v2096
    %v2110 = vmul.f32 %v2109, %v2096
    %v2111 = vmul.f32 %v2110, 1.442695
    %v2112 = vpow.pop %v2111
    %v2113 = vmul.f32 %v2108, %v2112
    %v2114 = vsub.f32 1.0, %v2113
    %v2115 = vmul.f32 %v2095, %v2114
    %v2116 = vadd.f32 %v2115, 1.0
    %v2117 = vmul.f32 %v2092, %v2116
    %2118 = vst [vmem:[#allocation2] sm:$0x1] 0.0
    %2119 = vst [vmem:[#allocation2 + $0x3] sm:$0x1] 0.0
    %2120 = vst [vmem:[#allocation2 + $0x1] sm:$0x3] %v2117
    %v2121 = vld [vmem:[#allocation2] ss:$2 sm:$0x1]
    %s2122 = scalar_lea.vmem [#allocation3], 1920
    %v2123 = vld [vmem:[%s2122] sm:$0xff]
    %v2124 = vld [vmem:[%s2122 + $0x8] sm:$0xff]
    %v2125 = vld [vmem:[%s2122 + $0x10] sm:$0xff]
    %v2126 = vld [vmem:[%s2122 + $0x18] sm:$0xff]
    %v2127 = vld [vmem:[%s2122 + $0x20] sm:$0xff]
    %v2128 = vld [vmem:[%s2122 + $0x28] sm:$0xff]
    %v2129 = vld [vmem:[%s2122 + $0x30] sm:$0xff]
    %v2130 = vld [vmem:[%s2122 + $0x38] sm:$0xff]
    %v2131 = vld [vmem:[%s2122 + $0x40] sm:$0xff]
    %v2132 = vld [vmem:[%s2122 + $0x48] sm:$0xff]
    %v2133 = vld [vmem:[%s2122 + $0x50] sm:$0xff]
    %v2134 = vld [vmem:[%s2122 + $0x58] sm:$0xff]
    %v2135 = vld [vmem:[%s2122 + $0x60] sm:$0xff]
    %v2136 = vld [vmem:[%s2122 + $0x68] sm:$0xff]
    %v2137 = vld [vmem:[%s2122 + $0x70] sm:$0xff]
    %v2138 = vld [vmem:[%s2122 + $0x78] sm:$0xff]
    %v2139 = vld [vmem:[%s104] ss:$2 sm:$0x1]
    %s2140 = scalar_lea.vmem [#allocation3], 2048
    %v2141 = vld [vmem:[%s2140] sm:$0xff]
    %v2142 = vld [vmem:[%s2140 + $0x8] sm:$0xff]
    %v2143 = vld [vmem:[%s2140 + $0x10] sm:$0xff]
    %v2144 = vld [vmem:[%s2140 + $0x18] sm:$0xff]
    %v2145 = vld [vmem:[%s2140 + $0x20] sm:$0xff]
    %v2146 = vld [vmem:[%s2140 + $0x28] sm:$0xff]
    %v2147 = vld [vmem:[%s2140 + $0x30] sm:$0xff]
    %v2148 = vld [vmem:[%s2140 + $0x38] sm:$0xff]
    %v2149 = vld [vmem:[%s2140 + $0x40] sm:$0xff]
    %v2150 = vld [vmem:[%s2140 + $0x48] sm:$0xff]
    %v2151 = vld [vmem:[%s2140 + $0x50] sm:$0xff]
    %v2152 = vld [vmem:[%s2140 + $0x58] sm:$0xff]
    %v2153 = vld [vmem:[%s2140 + $0x60] sm:$0xff]
    %v2154 = vld [vmem:[%s2140 + $0x68] sm:$0xff]
    %v2155 = vld [vmem:[%s2140 + $0x70] sm:$0xff]
    %v2156 = vld [vmem:[%s2140 + $0x78] sm:$0xff]
    %2157 = vmatprep.subr.mxu0 0.0
    %2158 = vmatpush1.msra.mxu0 %v2156
    %2159 = vmatprep.subr.mxu0 0.0
    %2160 = vmatpush1.msra.mxu0 %v2155
    %2161 = vmatprep.subr.mxu0 0.0
    %2162 = vmatpush1.msra.mxu0 %v2154
    %2163 = vmatprep.subr.mxu0 0.0
    %2164 = vmatpush1.msra.mxu0 %v2153
    %2165 = vmatprep.subr.mxu0 0.0
    %2166 = vmatpush1.msra.mxu0 %v2152
    %2167 = vmatprep.subr.mxu0 0.0
    %2168 = vmatpush1.msra.mxu0 %v2151
    %2169 = vmatprep.subr.mxu0 0.0
    %2170 = vmatpush1.msra.mxu0 %v2150
    %2171 = vmatprep.subr.mxu0 0.0
    %2172 = vmatpush1.msra.mxu0 %v2149
    %2173 = vmatprep.subr.mxu0 0.0
    %2174 = vmatpush1.msra.mxu0 %v2148
    %2175 = vmatprep.subr.mxu0 0.0
    %2176 = vmatpush1.msra.mxu0 %v2147
    %2177 = vmatprep.subr.mxu0 0.0
    %2178 = vmatpush1.msra.mxu0 %v2146
    %2179 = vmatprep.subr.mxu0 0.0
    %2180 = vmatpush1.msra.mxu0 %v2145
    %2181 = vmatprep.subr.mxu0 0.0
    %2182 = vmatpush1.msra.mxu0 %v2144
    %2183 = vmatprep.subr.mxu0 0.0
    %2184 = vmatpush1.msra.mxu0 %v2143
    %2185 = vmatprep.subr.mxu0 0.0
    %2186 = vmatpush1.msra.mxu0 %v2142
    %2187 = vmatprep.subr.mxu0 0.0
    %2188 = vmatpush1.msra.mxu0 %v2141
    %2189 = vmatprep.subr.mxu0 0.0
    %2190 = vmatpush2.msra.mxu0 0.0
    %2191 = vmatprep.subr.mxu0 0.0
    %2192 = vmatpush2.msra.mxu0 0.0
    %2193 = vmatprep.subr.mxu0 0.0
    %2194 = vmatpush2.msra.mxu0 0.0
    %2195 = vmatprep.subr.mxu0 0.0
    %2196 = vmatpush2.msra.mxu0 0.0
    %2197 = vmatprep.subr.mxu0 0.0
    %2198 = vmatpush2.msra.mxu0 0.0
    %2199 = vmatprep.subr.mxu0 0.0
    %2200 = vmatpush2.msra.mxu0 0.0
    %2201 = vmatprep.subr.mxu0 0.0
    %2202 = vmatpush2.msra.mxu0 0.0
    %2203 = vmatprep.subr.mxu0 0.0
    %2204 = vmatpush2.msra.mxu0 0.0
    %2205 = vmatprep.subr.mxu0 0.0
    %2206 = vmatpush2.msra.mxu0 0.0
    %2207 = vmatprep.subr.mxu0 0.0
    %2208 = vmatpush2.msra.mxu0 0.0
    %2209 = vmatprep.subr.mxu0 0.0
    %2210 = vmatpush2.msra.mxu0 0.0
    %2211 = vmatprep.subr.mxu0 0.0
    %2212 = vmatpush2.msra.mxu0 0.0
    %2213 = vmatprep.subr.mxu0 0.0
    %2214 = vmatpush2.msra.mxu0 0.0
    %2215 = vmatprep.subr.mxu0 0.0
    %2216 = vmatpush2.msra.mxu0 0.0
    %2217 = vmatprep.subr.mxu0 0.0
    %2218 = vmatpush2.msra.mxu0 0.0
    %2219 = vmatprep.subr.mxu0 0.0
    %2220 = vmatpush2.msra.mxu0 0.0
    %2221 = vmatprep.mubr.f32.mxu0 0.0
    %2222 = vmatmul.mubr.f32.gmra.mxu0 %v2139
    %v2223 = vpop.f32.mrf.mxu0
    %v2224 = vadd.f32 0.0, %v2223
    %v2225 = vpop.f32.mrf.mxu0
    %2226 = vdwg.mxu0
    %2227 = vmatprep.subr.mxu0 0.0
    %2228 = vmatpush1.msra.mxu0 %v2138
    %2229 = vmatprep.subr.mxu0 0.0
    %2230 = vmatpush1.msra.mxu0 %v2137
    %2231 = vmatprep.subr.mxu0 0.0
    %2232 = vmatpush1.msra.mxu0 %v2136
    %2233 = vmatprep.subr.mxu0 0.0
    %2234 = vmatpush1.msra.mxu0 %v2135
    %2235 = vmatprep.subr.mxu0 0.0
    %2236 = vmatpush1.msra.mxu0 %v2134
    %2237 = vmatprep.subr.mxu0 0.0
    %2238 = vmatpush1.msra.mxu0 %v2133
    %2239 = vmatprep.subr.mxu0 0.0
    %2240 = vmatpush1.msra.mxu0 %v2132
    %2241 = vmatprep.subr.mxu0 0.0
    %2242 = vmatpush1.msra.mxu0 %v2131
    %2243 = vmatprep.subr.mxu0 0.0
    %2244 = vmatpush1.msra.mxu0 %v2130
    %2245 = vmatprep.subr.mxu0 0.0
    %2246 = vmatpush1.msra.mxu0 %v2129
    %2247 = vmatprep.subr.mxu0 0.0
    %2248 = vmatpush1.msra.mxu0 %v2128
    %2249 = vmatprep.subr.mxu0 0.0
    %2250 = vmatpush1.msra.mxu0 %v2127
    %2251 = vmatprep.subr.mxu0 0.0
    %2252 = vmatpush1.msra.mxu0 %v2126
    %2253 = vmatprep.subr.mxu0 0.0
    %2254 = vmatpush1.msra.mxu0 %v2125
    %2255 = vmatprep.subr.mxu0 0.0
    %2256 = vmatpush1.msra.mxu0 %v2124
    %2257 = vmatprep.subr.mxu0 0.0
    %2258 = vmatpush1.msra.mxu0 %v2123
    %2259 = vmatprep.subr.mxu0 0.0
    %2260 = vmatpush2.msra.mxu0 0.0
    %2261 = vmatprep.subr.mxu0 0.0
    %2262 = vmatpush2.msra.mxu0 0.0
    %2263 = vmatprep.subr.mxu0 0.0
    %2264 = vmatpush2.msra.mxu0 0.0
    %2265 = vmatprep.subr.mxu0 0.0
    %2266 = vmatpush2.msra.mxu0 0.0
    %2267 = vmatprep.subr.mxu0 0.0
    %2268 = vmatpush2.msra.mxu0 0.0
    %2269 = vmatprep.subr.mxu0 0.0
    %2270 = vmatpush2.msra.mxu0 0.0
    %2271 = vmatprep.subr.mxu0 0.0
    %2272 = vmatpush2.msra.mxu0 0.0
    %2273 = vmatprep.subr.mxu0 0.0
    %2274 = vmatpush2.msra.mxu0 0.0
    %2275 = vmatprep.subr.mxu0 0.0
    %2276 = vmatpush2.msra.mxu0 0.0
    %2277 = vmatprep.subr.mxu0 0.0
    %2278 = vmatpush2.msra.mxu0 0.0
    %2279 = vmatprep.subr.mxu0 0.0
    %2280 = vmatpush2.msra.mxu0 0.0
    %2281 = vmatprep.subr.mxu0 0.0
    %2282 = vmatpush2.msra.mxu0 0.0
    %2283 = vmatprep.subr.mxu0 0.0
    %2284 = vmatpush2.msra.mxu0 0.0
    %2285 = vmatprep.subr.mxu0 0.0
    %2286 = vmatpush2.msra.mxu0 0.0
    %2287 = vmatprep.subr.mxu0 0.0
    %2288 = vmatpush2.msra.mxu0 0.0
    %2289 = vmatprep.subr.mxu0 0.0
    %2290 = vmatpush2.msra.mxu0 0.0
    %2291 = vmatprep.mubr.f32.mxu0 0.0
    %2292 = vmatmul.mubr.f32.gmra.mxu0 %v2121
    %v2293 = vpop.f32.mrf.mxu0
    %v2294 = vadd.f32 %v2224, %v2293
    %v2295 = vpop.f32.mrf.mxu0
    %2296 = vdwg.mxu0
    %v2297 = vld [vmem:[%s815] ss:$2 sm:$0x1]
    %s2298 = scalar_lea.vmem [#allocation3], 2176
    %v2299 = vld [vmem:[%s2298] sm:$0xff]
    %v2300 = vld [vmem:[%s2298 + $0x8] sm:$0xff]
    %v2301 = vld [vmem:[%s2298 + $0x10] sm:$0xff]
    %v2302 = vld [vmem:[%s2298 + $0x18] sm:$0xff]
    %v2303 = vld [vmem:[%s2298 + $0x20] sm:$0xff]
    %v2304 = vld [vmem:[%s2298 + $0x28] sm:$0xff]
    %v2305 = vld [vmem:[%s2298 + $0x30] sm:$0xff]
    %v2306 = vld [vmem:[%s2298 + $0x38] sm:$0xff]
    %v2307 = vld [vmem:[%s2298 + $0x40] sm:$0xff]
    %v2308 = vld [vmem:[%s2298 + $0x48] sm:$0xff]
    %v2309 = vld [vmem:[%s2298 + $0x50] sm:$0xff]
    %v2310 = vld [vmem:[%s2298 + $0x58] sm:$0xff]
    %v2311 = vld [vmem:[%s2298 + $0x60] sm:$0xff]
    %v2312 = vld [vmem:[%s2298 + $0x68] sm:$0xff]
    %v2313 = vld [vmem:[%s2298 + $0x70] sm:$0xff]
    %v2314 = vld [vmem:[%s2298 + $0x78] sm:$0xff]
    %2315 = vmatprep.subr.mxu0 0.0
    %2316 = vmatpush1.msra.mxu0 %v2314
    %2317 = vmatprep.subr.mxu0 0.0
    %2318 = vmatpush1.msra.mxu0 %v2313
    %2319 = vmatprep.subr.mxu0 0.0
    %2320 = vmatpush1.msra.mxu0 %v2312
    %2321 = vmatprep.subr.mxu0 0.0
    %2322 = vmatpush1.msra.mxu0 %v2311
    %2323 = vmatprep.subr.mxu0 0.0
    %2324 = vmatpush1.msra.mxu0 %v2310
    %2325 = vmatprep.subr.mxu0 0.0
    %2326 = vmatpush1.msra.mxu0 %v2309
    %2327 = vmatprep.subr.mxu0 0.0
    %2328 = vmatpush1.msra.mxu0 %v2308
    %2329 = vmatprep.subr.mxu0 0.0
    %2330 = vmatpush1.msra.mxu0 %v2307
    %2331 = vmatprep.subr.mxu0 0.0
    %2332 = vmatpush1.msra.mxu0 %v2306
    %2333 = vmatprep.subr.mxu0 0.0
    %2334 = vmatpush1.msra.mxu0 %v2305
    %2335 = vmatprep.subr.mxu0 0.0
    %2336 = vmatpush1.msra.mxu0 %v2304
    %2337 = vmatprep.subr.mxu0 0.0
    %2338 = vmatpush1.msra.mxu0 %v2303
    %2339 = vmatprep.subr.mxu0 0.0
    %2340 = vmatpush1.msra.mxu0 %v2302
    %2341 = vmatprep.subr.mxu0 0.0
    %2342 = vmatpush1.msra.mxu0 %v2301
    %2343 = vmatprep.subr.mxu0 0.0
    %2344 = vmatpush1.msra.mxu0 %v2300
    %2345 = vmatprep.subr.mxu0 0.0
    %2346 = vmatpush1.msra.mxu0 %v2299
    %2347 = vmatprep.subr.mxu0 0.0
    %2348 = vmatpush2.msra.mxu0 0.0
    %2349 = vmatprep.subr.mxu0 0.0
    %2350 = vmatpush2.msra.mxu0 0.0
    %2351 = vmatprep.subr.mxu0 0.0
    %2352 = vmatpush2.msra.mxu0 0.0
    %2353 = vmatprep.subr.mxu0 0.0
    %2354 = vmatpush2.msra.mxu0 0.0
    %2355 = vmatprep.subr.mxu0 0.0
    %2356 = vmatpush2.msra.mxu0 0.0
    %2357 = vmatprep.subr.mxu0 0.0
    %2358 = vmatpush2.msra.mxu0 0.0
    %2359 = vmatprep.subr.mxu0 0.0
    %2360 = vmatpush2.msra.mxu0 0.0
    %2361 = vmatprep.subr.mxu0 0.0
    %2362 = vmatpush2.msra.mxu0 0.0
    %2363 = vmatprep.subr.mxu0 0.0
    %2364 = vmatpush2.msra.mxu0 0.0
    %2365 = vmatprep.subr.mxu0 0.0
    %2366 = vmatpush2.msra.mxu0 0.0
    %2367 = vmatprep.subr.mxu0 0.0
    %2368 = vmatpush2.msra.mxu0 0.0
    %2369 = vmatprep.subr.mxu0 0.0
    %2370 = vmatpush2.msra.mxu0 0.0
    %2371 = vmatprep.subr.mxu0 0.0
    %2372 = vmatpush2.msra.mxu0 0.0
    %2373 = vmatprep.subr.mxu0 0.0
    %2374 = vmatpush2.msra.mxu0 0.0
    %2375 = vmatprep.subr.mxu0 0.0
    %2376 = vmatpush2.msra.mxu0 0.0
    %2377 = vmatprep.subr.mxu0 0.0
    %2378 = vmatpush2.msra.mxu0 0.0
    %2379 = vmatprep.mubr.f32.mxu0 0.0
    %2380 = vmatmul.mubr.f32.gmra.mxu0 %v2297
    %v2381 = vpop.f32.mrf.mxu0
    %v2382 = vadd.f32 0.0, %v2381
    %v2383 = vpop.f32.mrf.mxu0
    %2384 = vdwg.mxu0
    %v2385 = vadd.f32 %v2294, %v2382
    %s2386 = scalar_lea.vmem [#allocation5], 20
    %v2387 = vld [vmem:[%s2386] sm:$0x1]
    %v2388 = vadd.f32 %v2385, %v2387
    %v2389 = vadd.f32 %v2388, 0.0
    %2391 = vrot.lane.b32.xlu0 %v2389, 127
    %v2392 = vpop.permute.xlu0 %2391
    %2394 = vrot.lane.b32.xlu0 %v2389, 1
    %v2395 = vpop.permute.xlu0 %2394
    %v2397 = vsel %vm452, %v2392, %v2395
    %v2398 = vadd.f32 %v2389, %v2397
    %v2399 = vmul.f32 %v2398, 0.5
    %v2400 = vsub.f32 %v2388, %v2399
    %v2401 = vmul.f32 %v2400, %v2400
    %v2402 = vadd.f32 %v2401, 0.0
    %2404 = vrot.lane.b32.xlu0 %v2402, 127
    %v2405 = vpop.permute.xlu0 %2404
    %2407 = vrot.lane.b32.xlu0 %v2402, 1
    %v2408 = vpop.permute.xlu0 %2407
    %v2410 = vsel %vm452, %v2405, %v2408
    %v2411 = vadd.f32 %v2402, %v2410
    %v2412 = vmul.f32 %v2411, 0.5
    %v2413 = vadd.f32 %v2412, 1e-05
    %v2414 = vrsqrt.pop %v2413
    %v2415 = vmul.f32 %v2400, %v2414
    %v2416 = vld [vmem:[%s2386 + $0x1] sm:$0x1]
    %v2417 = vmul.f32 %v2415, %v2416
    %v2418 = vld [vmem:[%s2386 + $0x2] sm:$0x1]
    %v2419 = vadd.f32 %v2417, %v2418
    %v2420 = vmul.f32 %v2419, 0.5
    %v2421 = vmul.f32 %v2419, 0.70710677
    %vm2422 = vcmp.ge.f32.partialorder %v2421, 0.0
    %v2423 = vsel %vm2422, 1.0, -1.0
    %v2424 = vand.u32 2147483647, %v2421
    %v2425 = vmul.f32 %v2424, 0.3275911
    %v2426 = vadd.f32 %v2425, 1.0
    %v2427 = vrcp.pop %v2426
    %v2428 = vmul.f32 %v2427, 1.0614054
    %v2429 = vadd.f32 %v2428, -1.4531521
    %v2430 = vmul.f32 %v2429, %v2427
    %v2431 = vadd.f32 %v2430, 1.4214138
    %v2432 = vmul.f32 %v2431, %v2427
    %v2433 = vadd.f32 %v2432, -0.28449672
    %v2434 = vmul.f32 %v2433, %v2427
    %v2435 = vadd.f32 %v2434, 0.2548296
    %v2436 = vmul.f32 %v2435, %v2427
    %v2437 = vsub.f32 0.0, %v2424
    %v2438 = vmul.f32 %v2437, %v2424
    %v2439 = vmul.f32 %v2438, 1.442695
    %v2440 = vpow.pop %v2439
    %v2441 = vmul.f32 %v2436, %v2440
    %v2442 = vsub.f32 1.0, %v2441
    %v2443 = vmul.f32 %v2423, %v2442
    %v2444 = vadd.f32 %v2443, 1.0
    %v2445 = vmul.f32 %v2420, %v2444
    %2446 = vst [vmem:[%s3] sm:$0x1] %v2445
    // Predicated region
    $region22: #{conv_encoder_bendr_forward.1} parent=1 // pred_check
      _
    $region23: #{conv_encoder_bendr_forward.1} parent=1 // pred_check_branch
      %2448 = sbr.rel (0) target = $region25
    $region24: #{conv_encoder_bendr_forward.1} parent=1 // pred_region
      _
    $region25: #{conv_encoder_bendr_forward.1} parent=1 // pred_fallthru
      _
    // Predicated region
    $region26: #{conv_encoder_bendr_forward.1} parent=1 // pred_check
      _
    $region27: #{conv_encoder_bendr_forward.1} parent=1 // pred_check_branch
      %2450 = sbr.rel (0) target = $region29
    $region28: #{conv_encoder_bendr_forward.1} parent=1 // pred_region
      _
    $region29: #{conv_encoder_bendr_forward.1} parent=1 // pred_fallthru
      _
    %2451 = vsyncpa [#allocation4], 1
    %2452 = vsyncpa [#allocation6], 1

</llo_original>
